<compile_context>
chip_gen: v7x
topology: tpu7x:2x2x1
jax: 0.10.0
libtpu: 0.0.40
codegen_flags: <defaults>
</compile_context>

<pallas_src>
import functools
import math

import jax
import jax.numpy as jnp
from jax import lax
from jax.experimental import pallas as pl
from jax.experimental.pallas import tpu as pltpu

CFG = dict(
    vocab_size=128,
    context_length=16,
    emb_dim=32,
    n_heads=4,
    n_layers=2,
    drop_rate_emb=0.0,
    drop_rate_attn=0.0,
    drop_rate_shortcut=0.0,
    qkv_bias=False,
)

EPS = 1e-5                      # LayerNorm eps (book impl), biased variance
GELU_C = math.sqrt(2.0 / math.pi)


def _layernorm(x, scale, shift):
    mean = jnp.mean(x, axis=-1, keepdims=True)
    var = jnp.mean((x - mean) ** 2, axis=-1, keepdims=True)   # unbiased=False
    return (x - mean) * lax.rsqrt(var + EPS) * scale + shift


def _gelu(x):
    # GELU (tanh approximation), as in the book's GELU module
    return 0.5 * x * (1.0 + jnp.tanh(GELU_C * (x + 0.044715 * x * x * x)))


def gpt_kernel(in_idx_ref, tok_emb_ref, pos_emb_ref, wqkv_ref, wo_ref, w1_ref,
               w2_ref, vec_ref, b1_ref, wout_ref, o_ref, *,
               n_layers, n_heads, seq_len):
    """Whole GPT forward for one batch element (grid axis 0 = batch).

    in_idx  : (B, T) int32   token ids, scalar-prefetched to SMEM
    tok_emb : (V, D)  f32    token embedding table (VMEM resident)
    pos_emb : (C, D)  f32    positional embedding table (VMEM resident)
    wqkv    : (L, 3, H, D, hd) bf16  per-head Q|K|V weights (Q pre-scaled by 1/sqrt(hd))
    wo      : (L, H, hd, D)    bf16  per-head rows of the attention out-proj
    w1/w2   : (L, D, 4D) / (L, 4D, D) bf16  feed-forward
    vec     : (L+1, 8, D) f32  rows = [n1s, n1b, bo, n2s, n2b, b2, pad, pad];
                               slot L holds [final_scale, final_shift, ...]
    b1      : (L, 1, 4D) f32   feed-forward hidden bias
    wout    : (D, V) bf16      lm head (no bias)
    o_ref   : (1, T, V) f32    logits block for this batch element (lane-dense)
    """
    b = pl.program_id(0)
    T = seq_len
    D = tok_emb_ref.shape[1]

    # ---- fused token + positional embedding (ids read from SMEM) ----
    rows = []
    for t in range(T):
        tid = in_idx_ref[b, t]
        rows.append(tok_emb_ref[pl.ds(tid, 1), :] + pos_emb_ref[pl.ds(t, 1), :])
    x = jnp.concatenate(rows, axis=0)                        # (T, D) f32
    # drop_emb p=0.0 -> identity

    # ---- causal additive mask, built in-kernel (no HBM mask input) ----
    rid = lax.broadcasted_iota(jnp.int32, (T, T), 0)
    cid = lax.broadcasted_iota(jnp.int32, (T, T), 1)
    mask = jnp.where(cid <= rid, 0.0, -1e30)                 # (T, T) f32

    # TODO(synk): for large n_layers, move this unrolled loop onto an
    # "arbitrary" grid axis with per-layer BlockSpec index_maps so stacked
    # weights are pipelined HBM->VMEM instead of fully VMEM-resident.
    for l in range(n_layers):
        vec = vec_ref[l]                                     # (8, D) f32
        n1s, n1b, bo = vec[0:1], vec[1:2], vec[2:3]
        n2s, n2b, b2 = vec[3:4], vec[4:5], vec[5:6]

        # ---- multi-head attention sub-layer ----
        xn = _layernorm(x, n1s, n1b).astype(jnp.bfloat16)    # (T, D) bf16 matmul LHS
        # Per-head projections (same LHS, per-head (D, hd) weight slabs) stacked
        # along a leading untiled head axis: no activation lane slices, no k.T.
        qh = jnp.stack([jnp.dot(xn, wqkv_ref[l, 0, h], preferred_element_type=jnp.float32)
                        for h in range(n_heads)]).astype(jnp.bfloat16)   # (H, T, hd)
        kh = jnp.stack([jnp.dot(xn, wqkv_ref[l, 1, h], preferred_element_type=jnp.float32)
                        for h in range(n_heads)]).astype(jnp.bfloat16)
        vh = jnp.stack([jnp.dot(xn, wqkv_ref[l, 2, h], preferred_element_type=jnp.float32)
                        for h in range(n_heads)]).astype(jnp.bfloat16)

        s = jnp.einsum('hqd,hkd->hqk', qh, kh,
                       preferred_element_type=jnp.float32) + mask[None]  # (H, T, T)
        p = jnp.exp(s - jnp.max(s, axis=-1, keepdims=True))              # f32 softmax
        p = p * pl.reciprocal(jnp.sum(p, axis=-1, keepdims=True), approx=True)
        ctx = jnp.einsum('hqk,hkd->hqd', p.astype(jnp.bfloat16), vh,
                         preferred_element_type=jnp.float32)             # (H, T, hd)
        # Per-head output projection summed over heads (== concat(heads) @ Wo).
        proj = jnp.einsum('hqd,hdo->hqo', ctx.astype(jnp.bfloat16), wo_ref[l],
                          preferred_element_type=jnp.float32)            # (H, T, D)
        x = x + jnp.sum(proj, axis=0) + bo

        # ---- feed-forward sub-layer ----
        xn2 = _layernorm(x, n2s, n2b).astype(jnp.bfloat16)
        h1 = jnp.dot(xn2, w1_ref[l], preferred_element_type=jnp.float32) + b1_ref[l]
        x = x + jnp.dot(_gelu(h1).astype(jnp.bfloat16), w2_ref[l],
                        preferred_element_type=jnp.float32) + b2

    # ---- final LayerNorm + lm head (lane-dense V = 128 logits) ----
    fvec = vec_ref[n_layers]
    xn = _layernorm(x, fvec[0:1], fvec[1:2]).astype(jnp.bfloat16)
    o_ref[0] = jnp.dot(xn, wout_ref[...], preferred_element_type=jnp.float32)


def gpt_forward(params, in_idx, cfg):
    B, T = in_idx.shape
    D, V, C = cfg['emb_dim'], cfg['vocab_size'], cfg['context_length']
    L, nH = cfg['n_layers'], cfg['n_heads']
    hd, H = D // nH, 4 * D

    kernel = functools.partial(gpt_kernel, n_layers=L, n_heads=nH, seq_len=T)

    # Advisory cost estimate (scheduling hint only).
    flops = B * (L * (3 * 2 * T * D * D            # q/k/v projections
                      + 2 * nH * 2 * T * T * hd    # scores + attn @ V
                      + 2 * T * D * D              # out-proj
                      + 2 * 2 * T * D * H)         # feed-forward
                 + 2 * T * D * V)                  # lm head
    transcendentals = B * L * (nH * T * T + T * H) + B * T * D
    bytes_accessed = sum(int(v.size * v.dtype.itemsize) for v in params.values()) \
        + int(in_idx.size * 4) + int(B * T * V * 4)

    grid_spec = pltpu.PrefetchScalarGridSpec(
        num_scalar_prefetch=1,                      # in_idx -> SMEM
        grid=(B,),
        in_specs=[
            pl.BlockSpec((V, D), lambda b, idx: (0, 0)),                 # tok_emb
            pl.BlockSpec((C, D), lambda b, idx: (0, 0)),                 # pos_emb
            pl.BlockSpec((L, 3, nH, D, hd), lambda b, idx: (0, 0, 0, 0, 0)),  # wqkv
            pl.BlockSpec((L, nH, hd, D), lambda b, idx: (0, 0, 0, 0)),   # wo
            pl.BlockSpec((L, D, H), lambda b, idx: (0, 0, 0)),           # w1
            pl.BlockSpec((L, H, D), lambda b, idx: (0, 0, 0)),           # w2
            pl.BlockSpec((L + 1, 8, D), lambda b, idx: (0, 0, 0)),       # packed vectors
            pl.BlockSpec((L, 1, H), lambda b, idx: (0, 0, 0)),           # b1
            pl.BlockSpec((D, V), lambda b, idx: (0, 0)),                 # wout
        ],
        out_specs=pl.BlockSpec((1, T, V), lambda b, idx: (b, 0, 0)),
    )

    logits = pl.pallas_call(
        kernel,
        out_shape=jax.ShapeDtypeStruct((B, T, V), jnp.float32),
        grid_spec=grid_spec,
        compiler_params=pltpu.CompilerParams(
            dimension_semantics=("parallel",),       # shards batch across TCs (v7x)
            vmem_limit_bytes=32 * 1024 * 1024,
        ),
        cost_estimate=pl.CostEstimate(flops=flops,
                                      transcendentals=transcendentals,
                                      bytes_accessed=bytes_accessed),
    )(in_idx, params['tok_emb'], params['pos_emb'], params['wqkv'], params['wo'],
      params['w1'], params['w2'], params['vec'], params['b1'], params['wout'])
    return logits


def init_params(cfg, key):
    D, V, C, L = cfg['emb_dim'], cfg['vocab_size'], cfg['context_length'], cfg['n_layers']
    nH = cfg['n_heads']
    hd, H = D // nH, 4 * D
    keys = jax.random.split(key, 3 + L)

    def nrm(k, shape):
        return jax.random.normal(k, shape, jnp.float32) * 0.02

    def per_head_cols(w):                      # (D_in, D_out) -> (H, D_in, hd)
        return jnp.transpose(w.reshape(D, nH, hd), (1, 0, 2))

    wqkv, wo, w1, w2, vec, b1 = [], [], [], [], [], []
    for l in range(L):
        ks = jax.random.split(keys[3 + l], 6)
        wq = nrm(ks[0], (D, D)) * (1.0 / math.sqrt(hd))   # attention scale folded into Q
        wk = nrm(ks[1], (D, D))
        wv = nrm(ks[2], (D, D))
        wqkv.append(jnp.stack([per_head_cols(wq), per_head_cols(wk), per_head_cols(wv)]))
        wo.append(nrm(ks[3], (D, D)).reshape(nH, hd, D))   # rows grouped per head
        w1.append(nrm(ks[4], (D, H)))
        w2.append(nrm(ks[5], (H, D)))
        vec.append(jnp.stack([
            jnp.ones((D,), jnp.float32),    # norm1 scale
            jnp.zeros((D,), jnp.float32),   # norm1 shift
            jnp.zeros((D,), jnp.float32),   # attn out-proj bias
            jnp.ones((D,), jnp.float32),    # norm2 scale
            jnp.zeros((D,), jnp.float32),   # norm2 shift
            jnp.zeros((D,), jnp.float32),   # ff out bias
            jnp.zeros((D,), jnp.float32),   # pad (sublane alignment)
            jnp.zeros((D,), jnp.float32),   # pad
        ]))
        b1.append(jnp.zeros((1, H), jnp.float32))
    # Final LayerNorm packed as the extra slot: row0 = scale(1), row1 = shift(0).
    vec.append(jnp.concatenate([jnp.ones((1, D), jnp.float32),
                                jnp.zeros((7, D), jnp.float32)], axis=0))

    return dict(
        tok_emb=nrm(keys[0], (V, D)),
        pos_emb=nrm(keys[1], (C, D)),
        wqkv=jnp.stack(wqkv).astype(jnp.bfloat16),   # (L, 3, H, D, hd)
        wo=jnp.stack(wo).astype(jnp.bfloat16),       # (L, H, hd, D)
        w1=jnp.stack(w1).astype(jnp.bfloat16),       # (L, D, 4D)
        w2=jnp.stack(w2).astype(jnp.bfloat16),       # (L, 4D, D)
        vec=jnp.stack(vec),                          # (L+1, 8, D) f32
        b1=jnp.stack(b1),                            # (L, 1, 4D) f32
        wout=nrm(keys[2], (D, V)).astype(jnp.bfloat16),   # lm head, pre-transposed
    )


if __name__ == "__main__":
    key = jax.random.PRNGKey(0)
    pkey, ikey = jax.random.split(key)
    params = init_params(CFG, pkey)

    batch, seq_len = 2, 8
    in_idx = jax.random.randint(ikey, (batch, seq_len), 0, CFG['vocab_size'],
                                dtype=jnp.int32)

    fwd = jax.jit(functools.partial(gpt_forward, cfg=CFG))
    logits = fwd(params, in_idx)
    jax.block_until_ready(logits)
    assert logits.shape == (batch, seq_len, CFG['vocab_size'])
    assert bool(jnp.all(jnp.isfinite(logits)))
    print("KERNEL_OK")
</pallas_src>

<mosaic_0001>
module attributes {stable_mosaic.version = 11 : i64} {
  func.func @gpt_kernel(%arg0: i32, %arg1: memref<2x8xi32, #tpu.memory_space<smem>>, %arg2: memref<128x32xf32, #tpu.memory_space<vmem>>, %arg3: memref<16x32xf32, #tpu.memory_space<vmem>>, %arg4: memref<2x3x4x32x8xbf16, #tpu.memory_space<vmem>>, %arg5: memref<2x4x8x32xbf16, #tpu.memory_space<vmem>>, %arg6: memref<2x32x128xbf16, #tpu.memory_space<vmem>>, %arg7: memref<2x128x32xbf16, #tpu.memory_space<vmem>>, %arg8: memref<3x8x32xf32, #tpu.memory_space<vmem>>, %arg9: memref<2x1x128xf32, #tpu.memory_space<vmem>>, %arg10: memref<32x128xbf16, #tpu.memory_space<vmem>>, %arg11: memref<1x8x128xf32, #tpu.memory_space<vmem>>) attributes {dimension_semantics = [#tpu.dimension_semantics<parallel>], iteration_bounds = array<i64: 2>, scalar_prefetch = 1 : i64, scratch_operands = 0 : i64, tpu.core_type = #tpu.core_type<tc>, window_params = [{pipeline_mode = #tpu.pipeline_mode<synchronous>, transform_indices = @transform_0, window_bounds = array<i64: 128, 32>}, {pipeline_mode = #tpu.pipeline_mode<synchronous>, transform_indices = @transform_1, window_bounds = array<i64: 16, 32>}, {pipeline_mode = #tpu.pipeline_mode<synchronous>, transform_indices = @transform_2, window_bounds = array<i64: 2, 3, 4, 32, 8>}, {pipeline_mode = #tpu.pipeline_mode<synchronous>, transform_indices = @transform_3, window_bounds = array<i64: 2, 4, 8, 32>}, {pipeline_mode = #tpu.pipeline_mode<synchronous>, transform_indices = @transform_4, window_bounds = array<i64: 2, 32, 128>}, {pipeline_mode = #tpu.pipeline_mode<synchronous>, transform_indices = @transform_5, window_bounds = array<i64: 2, 128, 32>}, {pipeline_mode = #tpu.pipeline_mode<synchronous>, transform_indices = @transform_6, window_bounds = array<i64: 3, 8, 32>}, {pipeline_mode = #tpu.pipeline_mode<synchronous>, transform_indices = @transform_7, window_bounds = array<i64: 2, 1, 128>}, {pipeline_mode = #tpu.pipeline_mode<synchronous>, transform_indices = @transform_8, window_bounds = array<i64: 32, 128>}, {transform_indices = @transform_9, window_bounds = array<i64: 1, 8, 128>}]} {
    %0 = arith.index_cast %arg0 : i32 to index
    %c0 = arith.constant 0 : index
    %1 = memref.load %arg1[%0, %c0] : memref<2x8xi32, #tpu.memory_space<smem>>
    %2 = arith.index_cast %1 : i32 to index
    %c0_0 = arith.constant 0 : index
    %3 = vector.load %arg2[%2, %c0_0] : memref<128x32xf32, #tpu.memory_space<vmem>>, vector<1x32xf32>
    %c0_1 = arith.constant 0 : index
    %c0_2 = arith.constant 0 : index
    %4 = vector.load %arg3[%c0_1, %c0_2] : memref<16x32xf32, #tpu.memory_space<vmem>>, vector<1x32xf32>
    %5 = arith.addf %3, %4 : vector<1x32xf32>
    %6 = arith.index_cast %arg0 : i32 to index
    %c1 = arith.constant 1 : index
    %7 = memref.load %arg1[%6, %c1] : memref<2x8xi32, #tpu.memory_space<smem>>
    %8 = arith.index_cast %7 : i32 to index
    %c0_3 = arith.constant 0 : index
    %9 = vector.load %arg2[%8, %c0_3] : memref<128x32xf32, #tpu.memory_space<vmem>>, vector<1x32xf32>
    %c1_4 = arith.constant 1 : index
    %c0_5 = arith.constant 0 : index
    %10 = vector.load %arg3[%c1_4, %c0_5] : memref<16x32xf32, #tpu.memory_space<vmem>>, vector<1x32xf32>
    %11 = arith.addf %9, %10 : vector<1x32xf32>
    %12 = arith.index_cast %arg0 : i32 to index
    %c2 = arith.constant 2 : index
    %13 = memref.load %arg1[%12, %c2] : memref<2x8xi32, #tpu.memory_space<smem>>
    %14 = arith.index_cast %13 : i32 to index
    %c0_6 = arith.constant 0 : index
    %15 = vector.load %arg2[%14, %c0_6] : memref<128x32xf32, #tpu.memory_space<vmem>>, vector<1x32xf32>
    %c2_7 = arith.constant 2 : index
    %c0_8 = arith.constant 0 : index
    %16 = vector.load %arg3[%c2_7, %c0_8] : memref<16x32xf32, #tpu.memory_space<vmem>>, vector<1x32xf32>
    %17 = arith.addf %15, %16 : vector<1x32xf32>
    %18 = arith.index_cast %arg0 : i32 to index
    %c3 = arith.constant 3 : index
    %19 = memref.load %arg1[%18, %c3] : memref<2x8xi32, #tpu.memory_space<smem>>
    %20 = arith.index_cast %19 : i32 to index
    %c0_9 = arith.constant 0 : index
    %21 = vector.load %arg2[%20, %c0_9] : memref<128x32xf32, #tpu.memory_space<vmem>>, vector<1x32xf32>
    %c3_10 = arith.constant 3 : index
    %c0_11 = arith.constant 0 : index
    %22 = vector.load %arg3[%c3_10, %c0_11] : memref<16x32xf32, #tpu.memory_space<vmem>>, vector<1x32xf32>
    %23 = arith.addf %21, %22 : vector<1x32xf32>
    %24 = arith.index_cast %arg0 : i32 to index
    %c4 = arith.constant 4 : index
    %25 = memref.load %arg1[%24, %c4] : memref<2x8xi32, #tpu.memory_space<smem>>
    %26 = arith.index_cast %25 : i32 to index
    %c0_12 = arith.constant 0 : index
    %27 = vector.load %arg2[%26, %c0_12] : memref<128x32xf32, #tpu.memory_space<vmem>>, vector<1x32xf32>
    %c4_13 = arith.constant 4 : index
    %c0_14 = arith.constant 0 : index
    %28 = vector.load %arg3[%c4_13, %c0_14] : memref<16x32xf32, #tpu.memory_space<vmem>>, vector<1x32xf32>
    %29 = arith.addf %27, %28 : vector<1x32xf32>
    %30 = arith.index_cast %arg0 : i32 to index
    %c5 = arith.constant 5 : index
    %31 = memref.load %arg1[%30, %c5] : memref<2x8xi32, #tpu.memory_space<smem>>
    %32 = arith.index_cast %31 : i32 to index
    %c0_15 = arith.constant 0 : index
    %33 = vector.load %arg2[%32, %c0_15] : memref<128x32xf32, #tpu.memory_space<vmem>>, vector<1x32xf32>
    %c5_16 = arith.constant 5 : index
    %c0_17 = arith.constant 0 : index
    %34 = vector.load %arg3[%c5_16, %c0_17] : memref<16x32xf32, #tpu.memory_space<vmem>>, vector<1x32xf32>
    %35 = arith.addf %33, %34 : vector<1x32xf32>
    %36 = arith.index_cast %arg0 : i32 to index
    %c6 = arith.constant 6 : index
    %37 = memref.load %arg1[%36, %c6] : memref<2x8xi32, #tpu.memory_space<smem>>
    %38 = arith.index_cast %37 : i32 to index
    %c0_18 = arith.constant 0 : index
    %39 = vector.load %arg2[%38, %c0_18] : memref<128x32xf32, #tpu.memory_space<vmem>>, vector<1x32xf32>
    %c6_19 = arith.constant 6 : index
    %c0_20 = arith.constant 0 : index
    %40 = vector.load %arg3[%c6_19, %c0_20] : memref<16x32xf32, #tpu.memory_space<vmem>>, vector<1x32xf32>
    %41 = arith.addf %39, %40 : vector<1x32xf32>
    %42 = arith.index_cast %arg0 : i32 to index
    %c7 = arith.constant 7 : index
    %43 = memref.load %arg1[%42, %c7] : memref<2x8xi32, #tpu.memory_space<smem>>
    %44 = arith.index_cast %43 : i32 to index
    %c0_21 = arith.constant 0 : index
    %45 = vector.load %arg2[%44, %c0_21] : memref<128x32xf32, #tpu.memory_space<vmem>>, vector<1x32xf32>
    %c7_22 = arith.constant 7 : index
    %c0_23 = arith.constant 0 : index
    %46 = vector.load %arg3[%c7_22, %c0_23] : memref<16x32xf32, #tpu.memory_space<vmem>>, vector<1x32xf32>
    %47 = arith.addf %45, %46 : vector<1x32xf32>
    %48 = tpu.concatenate %5, %11, %17, %23, %29, %35, %41, %47 in 0 : vector<1x32xf32>, vector<1x32xf32>, vector<1x32xf32>, vector<1x32xf32>, vector<1x32xf32>, vector<1x32xf32>, vector<1x32xf32>, vector<1x32xf32> -> vector<8x32xf32>
    %49 = tpu.iota {dimensions = array<i32: 0>} : vector<8x8xi32>
    %50 = tpu.iota {dimensions = array<i32: 1>} : vector<8x8xi32>
    %51 = arith.cmpi sle, %50, %49 : vector<8x8xi32>
    %cst = arith.constant 0.000000e+00 : f32
    %cst_24 = arith.constant -1.000000e+30 : f32
    %52 = vector.broadcast %cst : f32 to vector<8x8xf32>
    %53 = vector.broadcast %cst_24 : f32 to vector<8x8xf32>
    %54 = arith.select %51, %52, %53 : vector<8x8xi1>, vector<8x8xf32>
    %c0_25 = arith.constant 0 : index
    %c0_26 = arith.constant 0 : index
    %c0_27 = arith.constant 0 : index
    %55 = vector.load %arg8[%c0_25, %c0_26, %c0_27] : memref<3x8x32xf32, #tpu.memory_space<vmem>>, vector<1x8x32xf32>
    %56 = vector.shape_cast %55 : vector<1x8x32xf32> to vector<8x32xf32>
    %57 = vector.extract_strided_slice %56 {offsets = [0, 0], sizes = [1, 32], strides = [1, 1]} : vector<8x32xf32> to vector<1x32xf32>
    %58 = vector.extract_strided_slice %56 {offsets = [1, 0], sizes = [1, 32], strides = [1, 1]} : vector<8x32xf32> to vector<1x32xf32>
    %59 = vector.extract_strided_slice %56 {offsets = [2, 0], sizes = [1, 32], strides = [1, 1]} : vector<8x32xf32> to vector<1x32xf32>
    %60 = vector.extract_strided_slice %56 {offsets = [3, 0], sizes = [1, 32], strides = [1, 1]} : vector<8x32xf32> to vector<1x32xf32>
    %61 = vector.extract_strided_slice %56 {offsets = [4, 0], sizes = [1, 32], strides = [1, 1]} : vector<8x32xf32> to vector<1x32xf32>
    %62 = vector.extract_strided_slice %56 {offsets = [5, 0], sizes = [1, 32], strides = [1, 1]} : vector<8x32xf32> to vector<1x32xf32>
    %cst_28 = arith.constant dense<0.000000e+00> : vector<8xf32>
    %63 = vector.multi_reduction <add>, %48, %cst_28 [1] : vector<8x32xf32> to vector<8xf32>
    %64 = vector.shape_cast %63 : vector<8xf32> to vector<8x1xf32>
    %cst_29 = arith.constant 3.200000e+01 : f32
    %65 = vector.broadcast %cst_29 : f32 to vector<8x1xf32>
    %66 = arith.divf %64, %65 : vector<8x1xf32>
    %67 = vector.broadcast %66 : vector<8x1xf32> to vector<8x32xf32>
    %68 = arith.subf %48, %67 : vector<8x32xf32>
    %69 = arith.mulf %68, %68 : vector<8x32xf32>
    %cst_30 = arith.constant dense<0.000000e+00> : vector<8xf32>
    %70 = vector.multi_reduction <add>, %69, %cst_30 [1] : vector<8x32xf32> to vector<8xf32>
    %71 = vector.shape_cast %70 : vector<8xf32> to vector<8x1xf32>
    %cst_31 = arith.constant 3.200000e+01 : f32
    %72 = vector.broadcast %cst_31 : f32 to vector<8x1xf32>
    %73 = arith.divf %71, %72 : vector<8x1xf32>
    %74 = vector.broadcast %66 : vector<8x1xf32> to vector<8x32xf32>
    %75 = arith.subf %48, %74 : vector<8x32xf32>
    %cst_32 = arith.constant 9.99999974E-6 : f32
    %76 = vector.broadcast %cst_32 : f32 to vector<8x1xf32>
    %77 = arith.addf %73, %76 : vector<8x1xf32>
    %78 = math.rsqrt %77 : vector<8x1xf32>
    %79 = vector.broadcast %78 : vector<8x1xf32> to vector<8x32xf32>
    %80 = arith.mulf %75, %79 : vector<8x32xf32>
    %81 = vector.broadcast %57 : vector<1x32xf32> to vector<8x32xf32>
    %82 = arith.mulf %80, %81 : vector<8x32xf32>
    %83 = vector.broadcast %58 : vector<1x32xf32> to vector<8x32xf32>
    %84 = arith.addf %82, %83 : vector<8x32xf32>
    %85 = arith.truncf %84 : vector<8x32xf32> to vector<8x32xbf16>
    %c0_33 = arith.constant 0 : index
    %c0_34 = arith.constant 0 : index
    %c0_35 = arith.constant 0 : index
    %c0_36 = arith.constant 0 : index
    %c0_37 = arith.constant 0 : index
    %86 = vector.load %arg4[%c0_33, %c0_34, %c0_35, %c0_36, %c0_37] : memref<2x3x4x32x8xbf16, #tpu.memory_space<vmem>>, vector<1x1x1x32x8xbf16>
    %87 = vector.shape_cast %86 : vector<1x1x1x32x8xbf16> to vector<32x8xbf16>
    %cst_38 = arith.constant dense<0.000000e+00> : vector<8x8xf32>
    %88 = tpu.matmul %85, %87, %cst_38 {dimension_numbers = #tpu.dot_dimension_numbers<[1], [0], [0], [1], [0, 0, 1, 1], [], []>} : vector<8x32xbf16>, vector<32x8xbf16>, vector<8x8xf32> -> vector<8x8xf32>
    %c0_39 = arith.constant 0 : index
    %c0_40 = arith.constant 0 : index
    %c1_41 = arith.constant 1 : index
    %c0_42 = arith.constant 0 : index
    %c0_43 = arith.constant 0 : index
    %89 = vector.load %arg4[%c0_39, %c0_40, %c1_41, %c0_42, %c0_43] : memref<2x3x4x32x8xbf16, #tpu.memory_space<vmem>>, vector<1x1x1x32x8xbf16>
    %90 = vector.shape_cast %89 : vector<1x1x1x32x8xbf16> to vector<32x8xbf16>
    %cst_44 = arith.constant dense<0.000000e+00> : vector<8x8xf32>
    %91 = tpu.matmul %85, %90, %cst_44 {dimension_numbers = #tpu.dot_dimension_numbers<[1], [0], [0], [1], [0, 0, 1, 1], [], []>} : vector<8x32xbf16>, vector<32x8xbf16>, vector<8x8xf32> -> vector<8x8xf32>
    %c0_45 = arith.constant 0 : index
    %c0_46 = arith.constant 0 : index
    %c2_47 = arith.constant 2 : index
    %c0_48 = arith.constant 0 : index
    %c0_49 = arith.constant 0 : index
    %92 = vector.load %arg4[%c0_45, %c0_46, %c2_47, %c0_48, %c0_49] : memref<2x3x4x32x8xbf16, #tpu.memory_space<vmem>>, vector<1x1x1x32x8xbf16>
    %93 = vector.shape_cast %92 : vector<1x1x1x32x8xbf16> to vector<32x8xbf16>
    %cst_50 = arith.constant dense<0.000000e+00> : vector<8x8xf32>
    %94 = tpu.matmul %85, %93, %cst_50 {dimension_numbers = #tpu.dot_dimension_numbers<[1], [0], [0], [1], [0, 0, 1, 1], [], []>} : vector<8x32xbf16>, vector<32x8xbf16>, vector<8x8xf32> -> vector<8x8xf32>
    %c0_51 = arith.constant 0 : index
    %c0_52 = arith.constant 0 : index
    %c3_53 = arith.constant 3 : index
    %c0_54 = arith.constant 0 : index
    %c0_55 = arith.constant 0 : index
    %95 = vector.load %arg4[%c0_51, %c0_52, %c3_53, %c0_54, %c0_55] : memref<2x3x4x32x8xbf16, #tpu.memory_space<vmem>>, vector<1x1x1x32x8xbf16>
    %96 = vector.shape_cast %95 : vector<1x1x1x32x8xbf16> to vector<32x8xbf16>
    %cst_56 = arith.constant dense<0.000000e+00> : vector<8x8xf32>
    %97 = tpu.matmul %85, %96, %cst_56 {dimension_numbers = #tpu.dot_dimension_numbers<[1], [0], [0], [1], [0, 0, 1, 1], [], []>} : vector<8x32xbf16>, vector<32x8xbf16>, vector<8x8xf32> -> vector<8x8xf32>
    %98 = vector.shape_cast %88 : vector<8x8xf32> to vector<1x8x8xf32>
    %99 = vector.shape_cast %91 : vector<8x8xf32> to vector<1x8x8xf32>
    %100 = vector.shape_cast %94 : vector<8x8xf32> to vector<1x8x8xf32>
    %101 = vector.shape_cast %97 : vector<8x8xf32> to vector<1x8x8xf32>
    %102 = tpu.concatenate %98, %99, %100, %101 in 0 : vector<1x8x8xf32>, vector<1x8x8xf32>, vector<1x8x8xf32>, vector<1x8x8xf32> -> vector<4x8x8xf32>
    %103 = arith.truncf %102 : vector<4x8x8xf32> to vector<4x8x8xbf16>
    %c0_57 = arith.constant 0 : index
    %c1_58 = arith.constant 1 : index
    %c0_59 = arith.constant 0 : index
    %c0_60 = arith.constant 0 : index
    %c0_61 = arith.constant 0 : index
    %104 = vector.load %arg4[%c0_57, %c1_58, %c0_59, %c0_60, %c0_61] : memref<2x3x4x32x8xbf16, #tpu.memory_space<vmem>>, vector<1x1x1x32x8xbf16>
    %105 = vector.shape_cast %104 : vector<1x1x1x32x8xbf16> to vector<32x8xbf16>
    %cst_62 = arith.constant dense<0.000000e+00> : vector<8x8xf32>
    %106 = tpu.matmul %85, %105, %cst_62 {dimension_numbers = #tpu.dot_dimension_numbers<[1], [0], [0], [1], [0, 0, 1, 1], [], []>} : vector<8x32xbf16>, vector<32x8xbf16>, vector<8x8xf32> -> vector<8x8xf32>
    %c0_63 = arith.constant 0 : index
    %c1_64 = arith.constant 1 : index
    %c1_65 = arith.constant 1 : index
    %c0_66 = arith.constant 0 : index
    %c0_67 = arith.constant 0 : index
    %107 = vector.load %arg4[%c0_63, %c1_64, %c1_65, %c0_66, %c0_67] : memref<2x3x4x32x8xbf16, #tpu.memory_space<vmem>>, vector<1x1x1x32x8xbf16>
    %108 = vector.shape_cast %107 : vector<1x1x1x32x8xbf16> to vector<32x8xbf16>
    %cst_68 = arith.constant dense<0.000000e+00> : vector<8x8xf32>
    %109 = tpu.matmul %85, %108, %cst_68 {dimension_numbers = #tpu.dot_dimension_numbers<[1], [0], [0], [1], [0, 0, 1, 1], [], []>} : vector<8x32xbf16>, vector<32x8xbf16>, vector<8x8xf32> -> vector<8x8xf32>
    %c0_69 = arith.constant 0 : index
    %c1_70 = arith.constant 1 : index
    %c2_71 = arith.constant 2 : index
    %c0_72 = arith.constant 0 : index
    %c0_73 = arith.constant 0 : index
    %110 = vector.load %arg4[%c0_69, %c1_70, %c2_71, %c0_72, %c0_73] : memref<2x3x4x32x8xbf16, #tpu.memory_space<vmem>>, vector<1x1x1x32x8xbf16>
    %111 = vector.shape_cast %110 : vector<1x1x1x32x8xbf16> to vector<32x8xbf16>
    %cst_74 = arith.constant dense<0.000000e+00> : vector<8x8xf32>
    %112 = tpu.matmul %85, %111, %cst_74 {dimension_numbers = #tpu.dot_dimension_numbers<[1], [0], [0], [1], [0, 0, 1, 1], [], []>} : vector<8x32xbf16>, vector<32x8xbf16>, vector<8x8xf32> -> vector<8x8xf32>
    %c0_75 = arith.constant 0 : index
    %c1_76 = arith.constant 1 : index
    %c3_77 = arith.constant 3 : index
    %c0_78 = arith.constant 0 : index
    %c0_79 = arith.constant 0 : index
    %113 = vector.load %arg4[%c0_75, %c1_76, %c3_77, %c0_78, %c0_79] : memref<2x3x4x32x8xbf16, #tpu.memory_space<vmem>>, vector<1x1x1x32x8xbf16>
    %114 = vector.shape_cast %113 : vector<1x1x1x32x8xbf16> to vector<32x8xbf16>
    %cst_80 = arith.constant dense<0.000000e+00> : vector<8x8xf32>
    %115 = tpu.matmul %85, %114, %cst_80 {dimension_numbers = #tpu.dot_dimension_numbers<[1], [0], [0], [1], [0, 0, 1, 1], [], []>} : vector<8x32xbf16>, vector<32x8xbf16>, vector<8x8xf32> -> vector<8x8xf32>
    %116 = vector.shape_cast %106 : vector<8x8xf32> to vector<1x8x8xf32>
    %117 = vector.shape_cast %109 : vector<8x8xf32> to vector<1x8x8xf32>
    %118 = vector.shape_cast %112 : vector<8x8xf32> to vector<1x8x8xf32>
    %119 = vector.shape_cast %115 : vector<8x8xf32> to vector<1x8x8xf32>
    %120 = tpu.concatenate %116, %117, %118, %119 in 0 : vector<1x8x8xf32>, vector<1x8x8xf32>, vector<1x8x8xf32>, vector<1x8x8xf32> -> vector<4x8x8xf32>
    %121 = arith.truncf %120 : vector<4x8x8xf32> to vector<4x8x8xbf16>
    %c0_81 = arith.constant 0 : index
    %c2_82 = arith.constant 2 : index
    %c0_83 = arith.constant 0 : index
    %c0_84 = arith.constant 0 : index
    %c0_85 = arith.constant 0 : index
    %122 = vector.load %arg4[%c0_81, %c2_82, %c0_83, %c0_84, %c0_85] : memref<2x3x4x32x8xbf16, #tpu.memory_space<vmem>>, vector<1x1x1x32x8xbf16>
    %123 = vector.shape_cast %122 : vector<1x1x1x32x8xbf16> to vector<32x8xbf16>
    %cst_86 = arith.constant dense<0.000000e+00> : vector<8x8xf32>
    %124 = tpu.matmul %85, %123, %cst_86 {dimension_numbers = #tpu.dot_dimension_numbers<[1], [0], [0], [1], [0, 0, 1, 1], [], []>} : vector<8x32xbf16>, vector<32x8xbf16>, vector<8x8xf32> -> vector<8x8xf32>
    %c0_87 = arith.constant 0 : index
    %c2_88 = arith.constant 2 : index
    %c1_89 = arith.constant 1 : index
    %c0_90 = arith.constant 0 : index
    %c0_91 = arith.constant 0 : index
    %125 = vector.load %arg4[%c0_87, %c2_88, %c1_89, %c0_90, %c0_91] : memref<2x3x4x32x8xbf16, #tpu.memory_space<vmem>>, vector<1x1x1x32x8xbf16>
    %126 = vector.shape_cast %125 : vector<1x1x1x32x8xbf16> to vector<32x8xbf16>
    %cst_92 = arith.constant dense<0.000000e+00> : vector<8x8xf32>
    %127 = tpu.matmul %85, %126, %cst_92 {dimension_numbers = #tpu.dot_dimension_numbers<[1], [0], [0], [1], [0, 0, 1, 1], [], []>} : vector<8x32xbf16>, vector<32x8xbf16>, vector<8x8xf32> -> vector<8x8xf32>
    %c0_93 = arith.constant 0 : index
    %c2_94 = arith.constant 2 : index
    %c2_95 = arith.constant 2 : index
    %c0_96 = arith.constant 0 : index
    %c0_97 = arith.constant 0 : index
    %128 = vector.load %arg4[%c0_93, %c2_94, %c2_95, %c0_96, %c0_97] : memref<2x3x4x32x8xbf16, #tpu.memory_space<vmem>>, vector<1x1x1x32x8xbf16>
    %129 = vector.shape_cast %128 : vector<1x1x1x32x8xbf16> to vector<32x8xbf16>
    %cst_98 = arith.constant dense<0.000000e+00> : vector<8x8xf32>
    %130 = tpu.matmul %85, %129, %cst_98 {dimension_numbers = #tpu.dot_dimension_numbers<[1], [0], [0], [1], [0, 0, 1, 1], [], []>} : vector<8x32xbf16>, vector<32x8xbf16>, vector<8x8xf32> -> vector<8x8xf32>
    %c0_99 = arith.constant 0 : index
    %c2_100 = arith.constant 2 : index
    %c3_101 = arith.constant 3 : index
    %c0_102 = arith.constant 0 : index
    %c0_103 = arith.constant 0 : index
    %131 = vector.load %arg4[%c0_99, %c2_100, %c3_101, %c0_102, %c0_103] : memref<2x3x4x32x8xbf16, #tpu.memory_space<vmem>>, vector<1x1x1x32x8xbf16>
    %132 = vector.shape_cast %131 : vector<1x1x1x32x8xbf16> to vector<32x8xbf16>
    %cst_104 = arith.constant dense<0.000000e+00> : vector<8x8xf32>
    %133 = tpu.matmul %85, %132, %cst_104 {dimension_numbers = #tpu.dot_dimension_numbers<[1], [0], [0], [1], [0, 0, 1, 1], [], []>} : vector<8x32xbf16>, vector<32x8xbf16>, vector<8x8xf32> -> vector<8x8xf32>
    %134 = vector.shape_cast %124 : vector<8x8xf32> to vector<1x8x8xf32>
    %135 = vector.shape_cast %127 : vector<8x8xf32> to vector<1x8x8xf32>
    %136 = vector.shape_cast %130 : vector<8x8xf32> to vector<1x8x8xf32>
    %137 = vector.shape_cast %133 : vector<8x8xf32> to vector<1x8x8xf32>
    %138 = tpu.concatenate %134, %135, %136, %137 in 0 : vector<1x8x8xf32>, vector<1x8x8xf32>, vector<1x8x8xf32>, vector<1x8x8xf32> -> vector<4x8x8xf32>
    %139 = arith.truncf %138 : vector<4x8x8xf32> to vector<4x8x8xbf16>
    "tpu.trace_start"() <{level = 10 : i32, message = "hqd,hkd->hqk"}> : () -> ()
    %cst_105 = arith.constant dense<0.000000e+00> : vector<4x8x8xf32>
    %140 = tpu.matmul %103, %121, %cst_105 {dimension_numbers = #tpu.dot_dimension_numbers<[2], [2], [1], [1], [0, 0, 0, 1, 1, 1], [0], [0]>} : vector<4x8x8xbf16>, vector<4x8x8xbf16>, vector<4x8x8xf32> -> vector<4x8x8xf32>
    "tpu.trace_stop"() : () -> ()
    %141 = vector.shape_cast %54 : vector<8x8xf32> to vector<1x8x8xf32>
    %142 = vector.broadcast %141 : vector<1x8x8xf32> to vector<4x8x8xf32>
    %143 = arith.addf %140, %142 : vector<4x8x8xf32>
    %cst_106 = arith.constant dense<0xFF800000> : vector<4x8xf32>
    %144 = vector.multi_reduction <maximumf>, %143, %cst_106 [2] : vector<4x8x8xf32> to vector<4x8xf32>
    %145 = vector.shape_cast %144 : vector<4x8xf32> to vector<4x8x1xf32>
    %146 = vector.broadcast %145 : vector<4x8x1xf32> to vector<4x8x8xf32>
    %147 = arith.subf %143, %146 : vector<4x8x8xf32>
    %148 = math.exp %147 : vector<4x8x8xf32>
    %cst_107 = arith.constant dense<0.000000e+00> : vector<4x8xf32>
    %149 = vector.multi_reduction <add>, %148, %cst_107 [2] : vector<4x8x8xf32> to vector<4x8xf32>
    %150 = vector.shape_cast %149 : vector<4x8xf32> to vector<4x8x1xf32>
    %151 = tpu.reciprocal %150 {approx = true} : vector<4x8x1xf32> -> vector<4x8x1xf32>
    %152 = vector.broadcast %151 : vector<4x8x1xf32> to vector<4x8x8xf32>
    %153 = arith.mulf %148, %152 : vector<4x8x8xf32>
    %154 = arith.truncf %153 : vector<4x8x8xf32> to vector<4x8x8xbf16>
    "tpu.trace_start"() <{level = 10 : i32, message = "hqk,hkd->hqd"}> : () -> ()
    %cst_108 = arith.constant dense<0.000000e+00> : vector<4x8x8xf32>
    %155 = tpu.matmul %154, %139, %cst_108 {dimension_numbers = #tpu.dot_dimension_numbers<[2], [1], [1], [2], [0, 0, 0, 1, 1, 2], [0], [0]>} : vector<4x8x8xbf16>, vector<4x8x8xbf16>, vector<4x8x8xf32> -> vector<4x8x8xf32>
    "tpu.trace_stop"() : () -> ()
    %156 = arith.truncf %155 : vector<4x8x8xf32> to vector<4x8x8xbf16>
    %c0_109 = arith.constant 0 : index
    %c0_110 = arith.constant 0 : index
    %c0_111 = arith.constant 0 : index
    %c0_112 = arith.constant 0 : index
    %157 = vector.load %arg5[%c0_109, %c0_110, %c0_111, %c0_112] : memref<2x4x8x32xbf16, #tpu.memory_space<vmem>>, vector<1x4x8x32xbf16>
    %158 = vector.shape_cast %157 : vector<1x4x8x32xbf16> to vector<4x8x32xbf16>
    "tpu.trace_start"() <{level = 10 : i32, message = "hqd,hdo->hqo"}> : () -> ()
    %cst_113 = arith.constant dense<0.000000e+00> : vector<4x8x32xf32>
    %159 = tpu.matmul %156, %158, %cst_113 {dimension_numbers = #tpu.dot_dimension_numbers<[2], [1], [1], [2], [0, 0, 0, 1, 1, 2], [0], [0]>} : vector<4x8x8xbf16>, vector<4x8x32xbf16>, vector<4x8x32xf32> -> vector<4x8x32xf32>
    "tpu.trace_stop"() : () -> ()
    %cst_114 = arith.constant dense<0.000000e+00> : vector<8x32xf32>
    %160 = vector.multi_reduction <add>, %159, %cst_114 [0] : vector<4x8x32xf32> to vector<8x32xf32>
    %161 = arith.addf %48, %160 : vector<8x32xf32>
    %162 = vector.broadcast %59 : vector<1x32xf32> to vector<8x32xf32>
    %163 = arith.addf %161, %162 : vector<8x32xf32>
    %cst_115 = arith.constant dense<0.000000e+00> : vector<8xf32>
    %164 = vector.multi_reduction <add>, %163, %cst_115 [1] : vector<8x32xf32> to vector<8xf32>
    %165 = vector.shape_cast %164 : vector<8xf32> to vector<8x1xf32>
    %cst_116 = arith.constant 3.200000e+01 : f32
    %166 = vector.broadcast %cst_116 : f32 to vector<8x1xf32>
    %167 = arith.divf %165, %166 : vector<8x1xf32>
    %168 = vector.broadcast %167 : vector<8x1xf32> to vector<8x32xf32>
    %169 = arith.subf %163, %168 : vector<8x32xf32>
    %170 = arith.mulf %169, %169 : vector<8x32xf32>
    %cst_117 = arith.constant dense<0.000000e+00> : vector<8xf32>
    %171 = vector.multi_reduction <add>, %170, %cst_117 [1] : vector<8x32xf32> to vector<8xf32>
    %172 = vector.shape_cast %171 : vector<8xf32> to vector<8x1xf32>
    %cst_118 = arith.constant 3.200000e+01 : f32
    %173 = vector.broadcast %cst_118 : f32 to vector<8x1xf32>
    %174 = arith.divf %172, %173 : vector<8x1xf32>
    %175 = vector.broadcast %167 : vector<8x1xf32> to vector<8x32xf32>
    %176 = arith.subf %163, %175 : vector<8x32xf32>
    %cst_119 = arith.constant 9.99999974E-6 : f32
    %177 = vector.broadcast %cst_119 : f32 to vector<8x1xf32>
    %178 = arith.addf %174, %177 : vector<8x1xf32>
    %179 = math.rsqrt %178 : vector<8x1xf32>
    %180 = vector.broadcast %179 : vector<8x1xf32> to vector<8x32xf32>
    %181 = arith.mulf %176, %180 : vector<8x32xf32>
    %182 = vector.broadcast %60 : vector<1x32xf32> to vector<8x32xf32>
    %183 = arith.mulf %181, %182 : vector<8x32xf32>
    %184 = vector.broadcast %61 : vector<1x32xf32> to vector<8x32xf32>
    %185 = arith.addf %183, %184 : vector<8x32xf32>
    %186 = arith.truncf %185 : vector<8x32xf32> to vector<8x32xbf16>
    %c0_120 = arith.constant 0 : index
    %c0_121 = arith.constant 0 : index
    %c0_122 = arith.constant 0 : index
    %187 = vector.load %arg6[%c0_120, %c0_121, %c0_122] : memref<2x32x128xbf16, #tpu.memory_space<vmem>>, vector<1x32x128xbf16>
    %188 = vector.shape_cast %187 : vector<1x32x128xbf16> to vector<32x128xbf16>
    %cst_123 = arith.constant dense<0.000000e+00> : vector<8x128xf32>
    %189 = tpu.matmul %186, %188, %cst_123 {dimension_numbers = #tpu.dot_dimension_numbers<[1], [0], [0], [1], [0, 0, 1, 1], [], []>} : vector<8x32xbf16>, vector<32x128xbf16>, vector<8x128xf32> -> vector<8x128xf32>
    %c0_124 = arith.constant 0 : index
    %c0_125 = arith.constant 0 : index
    %c0_126 = arith.constant 0 : index
    %190 = vector.load %arg9[%c0_124, %c0_125, %c0_126] : memref<2x1x128xf32, #tpu.memory_space<vmem>>, vector<1x1x128xf32>
    %191 = vector.shape_cast %190 : vector<1x1x128xf32> to vector<1x128xf32>
    %192 = vector.broadcast %191 : vector<1x128xf32> to vector<8x128xf32>
    %193 = arith.addf %189, %192 : vector<8x128xf32>
    %cst_127 = arith.constant 5.000000e-01 : f32
    %194 = vector.broadcast %cst_127 : f32 to vector<8x128xf32>
    %195 = arith.mulf %194, %193 : vector<8x128xf32>
    %cst_128 = arith.constant 4.471500e-02 : f32
    %196 = vector.broadcast %cst_128 : f32 to vector<8x128xf32>
    %197 = arith.mulf %196, %193 : vector<8x128xf32>
    %198 = arith.mulf %197, %193 : vector<8x128xf32>
    %199 = arith.mulf %198, %193 : vector<8x128xf32>
    %200 = arith.addf %193, %199 : vector<8x128xf32>
    %cst_129 = arith.constant 0.797884583 : f32
    %201 = vector.broadcast %cst_129 : f32 to vector<8x128xf32>
    %202 = arith.mulf %201, %200 : vector<8x128xf32>
    %203 = math.tanh %202 : vector<8x128xf32>
    %cst_130 = arith.constant 1.000000e+00 : f32
    %204 = vector.broadcast %cst_130 : f32 to vector<8x128xf32>
    %205 = arith.addf %204, %203 : vector<8x128xf32>
    %206 = arith.mulf %195, %205 : vector<8x128xf32>
    %207 = arith.truncf %206 : vector<8x128xf32> to vector<8x128xbf16>
    %c0_131 = arith.constant 0 : index
    %c0_132 = arith.constant 0 : index
    %c0_133 = arith.constant 0 : index
    %208 = vector.load %arg7[%c0_131, %c0_132, %c0_133] : memref<2x128x32xbf16, #tpu.memory_space<vmem>>, vector<1x128x32xbf16>
    %209 = vector.shape_cast %208 : vector<1x128x32xbf16> to vector<128x32xbf16>
    %cst_134 = arith.constant dense<0.000000e+00> : vector<8x32xf32>
    %210 = tpu.matmul %207, %209, %cst_134 {dimension_numbers = #tpu.dot_dimension_numbers<[1], [0], [0], [1], [0, 0, 1, 1], [], []>} : vector<8x128xbf16>, vector<128x32xbf16>, vector<8x32xf32> -> vector<8x32xf32>
    %211 = arith.addf %163, %210 : vector<8x32xf32>
    %212 = vector.broadcast %62 : vector<1x32xf32> to vector<8x32xf32>
    %213 = arith.addf %211, %212 : vector<8x32xf32>
    %c1_135 = arith.constant 1 : index
    %c0_136 = arith.constant 0 : index
    %c0_137 = arith.constant 0 : index
    %214 = vector.load %arg8[%c1_135, %c0_136, %c0_137] : memref<3x8x32xf32, #tpu.memory_space<vmem>>, vector<1x8x32xf32>
    %215 = vector.shape_cast %214 : vector<1x8x32xf32> to vector<8x32xf32>
    %216 = vector.extract_strided_slice %215 {offsets = [0, 0], sizes = [1, 32], strides = [1, 1]} : vector<8x32xf32> to vector<1x32xf32>
    %217 = vector.extract_strided_slice %215 {offsets = [1, 0], sizes = [1, 32], strides = [1, 1]} : vector<8x32xf32> to vector<1x32xf32>
    %218 = vector.extract_strided_slice %215 {offsets = [2, 0], sizes = [1, 32], strides = [1, 1]} : vector<8x32xf32> to vector<1x32xf32>
    %219 = vector.extract_strided_slice %215 {offsets = [3, 0], sizes = [1, 32], strides = [1, 1]} : vector<8x32xf32> to vector<1x32xf32>
    %220 = vector.extract_strided_slice %215 {offsets = [4, 0], sizes = [1, 32], strides = [1, 1]} : vector<8x32xf32> to vector<1x32xf32>
    %221 = vector.extract_strided_slice %215 {offsets = [5, 0], sizes = [1, 32], strides = [1, 1]} : vector<8x32xf32> to vector<1x32xf32>
    %cst_138 = arith.constant dense<0.000000e+00> : vector<8xf32>
    %222 = vector.multi_reduction <add>, %213, %cst_138 [1] : vector<8x32xf32> to vector<8xf32>
    %223 = vector.shape_cast %222 : vector<8xf32> to vector<8x1xf32>
    %cst_139 = arith.constant 3.200000e+01 : f32
    %224 = vector.broadcast %cst_139 : f32 to vector<8x1xf32>
    %225 = arith.divf %223, %224 : vector<8x1xf32>
    %226 = vector.broadcast %225 : vector<8x1xf32> to vector<8x32xf32>
    %227 = arith.subf %213, %226 : vector<8x32xf32>
    %228 = arith.mulf %227, %227 : vector<8x32xf32>
    %cst_140 = arith.constant dense<0.000000e+00> : vector<8xf32>
    %229 = vector.multi_reduction <add>, %228, %cst_140 [1] : vector<8x32xf32> to vector<8xf32>
    %230 = vector.shape_cast %229 : vector<8xf32> to vector<8x1xf32>
    %cst_141 = arith.constant 3.200000e+01 : f32
    %231 = vector.broadcast %cst_141 : f32 to vector<8x1xf32>
    %232 = arith.divf %230, %231 : vector<8x1xf32>
    %233 = vector.broadcast %225 : vector<8x1xf32> to vector<8x32xf32>
    %234 = arith.subf %213, %233 : vector<8x32xf32>
    %cst_142 = arith.constant 9.99999974E-6 : f32
    %235 = vector.broadcast %cst_142 : f32 to vector<8x1xf32>
    %236 = arith.addf %232, %235 : vector<8x1xf32>
    %237 = math.rsqrt %236 : vector<8x1xf32>
    %238 = vector.broadcast %237 : vector<8x1xf32> to vector<8x32xf32>
    %239 = arith.mulf %234, %238 : vector<8x32xf32>
    %240 = vector.broadcast %216 : vector<1x32xf32> to vector<8x32xf32>
    %241 = arith.mulf %239, %240 : vector<8x32xf32>
    %242 = vector.broadcast %217 : vector<1x32xf32> to vector<8x32xf32>
    %243 = arith.addf %241, %242 : vector<8x32xf32>
    %244 = arith.truncf %243 : vector<8x32xf32> to vector<8x32xbf16>
    %c1_143 = arith.constant 1 : index
    %c0_144 = arith.constant 0 : index
    %c0_145 = arith.constant 0 : index
    %c0_146 = arith.constant 0 : index
    %c0_147 = arith.constant 0 : index
    %245 = vector.load %arg4[%c1_143, %c0_144, %c0_145, %c0_146, %c0_147] : memref<2x3x4x32x8xbf16, #tpu.memory_space<vmem>>, vector<1x1x1x32x8xbf16>
    %246 = vector.shape_cast %245 : vector<1x1x1x32x8xbf16> to vector<32x8xbf16>
    %cst_148 = arith.constant dense<0.000000e+00> : vector<8x8xf32>
    %247 = tpu.matmul %244, %246, %cst_148 {dimension_numbers = #tpu.dot_dimension_numbers<[1], [0], [0], [1], [0, 0, 1, 1], [], []>} : vector<8x32xbf16>, vector<32x8xbf16>, vector<8x8xf32> -> vector<8x8xf32>
    %c1_149 = arith.constant 1 : index
    %c0_150 = arith.constant 0 : index
    %c1_151 = arith.constant 1 : index
    %c0_152 = arith.constant 0 : index
    %c0_153 = arith.constant 0 : index
    %248 = vector.load %arg4[%c1_149, %c0_150, %c1_151, %c0_152, %c0_153] : memref<2x3x4x32x8xbf16, #tpu.memory_space<vmem>>, vector<1x1x1x32x8xbf16>
    %249 = vector.shape_cast %248 : vector<1x1x1x32x8xbf16> to vector<32x8xbf16>
    %cst_154 = arith.constant dense<0.000000e+00> : vector<8x8xf32>
    %250 = tpu.matmul %244, %249, %cst_154 {dimension_numbers = #tpu.dot_dimension_numbers<[1], [0], [0], [1], [0, 0, 1, 1], [], []>} : vector<8x32xbf16>, vector<32x8xbf16>, vector<8x8xf32> -> vector<8x8xf32>
    %c1_155 = arith.constant 1 : index
    %c0_156 = arith.constant 0 : index
    %c2_157 = arith.constant 2 : index
    %c0_158 = arith.constant 0 : index
    %c0_159 = arith.constant 0 : index
    %251 = vector.load %arg4[%c1_155, %c0_156, %c2_157, %c0_158, %c0_159] : memref<2x3x4x32x8xbf16, #tpu.memory_space<vmem>>, vector<1x1x1x32x8xbf16>
    %252 = vector.shape_cast %251 : vector<1x1x1x32x8xbf16> to vector<32x8xbf16>
    %cst_160 = arith.constant dense<0.000000e+00> : vector<8x8xf32>
    %253 = tpu.matmul %244, %252, %cst_160 {dimension_numbers = #tpu.dot_dimension_numbers<[1], [0], [0], [1], [0, 0, 1, 1], [], []>} : vector<8x32xbf16>, vector<32x8xbf16>, vector<8x8xf32> -> vector<8x8xf32>
    %c1_161 = arith.constant 1 : index
    %c0_162 = arith.constant 0 : index
    %c3_163 = arith.constant 3 : index
    %c0_164 = arith.constant 0 : index
    %c0_165 = arith.constant 0 : index
    %254 = vector.load %arg4[%c1_161, %c0_162, %c3_163, %c0_164, %c0_165] : memref<2x3x4x32x8xbf16, #tpu.memory_space<vmem>>, vector<1x1x1x32x8xbf16>
    %255 = vector.shape_cast %254 : vector<1x1x1x32x8xbf16> to vector<32x8xbf16>
    %cst_166 = arith.constant dense<0.000000e+00> : vector<8x8xf32>
    %256 = tpu.matmul %244, %255, %cst_166 {dimension_numbers = #tpu.dot_dimension_numbers<[1], [0], [0], [1], [0, 0, 1, 1], [], []>} : vector<8x32xbf16>, vector<32x8xbf16>, vector<8x8xf32> -> vector<8x8xf32>
    %257 = vector.shape_cast %247 : vector<8x8xf32> to vector<1x8x8xf32>
    %258 = vector.shape_cast %250 : vector<8x8xf32> to vector<1x8x8xf32>
    %259 = vector.shape_cast %253 : vector<8x8xf32> to vector<1x8x8xf32>
    %260 = vector.shape_cast %256 : vector<8x8xf32> to vector<1x8x8xf32>
    %261 = tpu.concatenate %257, %258, %259, %260 in 0 : vector<1x8x8xf32>, vector<1x8x8xf32>, vector<1x8x8xf32>, vector<1x8x8xf32> -> vector<4x8x8xf32>
    %262 = arith.truncf %261 : vector<4x8x8xf32> to vector<4x8x8xbf16>
    %c1_167 = arith.constant 1 : index
    %c1_168 = arith.constant 1 : index
    %c0_169 = arith.constant 0 : index
    %c0_170 = arith.constant 0 : index
    %c0_171 = arith.constant 0 : index
    %263 = vector.load %arg4[%c1_167, %c1_168, %c0_169, %c0_170, %c0_171] : memref<2x3x4x32x8xbf16, #tpu.memory_space<vmem>>, vector<1x1x1x32x8xbf16>
    %264 = vector.shape_cast %263 : vector<1x1x1x32x8xbf16> to vector<32x8xbf16>
    %cst_172 = arith.constant dense<0.000000e+00> : vector<8x8xf32>
    %265 = tpu.matmul %244, %264, %cst_172 {dimension_numbers = #tpu.dot_dimension_numbers<[1], [0], [0], [1], [0, 0, 1, 1], [], []>} : vector<8x32xbf16>, vector<32x8xbf16>, vector<8x8xf32> -> vector<8x8xf32>
    %c1_173 = arith.constant 1 : index
    %c1_174 = arith.constant 1 : index
    %c1_175 = arith.constant 1 : index
    %c0_176 = arith.constant 0 : index
    %c0_177 = arith.constant 0 : index
    %266 = vector.load %arg4[%c1_173, %c1_174, %c1_175, %c0_176, %c0_177] : memref<2x3x4x32x8xbf16, #tpu.memory_space<vmem>>, vector<1x1x1x32x8xbf16>
    %267 = vector.shape_cast %266 : vector<1x1x1x32x8xbf16> to vector<32x8xbf16>
    %cst_178 = arith.constant dense<0.000000e+00> : vector<8x8xf32>
    %268 = tpu.matmul %244, %267, %cst_178 {dimension_numbers = #tpu.dot_dimension_numbers<[1], [0], [0], [1], [0, 0, 1, 1], [], []>} : vector<8x32xbf16>, vector<32x8xbf16>, vector<8x8xf32> -> vector<8x8xf32>
    %c1_179 = arith.constant 1 : index
    %c1_180 = arith.constant 1 : index
    %c2_181 = arith.constant 2 : index
    %c0_182 = arith.constant 0 : index
    %c0_183 = arith.constant 0 : index
    %269 = vector.load %arg4[%c1_179, %c1_180, %c2_181, %c0_182, %c0_183] : memref<2x3x4x32x8xbf16, #tpu.memory_space<vmem>>, vector<1x1x1x32x8xbf16>
    %270 = vector.shape_cast %269 : vector<1x1x1x32x8xbf16> to vector<32x8xbf16>
    %cst_184 = arith.constant dense<0.000000e+00> : vector<8x8xf32>
    %271 = tpu.matmul %244, %270, %cst_184 {dimension_numbers = #tpu.dot_dimension_numbers<[1], [0], [0], [1], [0, 0, 1, 1], [], []>} : vector<8x32xbf16>, vector<32x8xbf16>, vector<8x8xf32> -> vector<8x8xf32>
    %c1_185 = arith.constant 1 : index
    %c1_186 = arith.constant 1 : index
    %c3_187 = arith.constant 3 : index
    %c0_188 = arith.constant 0 : index
    %c0_189 = arith.constant 0 : index
    %272 = vector.load %arg4[%c1_185, %c1_186, %c3_187, %c0_188, %c0_189] : memref<2x3x4x32x8xbf16, #tpu.memory_space<vmem>>, vector<1x1x1x32x8xbf16>
    %273 = vector.shape_cast %272 : vector<1x1x1x32x8xbf16> to vector<32x8xbf16>
    %cst_190 = arith.constant dense<0.000000e+00> : vector<8x8xf32>
    %274 = tpu.matmul %244, %273, %cst_190 {dimension_numbers = #tpu.dot_dimension_numbers<[1], [0], [0], [1], [0, 0, 1, 1], [], []>} : vector<8x32xbf16>, vector<32x8xbf16>, vector<8x8xf32> -> vector<8x8xf32>
    %275 = vector.shape_cast %265 : vector<8x8xf32> to vector<1x8x8xf32>
    %276 = vector.shape_cast %268 : vector<8x8xf32> to vector<1x8x8xf32>
    %277 = vector.shape_cast %271 : vector<8x8xf32> to vector<1x8x8xf32>
    %278 = vector.shape_cast %274 : vector<8x8xf32> to vector<1x8x8xf32>
    %279 = tpu.concatenate %275, %276, %277, %278 in 0 : vector<1x8x8xf32>, vector<1x8x8xf32>, vector<1x8x8xf32>, vector<1x8x8xf32> -> vector<4x8x8xf32>
    %280 = arith.truncf %279 : vector<4x8x8xf32> to vector<4x8x8xbf16>
    %c1_191 = arith.constant 1 : index
    %c2_192 = arith.constant 2 : index
    %c0_193 = arith.constant 0 : index
    %c0_194 = arith.constant 0 : index
    %c0_195 = arith.constant 0 : index
    %281 = vector.load %arg4[%c1_191, %c2_192, %c0_193, %c0_194, %c0_195] : memref<2x3x4x32x8xbf16, #tpu.memory_space<vmem>>, vector<1x1x1x32x8xbf16>
    %282 = vector.shape_cast %281 : vector<1x1x1x32x8xbf16> to vector<32x8xbf16>
    %cst_196 = arith.constant dense<0.000000e+00> : vector<8x8xf32>
    %283 = tpu.matmul %244, %282, %cst_196 {dimension_numbers = #tpu.dot_dimension_numbers<[1], [0], [0], [1], [0, 0, 1, 1], [], []>} : vector<8x32xbf16>, vector<32x8xbf16>, vector<8x8xf32> -> vector<8x8xf32>
    %c1_197 = arith.constant 1 : index
    %c2_198 = arith.constant 2 : index
    %c1_199 = arith.constant 1 : index
    %c0_200 = arith.constant 0 : index
    %c0_201 = arith.constant 0 : index
    %284 = vector.load %arg4[%c1_197, %c2_198, %c1_199, %c0_200, %c0_201] : memref<2x3x4x32x8xbf16, #tpu.memory_space<vmem>>, vector<1x1x1x32x8xbf16>
    %285 = vector.shape_cast %284 : vector<1x1x1x32x8xbf16> to vector<32x8xbf16>
    %cst_202 = arith.constant dense<0.000000e+00> : vector<8x8xf32>
    %286 = tpu.matmul %244, %285, %cst_202 {dimension_numbers = #tpu.dot_dimension_numbers<[1], [0], [0], [1], [0, 0, 1, 1], [], []>} : vector<8x32xbf16>, vector<32x8xbf16>, vector<8x8xf32> -> vector<8x8xf32>
    %c1_203 = arith.constant 1 : index
    %c2_204 = arith.constant 2 : index
    %c2_205 = arith.constant 2 : index
    %c0_206 = arith.constant 0 : index
    %c0_207 = arith.constant 0 : index
    %287 = vector.load %arg4[%c1_203, %c2_204, %c2_205, %c0_206, %c0_207] : memref<2x3x4x32x8xbf16, #tpu.memory_space<vmem>>, vector<1x1x1x32x8xbf16>
    %288 = vector.shape_cast %287 : vector<1x1x1x32x8xbf16> to vector<32x8xbf16>
    %cst_208 = arith.constant dense<0.000000e+00> : vector<8x8xf32>
    %289 = tpu.matmul %244, %288, %cst_208 {dimension_numbers = #tpu.dot_dimension_numbers<[1], [0], [0], [1], [0, 0, 1, 1], [], []>} : vector<8x32xbf16>, vector<32x8xbf16>, vector<8x8xf32> -> vector<8x8xf32>
    %c1_209 = arith.constant 1 : index
    %c2_210 = arith.constant 2 : index
    %c3_211 = arith.constant 3 : index
    %c0_212 = arith.constant 0 : index
    %c0_213 = arith.constant 0 : index
    %290 = vector.load %arg4[%c1_209, %c2_210, %c3_211, %c0_212, %c0_213] : memref<2x3x4x32x8xbf16, #tpu.memory_space<vmem>>, vector<1x1x1x32x8xbf16>
    %291 = vector.shape_cast %290 : vector<1x1x1x32x8xbf16> to vector<32x8xbf16>
    %cst_214 = arith.constant dense<0.000000e+00> : vector<8x8xf32>
    %292 = tpu.matmul %244, %291, %cst_214 {dimension_numbers = #tpu.dot_dimension_numbers<[1], [0], [0], [1], [0, 0, 1, 1], [], []>} : vector<8x32xbf16>, vector<32x8xbf16>, vector<8x8xf32> -> vector<8x8xf32>
    %293 = vector.shape_cast %283 : vector<8x8xf32> to vector<1x8x8xf32>
    %294 = vector.shape_cast %286 : vector<8x8xf32> to vector<1x8x8xf32>
    %295 = vector.shape_cast %289 : vector<8x8xf32> to vector<1x8x8xf32>
    %296 = vector.shape_cast %292 : vector<8x8xf32> to vector<1x8x8xf32>
    %297 = tpu.concatenate %293, %294, %295, %296 in 0 : vector<1x8x8xf32>, vector<1x8x8xf32>, vector<1x8x8xf32>, vector<1x8x8xf32> -> vector<4x8x8xf32>
    %298 = arith.truncf %297 : vector<4x8x8xf32> to vector<4x8x8xbf16>
    "tpu.trace_start"() <{level = 10 : i32, message = "hqd,hkd->hqk"}> : () -> ()
    %cst_215 = arith.constant dense<0.000000e+00> : vector<4x8x8xf32>
    %299 = tpu.matmul %262, %280, %cst_215 {dimension_numbers = #tpu.dot_dimension_numbers<[2], [2], [1], [1], [0, 0, 0, 1, 1, 1], [0], [0]>} : vector<4x8x8xbf16>, vector<4x8x8xbf16>, vector<4x8x8xf32> -> vector<4x8x8xf32>
    "tpu.trace_stop"() : () -> ()
    %300 = vector.shape_cast %54 : vector<8x8xf32> to vector<1x8x8xf32>
    %301 = vector.broadcast %300 : vector<1x8x8xf32> to vector<4x8x8xf32>
    %302 = arith.addf %299, %301 : vector<4x8x8xf32>
    %cst_216 = arith.constant dense<0xFF800000> : vector<4x8xf32>
    %303 = vector.multi_reduction <maximumf>, %302, %cst_216 [2] : vector<4x8x8xf32> to vector<4x8xf32>
    %304 = vector.shape_cast %303 : vector<4x8xf32> to vector<4x8x1xf32>
    %305 = vector.broadcast %304 : vector<4x8x1xf32> to vector<4x8x8xf32>
    %306 = arith.subf %302, %305 : vector<4x8x8xf32>
    %307 = math.exp %306 : vector<4x8x8xf32>
    %cst_217 = arith.constant dense<0.000000e+00> : vector<4x8xf32>
    %308 = vector.multi_reduction <add>, %307, %cst_217 [2] : vector<4x8x8xf32> to vector<4x8xf32>
    %309 = vector.shape_cast %308 : vector<4x8xf32> to vector<4x8x1xf32>
    %310 = tpu.reciprocal %309 {approx = true} : vector<4x8x1xf32> -> vector<4x8x1xf32>
    %311 = vector.broadcast %310 : vector<4x8x1xf32> to vector<4x8x8xf32>
    %312 = arith.mulf %307, %311 : vector<4x8x8xf32>
    %313 = arith.truncf %312 : vector<4x8x8xf32> to vector<4x8x8xbf16>
    "tpu.trace_start"() <{level = 10 : i32, message = "hqk,hkd->hqd"}> : () -> ()
    %cst_218 = arith.constant dense<0.000000e+00> : vector<4x8x8xf32>
    %314 = tpu.matmul %313, %298, %cst_218 {dimension_numbers = #tpu.dot_dimension_numbers<[2], [1], [1], [2], [0, 0, 0, 1, 1, 2], [0], [0]>} : vector<4x8x8xbf16>, vector<4x8x8xbf16>, vector<4x8x8xf32> -> vector<4x8x8xf32>
    "tpu.trace_stop"() : () -> ()
    %315 = arith.truncf %314 : vector<4x8x8xf32> to vector<4x8x8xbf16>
    %c1_219 = arith.constant 1 : index
    %c0_220 = arith.constant 0 : index
    %c0_221 = arith.constant 0 : index
    %c0_222 = arith.constant 0 : index
    %316 = vector.load %arg5[%c1_219, %c0_220, %c0_221, %c0_222] : memref<2x4x8x32xbf16, #tpu.memory_space<vmem>>, vector<1x4x8x32xbf16>
    %317 = vector.shape_cast %316 : vector<1x4x8x32xbf16> to vector<4x8x32xbf16>
    "tpu.trace_start"() <{level = 10 : i32, message = "hqd,hdo->hqo"}> : () -> ()
    %cst_223 = arith.constant dense<0.000000e+00> : vector<4x8x32xf32>
    %318 = tpu.matmul %315, %317, %cst_223 {dimension_numbers = #tpu.dot_dimension_numbers<[2], [1], [1], [2], [0, 0, 0, 1, 1, 2], [0], [0]>} : vector<4x8x8xbf16>, vector<4x8x32xbf16>, vector<4x8x32xf32> -> vector<4x8x32xf32>
    "tpu.trace_stop"() : () -> ()
    %cst_224 = arith.constant dense<0.000000e+00> : vector<8x32xf32>
    %319 = vector.multi_reduction <add>, %318, %cst_224 [0] : vector<4x8x32xf32> to vector<8x32xf32>
    %320 = arith.addf %213, %319 : vector<8x32xf32>
    %321 = vector.broadcast %218 : vector<1x32xf32> to vector<8x32xf32>
    %322 = arith.addf %320, %321 : vector<8x32xf32>
    %cst_225 = arith.constant dense<0.000000e+00> : vector<8xf32>
    %323 = vector.multi_reduction <add>, %322, %cst_225 [1] : vector<8x32xf32> to vector<8xf32>
    %324 = vector.shape_cast %323 : vector<8xf32> to vector<8x1xf32>
    %cst_226 = arith.constant 3.200000e+01 : f32
    %325 = vector.broadcast %cst_226 : f32 to vector<8x1xf32>
    %326 = arith.divf %324, %325 : vector<8x1xf32>
    %327 = vector.broadcast %326 : vector<8x1xf32> to vector<8x32xf32>
    %328 = arith.subf %322, %327 : vector<8x32xf32>
    %329 = arith.mulf %328, %328 : vector<8x32xf32>
    %cst_227 = arith.constant dense<0.000000e+00> : vector<8xf32>
    %330 = vector.multi_reduction <add>, %329, %cst_227 [1] : vector<8x32xf32> to vector<8xf32>
    %331 = vector.shape_cast %330 : vector<8xf32> to vector<8x1xf32>
    %cst_228 = arith.constant 3.200000e+01 : f32
    %332 = vector.broadcast %cst_228 : f32 to vector<8x1xf32>
    %333 = arith.divf %331, %332 : vector<8x1xf32>
    %334 = vector.broadcast %326 : vector<8x1xf32> to vector<8x32xf32>
    %335 = arith.subf %322, %334 : vector<8x32xf32>
    %cst_229 = arith.constant 9.99999974E-6 : f32
    %336 = vector.broadcast %cst_229 : f32 to vector<8x1xf32>
    %337 = arith.addf %333, %336 : vector<8x1xf32>
    %338 = math.rsqrt %337 : vector<8x1xf32>
    %339 = vector.broadcast %338 : vector<8x1xf32> to vector<8x32xf32>
    %340 = arith.mulf %335, %339 : vector<8x32xf32>
    %341 = vector.broadcast %219 : vector<1x32xf32> to vector<8x32xf32>
    %342 = arith.mulf %340, %341 : vector<8x32xf32>
    %343 = vector.broadcast %220 : vector<1x32xf32> to vector<8x32xf32>
    %344 = arith.addf %342, %343 : vector<8x32xf32>
    %345 = arith.truncf %344 : vector<8x32xf32> to vector<8x32xbf16>
    %c1_230 = arith.constant 1 : index
    %c0_231 = arith.constant 0 : index
    %c0_232 = arith.constant 0 : index
    %346 = vector.load %arg6[%c1_230, %c0_231, %c0_232] : memref<2x32x128xbf16, #tpu.memory_space<vmem>>, vector<1x32x128xbf16>
    %347 = vector.shape_cast %346 : vector<1x32x128xbf16> to vector<32x128xbf16>
    %cst_233 = arith.constant dense<0.000000e+00> : vector<8x128xf32>
    %348 = tpu.matmul %345, %347, %cst_233 {dimension_numbers = #tpu.dot_dimension_numbers<[1], [0], [0], [1], [0, 0, 1, 1], [], []>} : vector<8x32xbf16>, vector<32x128xbf16>, vector<8x128xf32> -> vector<8x128xf32>
    %c1_234 = arith.constant 1 : index
    %c0_235 = arith.constant 0 : index
    %c0_236 = arith.constant 0 : index
    %349 = vector.load %arg9[%c1_234, %c0_235, %c0_236] : memref<2x1x128xf32, #tpu.memory_space<vmem>>, vector<1x1x128xf32>
    %350 = vector.shape_cast %349 : vector<1x1x128xf32> to vector<1x128xf32>
    %351 = vector.broadcast %350 : vector<1x128xf32> to vector<8x128xf32>
    %352 = arith.addf %348, %351 : vector<8x128xf32>
    %cst_237 = arith.constant 5.000000e-01 : f32
    %353 = vector.broadcast %cst_237 : f32 to vector<8x128xf32>
    %354 = arith.mulf %353, %352 : vector<8x128xf32>
    %cst_238 = arith.constant 4.471500e-02 : f32
    %355 = vector.broadcast %cst_238 : f32 to vector<8x128xf32>
    %356 = arith.mulf %355, %352 : vector<8x128xf32>
    %357 = arith.mulf %356, %352 : vector<8x128xf32>
    %358 = arith.mulf %357, %352 : vector<8x128xf32>
    %359 = arith.addf %352, %358 : vector<8x128xf32>
    %cst_239 = arith.constant 0.797884583 : f32
    %360 = vector.broadcast %cst_239 : f32 to vector<8x128xf32>
    %361 = arith.mulf %360, %359 : vector<8x128xf32>
    %362 = math.tanh %361 : vector<8x128xf32>
    %cst_240 = arith.constant 1.000000e+00 : f32
    %363 = vector.broadcast %cst_240 : f32 to vector<8x128xf32>
    %364 = arith.addf %363, %362 : vector<8x128xf32>
    %365 = arith.mulf %354, %364 : vector<8x128xf32>
    %366 = arith.truncf %365 : vector<8x128xf32> to vector<8x128xbf16>
    %c1_241 = arith.constant 1 : index
    %c0_242 = arith.constant 0 : index
    %c0_243 = arith.constant 0 : index
    %367 = vector.load %arg7[%c1_241, %c0_242, %c0_243] : memref<2x128x32xbf16, #tpu.memory_space<vmem>>, vector<1x128x32xbf16>
    %368 = vector.shape_cast %367 : vector<1x128x32xbf16> to vector<128x32xbf16>
    %cst_244 = arith.constant dense<0.000000e+00> : vector<8x32xf32>
    %369 = tpu.matmul %366, %368, %cst_244 {dimension_numbers = #tpu.dot_dimension_numbers<[1], [0], [0], [1], [0, 0, 1, 1], [], []>} : vector<8x128xbf16>, vector<128x32xbf16>, vector<8x32xf32> -> vector<8x32xf32>
    %370 = arith.addf %322, %369 : vector<8x32xf32>
    %371 = vector.broadcast %221 : vector<1x32xf32> to vector<8x32xf32>
    %372 = arith.addf %370, %371 : vector<8x32xf32>
    %c2_245 = arith.constant 2 : index
    %c0_246 = arith.constant 0 : index
    %c0_247 = arith.constant 0 : index
    %373 = vector.load %arg8[%c2_245, %c0_246, %c0_247] : memref<3x8x32xf32, #tpu.memory_space<vmem>>, vector<1x8x32xf32>
    %374 = vector.shape_cast %373 : vector<1x8x32xf32> to vector<8x32xf32>
    %375 = vector.extract_strided_slice %374 {offsets = [0, 0], sizes = [1, 32], strides = [1, 1]} : vector<8x32xf32> to vector<1x32xf32>
    %376 = vector.extract_strided_slice %374 {offsets = [1, 0], sizes = [1, 32], strides = [1, 1]} : vector<8x32xf32> to vector<1x32xf32>
    %cst_248 = arith.constant dense<0.000000e+00> : vector<8xf32>
    %377 = vector.multi_reduction <add>, %372, %cst_248 [1] : vector<8x32xf32> to vector<8xf32>
    %378 = vector.shape_cast %377 : vector<8xf32> to vector<8x1xf32>
    %cst_249 = arith.constant 3.200000e+01 : f32
    %379 = vector.broadcast %cst_249 : f32 to vector<8x1xf32>
    %380 = arith.divf %378, %379 : vector<8x1xf32>
    %381 = vector.broadcast %380 : vector<8x1xf32> to vector<8x32xf32>
    %382 = arith.subf %372, %381 : vector<8x32xf32>
    %383 = arith.mulf %382, %382 : vector<8x32xf32>
    %cst_250 = arith.constant dense<0.000000e+00> : vector<8xf32>
    %384 = vector.multi_reduction <add>, %383, %cst_250 [1] : vector<8x32xf32> to vector<8xf32>
    %385 = vector.shape_cast %384 : vector<8xf32> to vector<8x1xf32>
    %cst_251 = arith.constant 3.200000e+01 : f32
    %386 = vector.broadcast %cst_251 : f32 to vector<8x1xf32>
    %387 = arith.divf %385, %386 : vector<8x1xf32>
    %388 = vector.broadcast %380 : vector<8x1xf32> to vector<8x32xf32>
    %389 = arith.subf %372, %388 : vector<8x32xf32>
    %cst_252 = arith.constant 9.99999974E-6 : f32
    %390 = vector.broadcast %cst_252 : f32 to vector<8x1xf32>
    %391 = arith.addf %387, %390 : vector<8x1xf32>
    %392 = math.rsqrt %391 : vector<8x1xf32>
    %393 = vector.broadcast %392 : vector<8x1xf32> to vector<8x32xf32>
    %394 = arith.mulf %389, %393 : vector<8x32xf32>
    %395 = vector.broadcast %375 : vector<1x32xf32> to vector<8x32xf32>
    %396 = arith.mulf %394, %395 : vector<8x32xf32>
    %397 = vector.broadcast %376 : vector<1x32xf32> to vector<8x32xf32>
    %398 = arith.addf %396, %397 : vector<8x32xf32>
    %399 = arith.truncf %398 : vector<8x32xf32> to vector<8x32xbf16>
    %c0_253 = arith.constant 0 : index
    %c0_254 = arith.constant 0 : index
    %400 = vector.load %arg10[%c0_253, %c0_254] : memref<32x128xbf16, #tpu.memory_space<vmem>>, vector<32x128xbf16>
    %cst_255 = arith.constant dense<0.000000e+00> : vector<8x128xf32>
    %401 = tpu.matmul %399, %400, %cst_255 {dimension_numbers = #tpu.dot_dimension_numbers<[1], [0], [0], [1], [0, 0, 1, 1], [], []>} : vector<8x32xbf16>, vector<32x128xbf16>, vector<8x128xf32> -> vector<8x128xf32>
    %c0_256 = arith.constant 0 : index
    %c0_257 = arith.constant 0 : index
    %c0_258 = arith.constant 0 : index
    %402 = vector.load %arg11[%c0_256, %c0_257, %c0_258] : memref<1x8x128xf32, #tpu.memory_space<vmem>>, vector<1x8x128xf32>
    %403 = vector.shape_cast %402 : vector<1x8x128xf32> to vector<8x128xf32>
    %404 = vector.shape_cast %401 : vector<8x128xf32> to vector<1x8x128xf32>
    tpu.vector_store %arg11[%c0_256, %c0_257, %c0_258], %404 {strides = array<i32>} : memref<1x8x128xf32, #tpu.memory_space<vmem>>, vector<1x8x128xf32>,
    return
  }
  func.func @transform_0(%arg0: i32, %arg1: memref<2x8xi32, #tpu.memory_space<smem>>) -> (i32, i32) {
    %c0_i32 = arith.constant 0 : i32
    %c0_i32_0 = arith.constant 0 : i32
    %c0_i32_1 = arith.constant 0 : i32
    return %c0_i32, %c0_i32_0 : i32, i32
  }
  func.func @transform_1(%arg0: i32, %arg1: memref<2x8xi32, #tpu.memory_space<smem>>) -> (i32, i32) {
    %c0_i32 = arith.constant 0 : i32
    %c0_i32_0 = arith.constant 0 : i32
    %c0_i32_1 = arith.constant 0 : i32
    return %c0_i32, %c0_i32_0 : i32, i32
  }
  func.func @transform_2(%arg0: i32, %arg1: memref<2x8xi32, #tpu.memory_space<smem>>) -> (i32, i32, i32, i32, i32) {
    %c0_i32 = arith.constant 0 : i32
    %c0_i32_0 = arith.constant 0 : i32
    %c0_i32_1 = arith.constant 0 : i32
    %c0_i32_2 = arith.constant 0 : i32
    %c0_i32_3 = arith.constant 0 : i32
    %c0_i32_4 = arith.constant 0 : i32
    return %c0_i32, %c0_i32_0, %c0_i32_1, %c0_i32_2, %c0_i32_3 : i32, i32, i32, i32, i32
  }
  func.func @transform_3(%arg0: i32, %arg1: memref<2x8xi32, #tpu.memory_space<smem>>) -> (i32, i32, i32, i32) {
    %c0_i32 = arith.constant 0 : i32
    %c0_i32_0 = arith.constant 0 : i32
    %c0_i32_1 = arith.constant 0 : i32
    %c0_i32_2 = arith.constant 0 : i32
    %c0_i32_3 = arith.constant 0 : i32
    return %c0_i32, %c0_i32_0, %c0_i32_1, %c0_i32_2 : i32, i32, i32, i32
  }
  func.func @transform_4(%arg0: i32, %arg1: memref<2x8xi32, #tpu.memory_space<smem>>) -> (i32, i32, i32) {
    %c0_i32 = arith.constant 0 : i32
    %c0_i32_0 = arith.constant 0 : i32
    %c0_i32_1 = arith.constant 0 : i32
    %c0_i32_2 = arith.constant 0 : i32
    return %c0_i32, %c0_i32_0, %c0_i32_1 : i32, i32, i32
  }
  func.func @transform_5(%arg0: i32, %arg1: memref<2x8xi32, #tpu.memory_space<smem>>) -> (i32, i32, i32) {
    %c0_i32 = arith.constant 0 : i32
    %c0_i32_0 = arith.constant 0 : i32
    %c0_i32_1 = arith.constant 0 : i32
    %c0_i32_2 = arith.constant 0 : i32
    return %c0_i32, %c0_i32_0, %c0_i32_1 : i32, i32, i32
  }
  func.func @transform_6(%arg0: i32, %arg1: memref<2x8xi32, #tpu.memory_space<smem>>) -> (i32, i32, i32) {
    %c0_i32 = arith.constant 0 : i32
    %c0_i32_0 = arith.constant 0 : i32
    %c0_i32_1 = arith.constant 0 : i32
    %c0_i32_2 = arith.constant 0 : i32
    return %c0_i32, %c0_i32_0, %c0_i32_1 : i32, i32, i32
  }
  func.func @transform_7(%arg0: i32, %arg1: memref<2x8xi32, #tpu.memory_space<smem>>) -> (i32, i32, i32) {
    %c0_i32 = arith.constant 0 : i32
    %c0_i32_0 = arith.constant 0 : i32
    %c0_i32_1 = arith.constant 0 : i32
    %c0_i32_2 = arith.constant 0 : i32
    return %c0_i32, %c0_i32_0, %c0_i32_1 : i32, i32, i32
  }
  func.func @transform_8(%arg0: i32, %arg1: memref<2x8xi32, #tpu.memory_space<smem>>) -> (i32, i32) {
    %c0_i32 = arith.constant 0 : i32
    %c0_i32_0 = arith.constant 0 : i32
    %c0_i32_1 = arith.constant 0 : i32
    return %c0_i32, %c0_i32_0 : i32, i32
  }
  func.func @transform_9(%arg0: i32, %arg1: memref<2x8xi32, #tpu.memory_space<smem>>) -> (i32, i32, i32) {
    %c0_i32 = arith.constant 0 : i32
    %c0_i32_0 = arith.constant 0 : i32
    %c0_i32_1 = arith.constant 0 : i32
    return %arg0, %c0_i32, %c0_i32_0 : i32, i32, i32
  }
}

</mosaic_0001>

<llo_original>
// kernel: gpt_forward.1
$region0: #{gpt_forward.1}
  #allocation0 [shape = 'u32[]', space=smem, size = 0x4, offset = 0x4, fixed_abs, tag = 'smem constant byte address 0x4 - core index']
  #allocation1 [shape = 'u32[144,128]{1,0:T(1,128)}', space=vmem, size = 0x12000, scoped, tag = 'internal scratch']
  #allocation2 [shape = 's32[1]{0}', space=sflag, size = 0x4, scoped, tag = 'scoped memory for gpt_forward.1']
  #allocation3 [shape = 'u8[1024]{0}', space=smem, size = 0x400, scoped, tag = 'prefetched SMEM operand 0']
  %s0 = inlined_call_operand.vmem [shape: s32[2,8], index: 0, kind: input, shape index: {}]
  %s1 = inlined_call_operand.vmem [shape: f32[128,32], index: 1, kind: input, shape index: {}]
  %s2 = inlined_call_operand.vmem [shape: f32[16,32], index: 2, kind: input, shape index: {}]
  %s3 = inlined_call_operand.vmem [shape: bf16[2,3,4,32,8], index: 3, kind: input, shape index: {}]
  %s4 = inlined_call_operand.vmem [shape: bf16[2,4,8,32], index: 4, kind: input, shape index: {}]
  %s5 = inlined_call_operand.vmem [shape: bf16[2,32,128], index: 5, kind: input, shape index: {}]
  %s6 = inlined_call_operand.vmem [shape: bf16[2,128,32], index: 6, kind: input, shape index: {}]
  %s7 = inlined_call_operand.vmem [shape: f32[3,8,32], index: 7, kind: input, shape index: {}]
  %s8 = inlined_call_operand.vmem [shape: f32[2,1,128], index: 8, kind: input, shape index: {}]
  %s9 = inlined_call_operand.vmem [shape: bf16[32,128], index: 9, kind: input, shape index: {}]
  %s10 = inlined_call_operand.hbm [shape: f32[2,8,128], index: 10, kind: output, shape index: {}]
  %s11 = sld [smem:[#allocation0]]
  $region69: #{gpt_forward.1} parent=0
    _
  %s13 = ssub.s32 1, %s11
  %s14 = scalar_select 0, %s13, %s11
  %s15 = sshll.u32 %s0, 4
  %s16 = int_to_ptr.vmem [resolvable:$true] %s15
  %18 = dma.vmem_to_smem %s16, 32, [#allocation3], [#allocation2]
  %19 = dma.done [#allocation2], 32
  %20 = sfence
  $region1: #{gpt_forward.1} parent=0
    #allocation4 [shape = 'u8[8192]{0}', space=vmem, size = 0x2000, scoped, tag = 'output window, operand 0']
    #allocation5 [shape = 's32[2]{0}', space=sflag, size = 0x8, scoped, tag = 'scoped memory for gpt_forward.1']
    %21 = vsyncpa [#allocation5], 0
    %s22 = scalar_lea.sflag [#allocation5], 1
    %23 = vsyncpa %s22, 0
    loop: start=0, step=1, limit=4
    $region2: #{gpt_forward.1} parent=1 // loop_pre_header
      _
    $region3: #{gpt_forward.1} parent=1 // loop_header
      %s25 = sphi 0, %s29
      %p26 = scmp.ge.s32.totalorder %s25, 4
      %s33 = sphi 0, %s33
      %s35 = sphi 0, %s33
      %s36 = sphi 0, %s35
      %s50 = sphi 0, %s36
      %s54 = sphi 0, %s54
      %s56 = sphi 0, %s54
      %s57 = sphi 0, %s56
      %s71 = sphi 0, %s57
      %s75 = sphi 0, %s75
      %s77 = sphi 0, %s75
      %s78 = sphi 0, %s77
      %s92 = sphi 0, %s78
      %s96 = sphi 0, %s96
      %s98 = sphi 0, %s96
      %s99 = sphi 0, %s98
      %s113 = sphi 0, %s99
      %s117 = sphi 0, %s117
      %s119 = sphi 0, %s117
      %s120 = sphi 0, %s119
      %s134 = sphi 0, %s120
      %s138 = sphi 0, %s138
      %s140 = sphi 0, %s138
      %s141 = sphi 0, %s140
      %s155 = sphi 0, %s141
      %s159 = sphi 0, %s159
      %s161 = sphi 0, %s159
      %s162 = sphi 0, %s161
      %s176 = sphi 0, %s162
      %s180 = sphi 0, %s180
      %s182 = sphi 0, %s180
      %s183 = sphi 0, %s182
      %s197 = sphi 0, %s183
      %s201 = sphi 0, %s201
      %s203 = sphi 0, %s201
      %s204 = sphi 0, %s203
      %s218 = sphi 0, %s204
      %s224 = sphi 0, %s226
      %s227 = sphi 0, %s224
      %s228 = sphi 0, %s227
      %s244 = sphi 0, %s228
    $region4: #{gpt_forward.1} parent=1 // loop_header_branch
      %28 = sbr.rel (%p26) target = $region8
    $region5: #{gpt_forward.1} parent=1 // loop_body
      %s30 = ssub.s32 %s25, 1
      %s31 = ssub.s32 %s25, 2
      %s32 = sadd.s32 %s25, 1
      %s34 = sadd.s32 %s33, 1
      %p37 = scmp.eq.s32.totalorder %s25, 1
      %p38 = scmp.ne.s32.totalorder %s33, %s35
      %p39 = scmp.eq.s32.totalorder %s25, 0
      %p40 = por %p38, %p39
      %p41 = scmp.ne.s32.totalorder %s33, %s35
      %p42 = scmp.eq.s32.totalorder %s30, 1
      %p43 = por %p41, %p42
      %p44 = scmp.ne.s32.totalorder %s35, %s36
      %p45 = scmp.eq.s32.totalorder %s30, 0
      %p46 = por %p44, %p45
      %p47 = scmp.ne.s32.totalorder %s35, %s36
      %p48 = scmp.eq.s32.totalorder %s31, 1
      %p49 = por %p47, %p48
      %p51 = scmp.ne.s32.totalorder %s36, %s50
      %p52 = scmp.eq.s32.totalorder %s31, 0
      %p53 = por %p51, %p52
      %s55 = sadd.s32 %s54, 1
      %p58 = scmp.eq.s32.totalorder %s25, 1
      %p59 = scmp.ne.s32.totalorder %s54, %s56
      %p60 = scmp.eq.s32.totalorder %s25, 0
      %p61 = por %p59, %p60
      %p62 = scmp.ne.s32.totalorder %s54, %s56
      %p63 = scmp.eq.s32.totalorder %s30, 1
      %p64 = por %p62, %p63
      %p65 = scmp.ne.s32.totalorder %s56, %s57
      %p66 = scmp.eq.s32.totalorder %s30, 0
      %p67 = por %p65, %p66
      %p68 = scmp.ne.s32.totalorder %s56, %s57
      %p69 = scmp.eq.s32.totalorder %s31, 1
      %p70 = por %p68, %p69
      %p72 = scmp.ne.s32.totalorder %s57, %s71
      %p73 = scmp.eq.s32.totalorder %s31, 0
      %p74 = por %p72, %p73
      %s76 = sadd.s32 %s75, 1
      %p79 = scmp.eq.s32.totalorder %s25, 1
      %p80 = scmp.ne.s32.totalorder %s75, %s77
      %p81 = scmp.eq.s32.totalorder %s25, 0
      %p82 = por %p80, %p81
      %p83 = scmp.ne.s32.totalorder %s75, %s77
      %p84 = scmp.eq.s32.totalorder %s30, 1
      %p85 = por %p83, %p84
      %p86 = scmp.ne.s32.totalorder %s77, %s78
      %p87 = scmp.eq.s32.totalorder %s30, 0
      %p88 = por %p86, %p87
      %p89 = scmp.ne.s32.totalorder %s77, %s78
      %p90 = scmp.eq.s32.totalorder %s31, 1
      %p91 = por %p89, %p90
      %p93 = scmp.ne.s32.totalorder %s78, %s92
      %p94 = scmp.eq.s32.totalorder %s31, 0
      %p95 = por %p93, %p94
      %s97 = sadd.s32 %s96, 1
      %p100 = scmp.eq.s32.totalorder %s25, 1
      %p101 = scmp.ne.s32.totalorder %s96, %s98
      %p102 = scmp.eq.s32.totalorder %s25, 0
      %p103 = por %p101, %p102
      %p104 = scmp.ne.s32.totalorder %s96, %s98
      %p105 = scmp.eq.s32.totalorder %s30, 1
      %p106 = por %p104, %p105
      %p107 = scmp.ne.s32.totalorder %s98, %s99
      %p108 = scmp.eq.s32.totalorder %s30, 0
      %p109 = por %p107, %p108
      %p110 = scmp.ne.s32.totalorder %s98, %s99
      %p111 = scmp.eq.s32.totalorder %s31, 1
      %p112 = por %p110, %p111
      %p114 = scmp.ne.s32.totalorder %s99, %s113
      %p115 = scmp.eq.s32.totalorder %s31, 0
      %p116 = por %p114, %p115
      %s118 = sadd.s32 %s117, 1
      %p121 = scmp.eq.s32.totalorder %s25, 1
      %p122 = scmp.ne.s32.totalorder %s117, %s119
      %p123 = scmp.eq.s32.totalorder %s25, 0
      %p124 = por %p122, %p123
      %p125 = scmp.ne.s32.totalorder %s117, %s119
      %p126 = scmp.eq.s32.totalorder %s30, 1
      %p127 = por %p125, %p126
      %p128 = scmp.ne.s32.totalorder %s119, %s120
      %p129 = scmp.eq.s32.totalorder %s30, 0
      %p130 = por %p128, %p129
      %p131 = scmp.ne.s32.totalorder %s119, %s120
      %p132 = scmp.eq.s32.totalorder %s31, 1
      %p133 = por %p131, %p132
      %p135 = scmp.ne.s32.totalorder %s120, %s134
      %p136 = scmp.eq.s32.totalorder %s31, 0
      %p137 = por %p135, %p136
      %s139 = sadd.s32 %s138, 1
      %p142 = scmp.eq.s32.totalorder %s25, 1
      %p143 = scmp.ne.s32.totalorder %s138, %s140
      %p144 = scmp.eq.s32.totalorder %s25, 0
      %p145 = por %p143, %p144
      %p146 = scmp.ne.s32.totalorder %s138, %s140
      %p147 = scmp.eq.s32.totalorder %s30, 1
      %p148 = por %p146, %p147
      %p149 = scmp.ne.s32.totalorder %s140, %s141
      %p150 = scmp.eq.s32.totalorder %s30, 0
      %p151 = por %p149, %p150
      %p152 = scmp.ne.s32.totalorder %s140, %s141
      %p153 = scmp.eq.s32.totalorder %s31, 1
      %p154 = por %p152, %p153
      %p156 = scmp.ne.s32.totalorder %s141, %s155
      %p157 = scmp.eq.s32.totalorder %s31, 0
      %p158 = por %p156, %p157
      %s160 = sadd.s32 %s159, 1
      %p163 = scmp.eq.s32.totalorder %s25, 1
      %p164 = scmp.ne.s32.totalorder %s159, %s161
      %p165 = scmp.eq.s32.totalorder %s25, 0
      %p166 = por %p164, %p165
      %p167 = scmp.ne.s32.totalorder %s159, %s161
      %p168 = scmp.eq.s32.totalorder %s30, 1
      %p169 = por %p167, %p168
      %p170 = scmp.ne.s32.totalorder %s161, %s162
      %p171 = scmp.eq.s32.totalorder %s30, 0
      %p172 = por %p170, %p171
      %p173 = scmp.ne.s32.totalorder %s161, %s162
      %p174 = scmp.eq.s32.totalorder %s31, 1
      %p175 = por %p173, %p174
      %p177 = scmp.ne.s32.totalorder %s162, %s176
      %p178 = scmp.eq.s32.totalorder %s31, 0
      %p179 = por %p177, %p178
      %s181 = sadd.s32 %s180, 1
      %p184 = scmp.eq.s32.totalorder %s25, 1
      %p185 = scmp.ne.s32.totalorder %s180, %s182
      %p186 = scmp.eq.s32.totalorder %s25, 0
      %p187 = por %p185, %p186
      %p188 = scmp.ne.s32.totalorder %s180, %s182
      %p189 = scmp.eq.s32.totalorder %s30, 1
      %p190 = por %p188, %p189
      %p191 = scmp.ne.s32.totalorder %s182, %s183
      %p192 = scmp.eq.s32.totalorder %s30, 0
      %p193 = por %p191, %p192
      %p194 = scmp.ne.s32.totalorder %s182, %s183
      %p195 = scmp.eq.s32.totalorder %s31, 1
      %p196 = por %p194, %p195
      %p198 = scmp.ne.s32.totalorder %s183, %s197
      %p199 = scmp.eq.s32.totalorder %s31, 0
      %p200 = por %p198, %p199
      %s202 = sadd.s32 %s201, 1
      %p205 = scmp.eq.s32.totalorder %s25, 1
      %p206 = scmp.ne.s32.totalorder %s201, %s203
      %p207 = scmp.eq.s32.totalorder %s25, 0
      %p208 = por %p206, %p207
      %p209 = scmp.ne.s32.totalorder %s201, %s203
      %p210 = scmp.eq.s32.totalorder %s30, 1
      %p211 = por %p209, %p210
      %p212 = scmp.ne.s32.totalorder %s203, %s204
      %p213 = scmp.eq.s32.totalorder %s30, 0
      %p214 = por %p212, %p213
      %p215 = scmp.ne.s32.totalorder %s203, %s204
      %p216 = scmp.eq.s32.totalorder %s31, 1
      %p217 = por %p215, %p216
      %p219 = scmp.ne.s32.totalorder %s204, %s218
      %p220 = scmp.eq.s32.totalorder %s31, 0
      %p221 = por %p219, %p220
      %s222 = ssub.s32 %s25, %s32
      %p223 = scmp.eq.s32.totalorder %s222, 0
      %s225 = sadd.s32 %s224, 1
      %s226 = scalar_select %p223, %s224, %s225
      %p229 = pneg %p223
      %p230 = scmp.eq.s32.totalorder %s25, 1
      %p231 = por %p229, %p230
      %p232 = scmp.ne.s32.totalorder %s224, %s227
      %p233 = scmp.eq.s32.totalorder %s25, 0
      %p234 = por %p232, %p233
      %p235 = scmp.ne.s32.totalorder %s224, %s227
      %p236 = scmp.eq.s32.totalorder %s30, 1
      %p237 = por %p235, %p236
      %p238 = scmp.ne.s32.totalorder %s227, %s228
      %p239 = scmp.eq.s32.totalorder %s30, 0
      %p240 = por %p238, %p239
      %p241 = scmp.ne.s32.totalorder %s227, %s228
      %p242 = scmp.eq.s32.totalorder %s31, 1
      %p243 = por %p241, %p242
      %p245 = scmp.ne.s32.totalorder %s228, %s244
      %p246 = scmp.eq.s32.totalorder %s31, 0
      %p247 = por %p245, %p246
      %p248 = scmp.le.s32.totalorder 1, %s25
      %p249 = scmp.lt.s32.totalorder %s25, 3
      %p250 = pnand %p248, %p249
      %p251 = pneg %p250
      // Predicated region
      $region9: #{gpt_forward.1} parent=5 // pred_check
        _
      $region10: #{gpt_forward.1} parent=5 // pred_check_branch
        %253 = sbr.rel (%p250) target = $region12
      $region11: #{gpt_forward.1} parent=5 // pred_region
        %s254 = ssub.s32 %s25, 1
        // Predicated region
        $region13: #{gpt_forward.1} parent=11 // pred_check
          %p255 = pneg %p46
        $region14: #{gpt_forward.1} parent=11 // pred_check_branch
          %257 = sbr.rel (%p255) target = $region16
        $region15: #{gpt_forward.1} parent=11 // pred_region
          _
        $region16: #{gpt_forward.1} parent=11 // pred_fallthru
          _
        // Predicated region
        $region17: #{gpt_forward.1} parent=11 // pred_check
          %p258 = pneg %p67
        $region18: #{gpt_forward.1} parent=11 // pred_check_branch
          %260 = sbr.rel (%p258) target = $region20
        $region19: #{gpt_forward.1} parent=11 // pred_region
          _
        $region20: #{gpt_forward.1} parent=11 // pred_fallthru
          _
        // Predicated region
        $region21: #{gpt_forward.1} parent=11 // pred_check
          %p261 = pneg %p88
        $region22: #{gpt_forward.1} parent=11 // pred_check_branch
          %263 = sbr.rel (%p261) target = $region24
        $region23: #{gpt_forward.1} parent=11 // pred_region
          _
        $region24: #{gpt_forward.1} parent=11 // pred_fallthru
          _
        // Predicated region
        $region25: #{gpt_forward.1} parent=11 // pred_check
          %p264 = pneg %p109
        $region26: #{gpt_forward.1} parent=11 // pred_check_branch
          %266 = sbr.rel (%p264) target = $region28
        $region27: #{gpt_forward.1} parent=11 // pred_region
          _
        $region28: #{gpt_forward.1} parent=11 // pred_fallthru
          _
        // Predicated region
        $region29: #{gpt_forward.1} parent=11 // pred_check
          %p267 = pneg %p130
        $region30: #{gpt_forward.1} parent=11 // pred_check_branch
          %269 = sbr.rel (%p267) target = $region32
        $region31: #{gpt_forward.1} parent=11 // pred_region
          _
        $region32: #{gpt_forward.1} parent=11 // pred_fallthru
          _
        // Predicated region
        $region33: #{gpt_forward.1} parent=11 // pred_check
          %p270 = pneg %p151
        $region34: #{gpt_forward.1} parent=11 // pred_check_branch
          %272 = sbr.rel (%p270) target = $region36
        $region35: #{gpt_forward.1} parent=11 // pred_region
          _
        $region36: #{gpt_forward.1} parent=11 // pred_fallthru
          _
        // Predicated region
        $region37: #{gpt_forward.1} parent=11 // pred_check
          %p273 = pneg %p172
        $region38: #{gpt_forward.1} parent=11 // pred_check_branch
          %275 = sbr.rel (%p273) target = $region40
        $region39: #{gpt_forward.1} parent=11 // pred_region
          _
        $region40: #{gpt_forward.1} parent=11 // pred_fallthru
          _
        // Predicated region
        $region41: #{gpt_forward.1} parent=11 // pred_check
          %p276 = pneg %p193
        $region42: #{gpt_forward.1} parent=11 // pred_check_branch
          %278 = sbr.rel (%p276) target = $region44
        $region43: #{gpt_forward.1} parent=11 // pred_region
          _
        $region44: #{gpt_forward.1} parent=11 // pred_fallthru
          _
        // Predicated region
        $region45: #{gpt_forward.1} parent=11 // pred_check
          %p279 = pneg %p214
        $region46: #{gpt_forward.1} parent=11 // pred_check_branch
          %281 = sbr.rel (%p279) target = $region48
        $region47: #{gpt_forward.1} parent=11 // pred_region
          _
        $region48: #{gpt_forward.1} parent=11 // pred_fallthru
          _
      $region12: #{gpt_forward.1} parent=5 // pred_fallthru
        _
      %p282 = scmp.lt.s32.totalorder %s25, 2
      // Predicated region
      $region49: #{gpt_forward.1} parent=5 // pred_check
        %p283 = pneg %p282
      $region50: #{gpt_forward.1} parent=5 // pred_check_branch
        %285 = sbr.rel (%p283) target = $region52
      $region51: #{gpt_forward.1} parent=5 // pred_region
        _
      $region52: #{gpt_forward.1} parent=5 // pred_fallthru
        _
      %p286 = scmp.le.s32.totalorder 1, %s25
      %p287 = scmp.lt.s32.totalorder %s25, 3
      %p288 = pnand %p286, %p287
      %p289 = pneg %p288
      // Predicated region
      $region53: #{gpt_forward.1} parent=5 // pred_check
        _
      $region54: #{gpt_forward.1} parent=5 // pred_check_branch
        %291 = sbr.rel (%p288) target = $region56
      $region55: #{gpt_forward.1} parent=5 // pred_region
        %s292 = ssub.s32 %s25, 1
        %p293 = pneg %p46
        %p294 = pneg %p43
        %p295 = pneg %p67
        %p296 = pneg %p64
        %p297 = pneg %p88
        %p298 = pneg %p85
        %p299 = pneg %p109
        %p300 = pneg %p106
        %p301 = pneg %p130
        %p302 = pneg %p127
        %p303 = pneg %p151
        %p304 = pneg %p148
        %p305 = pneg %p172
        %p306 = pneg %p169
        %p307 = pneg %p193
        %p308 = pneg %p190
        %p309 = pneg %p214
        %p310 = pneg %p211
        %p311 = pneg %p240
        %p312 = pneg %p237
        %s313 = sand.u32 %s227, 1
        %s314 = scalar_lea.sflag [#allocation5], %s313
        %s315 = sand.u32 %s227, 1
        %s316 = smul.addr %s315, 8
        %s317 = scalar_lea.vmem [#allocation4], %s316
        %s319 = smul.u32 %s30, 128
        %s320 = sld [smem:[#allocation3 + %s319]]
        %s321 = scalar_lea.vmem %s1, %s320
        %v322 = vld [vmem:[%s321] sm:$0x1]
        %v323 = vld [vmem:[%s2] sm:$0x1]
        %v324 = vadd.f32 %v322, %v323
        %s325 = sadd.s32 %s319, 1
        %s326 = sld [smem:[#allocation3 + %s325]]
        %s327 = scalar_lea.vmem %s1, %s326
        %v328 = vld [vmem:[%s327] sm:$0x1]
        %v329 = vld [vmem:[%s2 + $0x1] sm:$0x1]
        %v330 = vadd.f32 %v328, %v329
        %s331 = sadd.s32 %s319, 2
        %s332 = sld [smem:[#allocation3 + %s331]]
        %s333 = scalar_lea.vmem %s1, %s332
        %v334 = vld [vmem:[%s333] sm:$0x1]
        %v335 = vld [vmem:[%s2 + $0x2] sm:$0x1]
        %v336 = vadd.f32 %v334, %v335
        %s337 = sadd.s32 %s319, 3
        %s338 = sld [smem:[#allocation3 + %s337]]
        %s339 = scalar_lea.vmem %s1, %s338
        %v340 = vld [vmem:[%s339] sm:$0x1]
        %v341 = vld [vmem:[%s2 + $0x3] sm:$0x1]
        %v342 = vadd.f32 %v340, %v341
        %s343 = sadd.s32 %s319, 4
        %s344 = sld [smem:[#allocation3 + %s343]]
        %s345 = scalar_lea.vmem %s1, %s344
        %v346 = vld [vmem:[%s345] sm:$0x1]
        %v347 = vld [vmem:[%s2 + $0x4] sm:$0x1]
        %v348 = vadd.f32 %v346, %v347
        %s349 = sadd.s32 %s319, 5
        %s350 = sld [smem:[#allocation3 + %s349]]
        %s351 = scalar_lea.vmem %s1, %s350
        %v352 = vld [vmem:[%s351] sm:$0x1]
        %v353 = vld [vmem:[%s2 + $0x5] sm:$0x1]
        %v354 = vadd.f32 %v352, %v353
        %s355 = sadd.s32 %s319, 6
        %s356 = sld [smem:[#allocation3 + %s355]]
        %s357 = scalar_lea.vmem %s1, %s356
        %v358 = vld [vmem:[%s357] sm:$0x1]
        %v359 = vld [vmem:[%s2 + $0x6] sm:$0x1]
        %v360 = vadd.f32 %v358, %v359
        %s361 = sadd.s32 %s319, 7
        %s362 = sld [smem:[#allocation3 + %s361]]
        %s363 = scalar_lea.vmem %s1, %s362
        %v364 = vld [vmem:[%s363] sm:$0x1]
        %v365 = vld [vmem:[%s2 + $0x7] sm:$0x1]
        %v366 = vadd.f32 %v364, %v365
        %v368 = vrot.slane %v330, 7
        %v371 = vrot.slane %v336, 6
        %v374 = vrot.slane %v342, 5
        %v377 = vrot.slane %v348, 4
        %v380 = vrot.slane %v354, 3
        %v383 = vrot.slane %v360, 2
        %v386 = vrot.slane %v366, 1
        %vm388 = vcmask 1040384
        %v389 = vsel %vm388, %v324, %v368
        %vm390 = vcmask 1041408
        %v391 = vsel %vm390, %v389, %v371
        %vm392 = vcmask 1042432
        %v393 = vsel %vm392, %v391, %v374
        %vm394 = vcmask 1043456
        %v395 = vsel %vm394, %v393, %v377
        %vm396 = vcmask 1044480
        %v397 = vsel %vm396, %v395, %v380
        %vm398 = vcmask 1045504
        %v399 = vsel %vm398, %v397, %v383
        %vm400 = vcmask 1046528
        %v401 = vsel %vm400, %v399, %v386
        %v402 = vlaneseq
        %v403 = vshrl.u32 %v402, 7
        %v404 = vlaneseq
        %v405 = vand.u32 %v404, 127
        %vm406 = vcmp.le.s32.totalorder %v405, %v403
        %v407 = vsel %vm406, 0.0, -1e+30
        %v408 = vld [vmem:[%s7] sm:$0xff]
        %vm409 = vcmask 261120
        %v410 = vsel %vm409, %v401, 0.0
        %411 = vadd.xlane.f32.xlu0 %v410
        %v412 = vpop.xlane.xlu0 %411
        %v413 = vrcp.pop 32.0
        %v414 = vmul.f32 %v412, %v413
        %v415 = vsub.f32 %v401, %v414
        %v416 = vmul.f32 %v415, %v415
        %v417 = vsel %vm409, %v416, 0.0
        %418 = vadd.xlane.f32.xlu0 %v417
        %v419 = vpop.xlane.xlu0 %418
        %v420 = vmul.f32 %v419, %v413
        %v421 = vadd.f32 %v420, 1e-05
        %v422 = vrsqrt.pop %v421
        %v423 = vmul.f32 %v415, %v422
        %v424 = vlaneseq
        %v425 = vshrl.u32 %v424, 7
        %v426 = vsub.s32 0, %v425
        %v427 = vrot.slane %v408, %v426
        %v428 = vmul.f32 %v423, %v427
        %v429 = vlaneseq
        %v430 = vshrl.u32 %v429, 7
        %v431 = vsub.s32 1, %v430
        %v432 = vrot.slane %v408, %v431
        %v433 = vadd.f32 %v428, %v432
        %v434 = vpack.c.bf16 %v433, %v433
        %v435 = vld [vmem:[%s3] sm:$0xf]
        %v436 = vld [vmem:[%s3 + $0x4] sm:$0xf]
        %v437 = vld [vmem:[%s3 + $0x8] sm:$0xf]
        %v438 = vld [vmem:[%s3 + $0xc] sm:$0xf]
        %v443 = vunpack.c.l.b16 %v435
        %v444 = vunpack.c.l.b16 %v436
        %v445 = vunpack.c.l.b16 %v437
        %v446 = vunpack.c.l.b16 %v438
        %v447 = vpack.c.b16 %v444, %v443
        %v448 = vpack.c.b16 %v446, %v445
        %v452 = vsel %vm409, %v434, 0
        %454 = vmatprep.subr.bf16.mxu0 0
        %455 = vmatpush1.bf16.msra.mxu0 %v447
        %456 = vmatprep.subr.bf16.mxu0 0
        %457 = vmatpush1.bf16.msra.mxu0 %v448
        %458 = vmatprep.subr.bf16.mxu0 0
        %459 = vmatpush1.bf16.msra.mxu0 0
        %460 = vmatprep.subr.bf16.mxu0 0
        %461 = vmatpush1.bf16.msra.mxu0 0
        %462 = vmatprep.subr.bf16.mxu0 0
        %463 = vmatpush1.bf16.msra.mxu0 0
        %464 = vmatprep.subr.bf16.mxu0 0
        %465 = vmatpush1.bf16.msra.mxu0 0
        %466 = vmatprep.subr.bf16.mxu0 0
        %467 = vmatpush1.bf16.msra.mxu0 0
        %468 = vmatprep.subr.bf16.mxu0 0
        %469 = vmatpush1.bf16.msra.mxu0 0
        %470 = vmatprep.subr.bf16.mxu0 0
        %471 = vmatpush1.bf16.msra.mxu0 0
        %472 = vmatprep.subr.bf16.mxu0 0
        %473 = vmatpush1.bf16.msra.mxu0 0
        %474 = vmatprep.subr.bf16.mxu0 0
        %475 = vmatpush1.bf16.msra.mxu0 0
        %476 = vmatprep.subr.bf16.mxu0 0
        %477 = vmatpush1.bf16.msra.mxu0 0
        %478 = vmatprep.subr.bf16.mxu0 0
        %479 = vmatpush1.bf16.msra.mxu0 0
        %480 = vmatprep.subr.bf16.mxu0 0
        %481 = vmatpush1.bf16.msra.mxu0 0
        %482 = vmatprep.subr.bf16.mxu0 0
        %483 = vmatpush1.bf16.msra.mxu0 0
        %484 = vmatprep.subr.bf16.mxu0 0
        %485 = vmatpush1.bf16.msra.mxu0 0
        %486 = vmatprep.mubr.bf16.mxu0 0
        %487 = vmatmul.mubr.bf16.gmra.mrb[0].mxu0 %v452
        %v488 = vpop.f32.mrb[0].mxu0
        %v489 = vadd.f32 0.0, %v488
        %v490 = vpop.f32.mrb[0].mxu0
        %v491 = vpop.f32.mrb[0].mxu0
        %v492 = vpop.f32.mrb[0].mxu0
        %493 = vdwg.mxu0
        %s494 = scalar_lea.vmem %s3, 16
        %v495 = vld [vmem:[%s494] sm:$0xf]
        %v496 = vld [vmem:[%s494 + $0x4] sm:$0xf]
        %v497 = vld [vmem:[%s494 + $0x8] sm:$0xf]
        %v498 = vld [vmem:[%s494 + $0xc] sm:$0xf]
        %v503 = vunpack.c.l.b16 %v495
        %v504 = vunpack.c.l.b16 %v496
        %v505 = vunpack.c.l.b16 %v497
        %v506 = vunpack.c.l.b16 %v498
        %v507 = vpack.c.b16 %v504, %v503
        %v508 = vpack.c.b16 %v506, %v505
        %511 = vmatprep.subr.bf16.mxu0 0
        %512 = vmatpush1.bf16.msra.mxu0 %v507
        %513 = vmatprep.subr.bf16.mxu0 0
        %514 = vmatpush1.bf16.msra.mxu0 %v508
        %515 = vmatprep.subr.bf16.mxu0 0
        %516 = vmatpush1.bf16.msra.mxu0 0
        %517 = vmatprep.subr.bf16.mxu0 0
        %518 = vmatpush1.bf16.msra.mxu0 0
        %519 = vmatprep.subr.bf16.mxu0 0
        %520 = vmatpush1.bf16.msra.mxu0 0
        %521 = vmatprep.subr.bf16.mxu0 0
        %522 = vmatpush1.bf16.msra.mxu0 0
        %523 = vmatprep.subr.bf16.mxu0 0
        %524 = vmatpush1.bf16.msra.mxu0 0
        %525 = vmatprep.subr.bf16.mxu0 0
        %526 = vmatpush1.bf16.msra.mxu0 0
        %527 = vmatprep.subr.bf16.mxu0 0
        %528 = vmatpush1.bf16.msra.mxu0 0
        %529 = vmatprep.subr.bf16.mxu0 0
        %530 = vmatpush1.bf16.msra.mxu0 0
        %531 = vmatprep.subr.bf16.mxu0 0
        %532 = vmatpush1.bf16.msra.mxu0 0
        %533 = vmatprep.subr.bf16.mxu0 0
        %534 = vmatpush1.bf16.msra.mxu0 0
        %535 = vmatprep.subr.bf16.mxu0 0
        %536 = vmatpush1.bf16.msra.mxu0 0
        %537 = vmatprep.subr.bf16.mxu0 0
        %538 = vmatpush1.bf16.msra.mxu0 0
        %539 = vmatprep.subr.bf16.mxu0 0
        %540 = vmatpush1.bf16.msra.mxu0 0
        %541 = vmatprep.subr.bf16.mxu0 0
        %542 = vmatpush1.bf16.msra.mxu0 0
        %543 = vmatprep.mubr.bf16.mxu0 0
        %544 = vmatmul.mubr.bf16.gmra.mrb[0].mxu0 %v452
        %v545 = vpop.f32.mrb[0].mxu0
        %v546 = vadd.f32 0.0, %v545
        %v547 = vpop.f32.mrb[0].mxu0
        %v548 = vpop.f32.mrb[0].mxu0
        %v549 = vpop.f32.mrb[0].mxu0
        %550 = vdwg.mxu0
        %s551 = scalar_lea.vmem %s3, 32
        %v552 = vld [vmem:[%s551] sm:$0xf]
        %v553 = vld [vmem:[%s551 + $0x4] sm:$0xf]
        %v554 = vld [vmem:[%s551 + $0x8] sm:$0xf]
        %v555 = vld [vmem:[%s551 + $0xc] sm:$0xf]
        %v560 = vunpack.c.l.b16 %v552
        %v561 = vunpack.c.l.b16 %v553
        %v562 = vunpack.c.l.b16 %v554
        %v563 = vunpack.c.l.b16 %v555
        %v564 = vpack.c.b16 %v561, %v560
        %v565 = vpack.c.b16 %v563, %v562
        %568 = vmatprep.subr.bf16.mxu0 0
        %569 = vmatpush1.bf16.msra.mxu0 %v564
        %570 = vmatprep.subr.bf16.mxu0 0
        %571 = vmatpush1.bf16.msra.mxu0 %v565
        %572 = vmatprep.subr.bf16.mxu0 0
        %573 = vmatpush1.bf16.msra.mxu0 0
        %574 = vmatprep.subr.bf16.mxu0 0
        %575 = vmatpush1.bf16.msra.mxu0 0
        %576 = vmatprep.subr.bf16.mxu0 0
        %577 = vmatpush1.bf16.msra.mxu0 0
        %578 = vmatprep.subr.bf16.mxu0 0
        %579 = vmatpush1.bf16.msra.mxu0 0
        %580 = vmatprep.subr.bf16.mxu0 0
        %581 = vmatpush1.bf16.msra.mxu0 0
        %582 = vmatprep.subr.bf16.mxu0 0
        %583 = vmatpush1.bf16.msra.mxu0 0
        %584 = vmatprep.subr.bf16.mxu0 0
        %585 = vmatpush1.bf16.msra.mxu0 0
        %586 = vmatprep.subr.bf16.mxu0 0
        %587 = vmatpush1.bf16.msra.mxu0 0
        %588 = vmatprep.subr.bf16.mxu0 0
        %589 = vmatpush1.bf16.msra.mxu0 0
        %590 = vmatprep.subr.bf16.mxu0 0
        %591 = vmatpush1.bf16.msra.mxu0 0
        %592 = vmatprep.subr.bf16.mxu0 0
        %593 = vmatpush1.bf16.msra.mxu0 0
        %594 = vmatprep.subr.bf16.mxu0 0
        %595 = vmatpush1.bf16.msra.mxu0 0
        %596 = vmatprep.subr.bf16.mxu0 0
        %597 = vmatpush1.bf16.msra.mxu0 0
        %598 = vmatprep.subr.bf16.mxu0 0
        %599 = vmatpush1.bf16.msra.mxu0 0
        %600 = vmatprep.mubr.bf16.mxu0 0
        %601 = vmatmul.mubr.bf16.gmra.mrb[0].mxu0 %v452
        %v602 = vpop.f32.mrb[0].mxu0
        %v603 = vadd.f32 0.0, %v602
        %v604 = vpop.f32.mrb[0].mxu0
        %v605 = vpop.f32.mrb[0].mxu0
        %v606 = vpop.f32.mrb[0].mxu0
        %607 = vdwg.mxu0
        %s608 = scalar_lea.vmem %s3, 48
        %v609 = vld [vmem:[%s608] sm:$0xf]
        %v610 = vld [vmem:[%s608 + $0x4] sm:$0xf]
        %v611 = vld [vmem:[%s608 + $0x8] sm:$0xf]
        %v612 = vld [vmem:[%s608 + $0xc] sm:$0xf]
        %v617 = vunpack.c.l.b16 %v609
        %v618 = vunpack.c.l.b16 %v610
        %v619 = vunpack.c.l.b16 %v611
        %v620 = vunpack.c.l.b16 %v612
        %v621 = vpack.c.b16 %v618, %v617
        %v622 = vpack.c.b16 %v620, %v619
        %625 = vmatprep.subr.bf16.mxu0 0
        %626 = vmatpush1.bf16.msra.mxu0 %v621
        %627 = vmatprep.subr.bf16.mxu0 0
        %628 = vmatpush1.bf16.msra.mxu0 %v622
        %629 = vmatprep.subr.bf16.mxu0 0
        %630 = vmatpush1.bf16.msra.mxu0 0
        %631 = vmatprep.subr.bf16.mxu0 0
        %632 = vmatpush1.bf16.msra.mxu0 0
        %633 = vmatprep.subr.bf16.mxu0 0
        %634 = vmatpush1.bf16.msra.mxu0 0
        %635 = vmatprep.subr.bf16.mxu0 0
        %636 = vmatpush1.bf16.msra.mxu0 0
        %637 = vmatprep.subr.bf16.mxu0 0
        %638 = vmatpush1.bf16.msra.mxu0 0
        %639 = vmatprep.subr.bf16.mxu0 0
        %640 = vmatpush1.bf16.msra.mxu0 0
        %641 = vmatprep.subr.bf16.mxu0 0
        %642 = vmatpush1.bf16.msra.mxu0 0
        %643 = vmatprep.subr.bf16.mxu0 0
        %644 = vmatpush1.bf16.msra.mxu0 0
        %645 = vmatprep.subr.bf16.mxu0 0
        %646 = vmatpush1.bf16.msra.mxu0 0
        %647 = vmatprep.subr.bf16.mxu0 0
        %648 = vmatpush1.bf16.msra.mxu0 0
        %649 = vmatprep.subr.bf16.mxu0 0
        %650 = vmatpush1.bf16.msra.mxu0 0
        %651 = vmatprep.subr.bf16.mxu0 0
        %652 = vmatpush1.bf16.msra.mxu0 0
        %653 = vmatprep.subr.bf16.mxu0 0
        %654 = vmatpush1.bf16.msra.mxu0 0
        %655 = vmatprep.subr.bf16.mxu0 0
        %656 = vmatpush1.bf16.msra.mxu0 0
        %657 = vmatprep.mubr.bf16.mxu0 0
        %658 = vmatmul.mubr.bf16.gmra.mrb[0].mxu0 %v452
        %v659 = vpop.f32.mrb[0].mxu0
        %v660 = vadd.f32 0.0, %v659
        %v661 = vpop.f32.mrb[0].mxu0
        %v662 = vpop.f32.mrb[0].mxu0
        %v663 = vpop.f32.mrb[0].mxu0
        %664 = vdwg.mxu0
        %v665 = vpack.c.bf16 %v489, %v489
        %v666 = vpack.c.bf16 %v546, %v546
        %v667 = vpack.c.bf16 %v603, %v603
        %v668 = vpack.c.bf16 %v660, %v660
        %s669 = scalar_lea.vmem %s3, 64
        %v670 = vld [vmem:[%s669] sm:$0xf]
        %v671 = vld [vmem:[%s669 + $0x4] sm:$0xf]
        %v672 = vld [vmem:[%s669 + $0x8] sm:$0xf]
        %v673 = vld [vmem:[%s669 + $0xc] sm:$0xf]
        %v678 = vunpack.c.l.b16 %v670
        %v679 = vunpack.c.l.b16 %v671
        %v680 = vunpack.c.l.b16 %v672
        %v681 = vunpack.c.l.b16 %v673
        %v682 = vpack.c.b16 %v679, %v678
        %v683 = vpack.c.b16 %v681, %v680
        %686 = vmatprep.subr.bf16.mxu0 0
        %687 = vmatpush1.bf16.msra.mxu0 %v682
        %688 = vmatprep.subr.bf16.mxu0 0
        %689 = vmatpush1.bf16.msra.mxu0 %v683
        %690 = vmatprep.subr.bf16.mxu0 0
        %691 = vmatpush1.bf16.msra.mxu0 0
        %692 = vmatprep.subr.bf16.mxu0 0
        %693 = vmatpush1.bf16.msra.mxu0 0
        %694 = vmatprep.subr.bf16.mxu0 0
        %695 = vmatpush1.bf16.msra.mxu0 0
        %696 = vmatprep.subr.bf16.mxu0 0
        %697 = vmatpush1.bf16.msra.mxu0 0
        %698 = vmatprep.subr.bf16.mxu0 0
        %699 = vmatpush1.bf16.msra.mxu0 0
        %700 = vmatprep.subr.bf16.mxu0 0
        %701 = vmatpush1.bf16.msra.mxu0 0
        %702 = vmatprep.subr.bf16.mxu0 0
        %703 = vmatpush1.bf16.msra.mxu0 0
        %704 = vmatprep.subr.bf16.mxu0 0
        %705 = vmatpush1.bf16.msra.mxu0 0
        %706 = vmatprep.subr.bf16.mxu0 0
        %707 = vmatpush1.bf16.msra.mxu0 0
        %708 = vmatprep.subr.bf16.mxu0 0
        %709 = vmatpush1.bf16.msra.mxu0 0
        %710 = vmatprep.subr.bf16.mxu0 0
        %711 = vmatpush1.bf16.msra.mxu0 0
        %712 = vmatprep.subr.bf16.mxu0 0
        %713 = vmatpush1.bf16.msra.mxu0 0
        %714 = vmatprep.subr.bf16.mxu0 0
        %715 = vmatpush1.bf16.msra.mxu0 0
        %716 = vmatprep.subr.bf16.mxu0 0
        %717 = vmatpush1.bf16.msra.mxu0 0
        %718 = vmatprep.mubr.bf16.mxu0 0
        %719 = vmatmul.mubr.bf16.gmra.mrb[0].mxu0 %v452
        %v720 = vpop.f32.mrb[0].mxu0
        %v721 = vadd.f32 0.0, %v720
        %v722 = vpop.f32.mrb[0].mxu0
        %v723 = vpop.f32.mrb[0].mxu0
        %v724 = vpop.f32.mrb[0].mxu0
        %725 = vdwg.mxu0
        %s726 = scalar_lea.vmem %s3, 80
        %v727 = vld [vmem:[%s726] sm:$0xf]
        %v728 = vld [vmem:[%s726 + $0x4] sm:$0xf]
        %v729 = vld [vmem:[%s726 + $0x8] sm:$0xf]
        %v730 = vld [vmem:[%s726 + $0xc] sm:$0xf]
        %v735 = vunpack.c.l.b16 %v727
        %v736 = vunpack.c.l.b16 %v728
        %v737 = vunpack.c.l.b16 %v729
        %v738 = vunpack.c.l.b16 %v730
        %v739 = vpack.c.b16 %v736, %v735
        %v740 = vpack.c.b16 %v738, %v737
        %743 = vmatprep.subr.bf16.mxu0 0
        %744 = vmatpush1.bf16.msra.mxu0 %v739
        %745 = vmatprep.subr.bf16.mxu0 0
        %746 = vmatpush1.bf16.msra.mxu0 %v740
        %747 = vmatprep.subr.bf16.mxu0 0
        %748 = vmatpush1.bf16.msra.mxu0 0
        %749 = vmatprep.subr.bf16.mxu0 0
        %750 = vmatpush1.bf16.msra.mxu0 0
        %751 = vmatprep.subr.bf16.mxu0 0
        %752 = vmatpush1.bf16.msra.mxu0 0
        %753 = vmatprep.subr.bf16.mxu0 0
        %754 = vmatpush1.bf16.msra.mxu0 0
        %755 = vmatprep.subr.bf16.mxu0 0
        %756 = vmatpush1.bf16.msra.mxu0 0
        %757 = vmatprep.subr.bf16.mxu0 0
        %758 = vmatpush1.bf16.msra.mxu0 0
        %759 = vmatprep.subr.bf16.mxu0 0
        %760 = vmatpush1.bf16.msra.mxu0 0
        %761 = vmatprep.subr.bf16.mxu0 0
        %762 = vmatpush1.bf16.msra.mxu0 0
        %763 = vmatprep.subr.bf16.mxu0 0
        %764 = vmatpush1.bf16.msra.mxu0 0
        %765 = vmatprep.subr.bf16.mxu0 0
        %766 = vmatpush1.bf16.msra.mxu0 0
        %767 = vmatprep.subr.bf16.mxu0 0
        %768 = vmatpush1.bf16.msra.mxu0 0
        %769 = vmatprep.subr.bf16.mxu0 0
        %770 = vmatpush1.bf16.msra.mxu0 0
        %771 = vmatprep.subr.bf16.mxu0 0
        %772 = vmatpush1.bf16.msra.mxu0 0
        %773 = vmatprep.subr.bf16.mxu0 0
        %774 = vmatpush1.bf16.msra.mxu0 0
        %775 = vmatprep.mubr.bf16.mxu0 0
        %776 = vmatmul.mubr.bf16.gmra.mrb[0].mxu0 %v452
        %v777 = vpop.f32.mrb[0].mxu0
        %v778 = vadd.f32 0.0, %v777
        %v779 = vpop.f32.mrb[0].mxu0
        %v780 = vpop.f32.mrb[0].mxu0
        %v781 = vpop.f32.mrb[0].mxu0
        %782 = vdwg.mxu0
        %s783 = scalar_lea.vmem %s3, 96
        %v784 = vld [vmem:[%s783] sm:$0xf]
        %v785 = vld [vmem:[%s783 + $0x4] sm:$0xf]
        %v786 = vld [vmem:[%s783 + $0x8] sm:$0xf]
        %v787 = vld [vmem:[%s783 + $0xc] sm:$0xf]
        %v792 = vunpack.c.l.b16 %v784
        %v793 = vunpack.c.l.b16 %v785
        %v794 = vunpack.c.l.b16 %v786
        %v795 = vunpack.c.l.b16 %v787
        %v796 = vpack.c.b16 %v793, %v792
        %v797 = vpack.c.b16 %v795, %v794
        %800 = vmatprep.subr.bf16.mxu0 0
        %801 = vmatpush1.bf16.msra.mxu0 %v796
        %802 = vmatprep.subr.bf16.mxu0 0
        %803 = vmatpush1.bf16.msra.mxu0 %v797
        %804 = vmatprep.subr.bf16.mxu0 0
        %805 = vmatpush1.bf16.msra.mxu0 0
        %806 = vmatprep.subr.bf16.mxu0 0
        %807 = vmatpush1.bf16.msra.mxu0 0
        %808 = vmatprep.subr.bf16.mxu0 0
        %809 = vmatpush1.bf16.msra.mxu0 0
        %810 = vmatprep.subr.bf16.mxu0 0
        %811 = vmatpush1.bf16.msra.mxu0 0
        %812 = vmatprep.subr.bf16.mxu0 0
        %813 = vmatpush1.bf16.msra.mxu0 0
        %814 = vmatprep.subr.bf16.mxu0 0
        %815 = vmatpush1.bf16.msra.mxu0 0
        %816 = vmatprep.subr.bf16.mxu0 0
        %817 = vmatpush1.bf16.msra.mxu0 0
        %818 = vmatprep.subr.bf16.mxu0 0
        %819 = vmatpush1.bf16.msra.mxu0 0
        %820 = vmatprep.subr.bf16.mxu0 0
        %821 = vmatpush1.bf16.msra.mxu0 0
        %822 = vmatprep.subr.bf16.mxu0 0
        %823 = vmatpush1.bf16.msra.mxu0 0
        %824 = vmatprep.subr.bf16.mxu0 0
        %825 = vmatpush1.bf16.msra.mxu0 0
        %826 = vmatprep.subr.bf16.mxu0 0
        %827 = vmatpush1.bf16.msra.mxu0 0
        %828 = vmatprep.subr.bf16.mxu0 0
        %829 = vmatpush1.bf16.msra.mxu0 0
        %830 = vmatprep.subr.bf16.mxu0 0
        %831 = vmatpush1.bf16.msra.mxu0 0
        %832 = vmatprep.mubr.bf16.mxu0 0
        %833 = vmatmul.mubr.bf16.gmra.mrb[0].mxu0 %v452
        %v834 = vpop.f32.mrb[0].mxu0
        %v835 = vadd.f32 0.0, %v834
        %v836 = vpop.f32.mrb[0].mxu0
        %v837 = vpop.f32.mrb[0].mxu0
        %v838 = vpop.f32.mrb[0].mxu0
        %839 = vdwg.mxu0
        %s840 = scalar_lea.vmem %s3, 112
        %v841 = vld [vmem:[%s840] sm:$0xf]
        %v842 = vld [vmem:[%s840 + $0x4] sm:$0xf]
        %v843 = vld [vmem:[%s840 + $0x8] sm:$0xf]
        %v844 = vld [vmem:[%s840 + $0xc] sm:$0xf]
        %v849 = vunpack.c.l.b16 %v841
        %v850 = vunpack.c.l.b16 %v842
        %v851 = vunpack.c.l.b16 %v843
        %v852 = vunpack.c.l.b16 %v844
        %v853 = vpack.c.b16 %v850, %v849
        %v854 = vpack.c.b16 %v852, %v851
        %857 = vmatprep.subr.bf16.mxu0 0
        %858 = vmatpush1.bf16.msra.mxu0 %v853
        %859 = vmatprep.subr.bf16.mxu0 0
        %860 = vmatpush1.bf16.msra.mxu0 %v854
        %861 = vmatprep.subr.bf16.mxu0 0
        %862 = vmatpush1.bf16.msra.mxu0 0
        %863 = vmatprep.subr.bf16.mxu0 0
        %864 = vmatpush1.bf16.msra.mxu0 0
        %865 = vmatprep.subr.bf16.mxu0 0
        %866 = vmatpush1.bf16.msra.mxu0 0
        %867 = vmatprep.subr.bf16.mxu0 0
        %868 = vmatpush1.bf16.msra.mxu0 0
        %869 = vmatprep.subr.bf16.mxu0 0
        %870 = vmatpush1.bf16.msra.mxu0 0
        %871 = vmatprep.subr.bf16.mxu0 0
        %872 = vmatpush1.bf16.msra.mxu0 0
        %873 = vmatprep.subr.bf16.mxu0 0
        %874 = vmatpush1.bf16.msra.mxu0 0
        %875 = vmatprep.subr.bf16.mxu0 0
        %876 = vmatpush1.bf16.msra.mxu0 0
        %877 = vmatprep.subr.bf16.mxu0 0
        %878 = vmatpush1.bf16.msra.mxu0 0
        %879 = vmatprep.subr.bf16.mxu0 0
        %880 = vmatpush1.bf16.msra.mxu0 0
        %881 = vmatprep.subr.bf16.mxu0 0
        %882 = vmatpush1.bf16.msra.mxu0 0
        %883 = vmatprep.subr.bf16.mxu0 0
        %884 = vmatpush1.bf16.msra.mxu0 0
        %885 = vmatprep.subr.bf16.mxu0 0
        %886 = vmatpush1.bf16.msra.mxu0 0
        %887 = vmatprep.subr.bf16.mxu0 0
        %888 = vmatpush1.bf16.msra.mxu0 0
        %889 = vmatprep.mubr.bf16.mxu0 0
        %890 = vmatmul.mubr.bf16.gmra.mrb[0].mxu0 %v452
        %v891 = vpop.f32.mrb[0].mxu0
        %v892 = vadd.f32 0.0, %v891
        %v893 = vpop.f32.mrb[0].mxu0
        %v894 = vpop.f32.mrb[0].mxu0
        %v895 = vpop.f32.mrb[0].mxu0
        %896 = vdwg.mxu0
        %v897 = vpack.c.bf16 %v721, %v721
        %v898 = vpack.c.bf16 %v778, %v778
        %v899 = vpack.c.bf16 %v835, %v835
        %v900 = vpack.c.bf16 %v892, %v892
        %s901 = scalar_lea.vmem %s3, 128
        %v902 = vld [vmem:[%s901] sm:$0xf]
        %v903 = vld [vmem:[%s901 + $0x4] sm:$0xf]
        %v904 = vld [vmem:[%s901 + $0x8] sm:$0xf]
        %v905 = vld [vmem:[%s901 + $0xc] sm:$0xf]
        %v910 = vunpack.c.l.b16 %v902
        %v911 = vunpack.c.l.b16 %v903
        %v912 = vunpack.c.l.b16 %v904
        %v913 = vunpack.c.l.b16 %v905
        %v914 = vpack.c.b16 %v911, %v910
        %v915 = vpack.c.b16 %v913, %v912
        %918 = vmatprep.subr.bf16.mxu0 0
        %919 = vmatpush1.bf16.msra.mxu0 %v914
        %920 = vmatprep.subr.bf16.mxu0 0
        %921 = vmatpush1.bf16.msra.mxu0 %v915
        %922 = vmatprep.subr.bf16.mxu0 0
        %923 = vmatpush1.bf16.msra.mxu0 0
        %924 = vmatprep.subr.bf16.mxu0 0
        %925 = vmatpush1.bf16.msra.mxu0 0
        %926 = vmatprep.subr.bf16.mxu0 0
        %927 = vmatpush1.bf16.msra.mxu0 0
        %928 = vmatprep.subr.bf16.mxu0 0
        %929 = vmatpush1.bf16.msra.mxu0 0
        %930 = vmatprep.subr.bf16.mxu0 0
        %931 = vmatpush1.bf16.msra.mxu0 0
        %932 = vmatprep.subr.bf16.mxu0 0
        %933 = vmatpush1.bf16.msra.mxu0 0
        %934 = vmatprep.subr.bf16.mxu0 0
        %935 = vmatpush1.bf16.msra.mxu0 0
        %936 = vmatprep.subr.bf16.mxu0 0
        %937 = vmatpush1.bf16.msra.mxu0 0
        %938 = vmatprep.subr.bf16.mxu0 0
        %939 = vmatpush1.bf16.msra.mxu0 0
        %940 = vmatprep.subr.bf16.mxu0 0
        %941 = vmatpush1.bf16.msra.mxu0 0
        %942 = vmatprep.subr.bf16.mxu0 0
        %943 = vmatpush1.bf16.msra.mxu0 0
        %944 = vmatprep.subr.bf16.mxu0 0
        %945 = vmatpush1.bf16.msra.mxu0 0
        %946 = vmatprep.subr.bf16.mxu0 0
        %947 = vmatpush1.bf16.msra.mxu0 0
        %948 = vmatprep.subr.bf16.mxu0 0
        %949 = vmatpush1.bf16.msra.mxu0 0
        %950 = vmatprep.mubr.bf16.mxu0 0
        %951 = vmatmul.mubr.bf16.gmra.mrb[0].mxu0 %v452
        %v952 = vpop.f32.mrb[0].mxu0
        %v953 = vadd.f32 0.0, %v952
        %v954 = vpop.f32.mrb[0].mxu0
        %v955 = vpop.f32.mrb[0].mxu0
        %v956 = vpop.f32.mrb[0].mxu0
        %957 = vdwg.mxu0
        %s958 = scalar_lea.vmem %s3, 144
        %v959 = vld [vmem:[%s958] sm:$0xf]
        %v960 = vld [vmem:[%s958 + $0x4] sm:$0xf]
        %v961 = vld [vmem:[%s958 + $0x8] sm:$0xf]
        %v962 = vld [vmem:[%s958 + $0xc] sm:$0xf]
        %v967 = vunpack.c.l.b16 %v959
        %v968 = vunpack.c.l.b16 %v960
        %v969 = vunpack.c.l.b16 %v961
        %v970 = vunpack.c.l.b16 %v962
        %v971 = vpack.c.b16 %v968, %v967
        %v972 = vpack.c.b16 %v970, %v969
        %975 = vmatprep.subr.bf16.mxu0 0
        %976 = vmatpush1.bf16.msra.mxu0 %v971
        %977 = vmatprep.subr.bf16.mxu0 0
        %978 = vmatpush1.bf16.msra.mxu0 %v972
        %979 = vmatprep.subr.bf16.mxu0 0
        %980 = vmatpush1.bf16.msra.mxu0 0
        %981 = vmatprep.subr.bf16.mxu0 0
        %982 = vmatpush1.bf16.msra.mxu0 0
        %983 = vmatprep.subr.bf16.mxu0 0
        %984 = vmatpush1.bf16.msra.mxu0 0
        %985 = vmatprep.subr.bf16.mxu0 0
        %986 = vmatpush1.bf16.msra.mxu0 0
        %987 = vmatprep.subr.bf16.mxu0 0
        %988 = vmatpush1.bf16.msra.mxu0 0
        %989 = vmatprep.subr.bf16.mxu0 0
        %990 = vmatpush1.bf16.msra.mxu0 0
        %991 = vmatprep.subr.bf16.mxu0 0
        %992 = vmatpush1.bf16.msra.mxu0 0
        %993 = vmatprep.subr.bf16.mxu0 0
        %994 = vmatpush1.bf16.msra.mxu0 0
        %995 = vmatprep.subr.bf16.mxu0 0
        %996 = vmatpush1.bf16.msra.mxu0 0
        %997 = vmatprep.subr.bf16.mxu0 0
        %998 = vmatpush1.bf16.msra.mxu0 0
        %999 = vmatprep.subr.bf16.mxu0 0
        %1000 = vmatpush1.bf16.msra.mxu0 0
        %1001 = vmatprep.subr.bf16.mxu0 0
        %1002 = vmatpush1.bf16.msra.mxu0 0
        %1003 = vmatprep.subr.bf16.mxu0 0
        %1004 = vmatpush1.bf16.msra.mxu0 0
        %1005 = vmatprep.subr.bf16.mxu0 0
        %1006 = vmatpush1.bf16.msra.mxu0 0
        %1007 = vmatprep.mubr.bf16.mxu0 0
        %1008 = vmatmul.mubr.bf16.gmra.mrb[0].mxu0 %v452
        %v1009 = vpop.f32.mrb[0].mxu0
        %v1010 = vadd.f32 0.0, %v1009
        %v1011 = vpop.f32.mrb[0].mxu0
        %v1012 = vpop.f32.mrb[0].mxu0
        %v1013 = vpop.f32.mrb[0].mxu0
        %1014 = vdwg.mxu0
        %s1015 = scalar_lea.vmem %s3, 160
        %v1016 = vld [vmem:[%s1015] sm:$0xf]
        %v1017 = vld [vmem:[%s1015 + $0x4] sm:$0xf]
        %v1018 = vld [vmem:[%s1015 + $0x8] sm:$0xf]
        %v1019 = vld [vmem:[%s1015 + $0xc] sm:$0xf]
        %v1024 = vunpack.c.l.b16 %v1016
        %v1025 = vunpack.c.l.b16 %v1017
        %v1026 = vunpack.c.l.b16 %v1018
        %v1027 = vunpack.c.l.b16 %v1019
        %v1028 = vpack.c.b16 %v1025, %v1024
        %v1029 = vpack.c.b16 %v1027, %v1026
        %1032 = vmatprep.subr.bf16.mxu0 0
        %1033 = vmatpush1.bf16.msra.mxu0 %v1028
        %1034 = vmatprep.subr.bf16.mxu0 0
        %1035 = vmatpush1.bf16.msra.mxu0 %v1029
        %1036 = vmatprep.subr.bf16.mxu0 0
        %1037 = vmatpush1.bf16.msra.mxu0 0
        %1038 = vmatprep.subr.bf16.mxu0 0
        %1039 = vmatpush1.bf16.msra.mxu0 0
        %1040 = vmatprep.subr.bf16.mxu0 0
        %1041 = vmatpush1.bf16.msra.mxu0 0
        %1042 = vmatprep.subr.bf16.mxu0 0
        %1043 = vmatpush1.bf16.msra.mxu0 0
        %1044 = vmatprep.subr.bf16.mxu0 0
        %1045 = vmatpush1.bf16.msra.mxu0 0
        %1046 = vmatprep.subr.bf16.mxu0 0
        %1047 = vmatpush1.bf16.msra.mxu0 0
        %1048 = vmatprep.subr.bf16.mxu0 0
        %1049 = vmatpush1.bf16.msra.mxu0 0
        %1050 = vmatprep.subr.bf16.mxu0 0
        %1051 = vmatpush1.bf16.msra.mxu0 0
        %1052 = vmatprep.subr.bf16.mxu0 0
        %1053 = vmatpush1.bf16.msra.mxu0 0
        %1054 = vmatprep.subr.bf16.mxu0 0
        %1055 = vmatpush1.bf16.msra.mxu0 0
        %1056 = vmatprep.subr.bf16.mxu0 0
        %1057 = vmatpush1.bf16.msra.mxu0 0
        %1058 = vmatprep.subr.bf16.mxu0 0
        %1059 = vmatpush1.bf16.msra.mxu0 0
        %1060 = vmatprep.subr.bf16.mxu0 0
        %1061 = vmatpush1.bf16.msra.mxu0 0
        %1062 = vmatprep.subr.bf16.mxu0 0
        %1063 = vmatpush1.bf16.msra.mxu0 0
        %1064 = vmatprep.mubr.bf16.mxu0 0
        %1065 = vmatmul.mubr.bf16.gmra.mrb[0].mxu0 %v452
        %v1066 = vpop.f32.mrb[0].mxu0
        %v1067 = vadd.f32 0.0, %v1066
        %v1068 = vpop.f32.mrb[0].mxu0
        %v1069 = vpop.f32.mrb[0].mxu0
        %v1070 = vpop.f32.mrb[0].mxu0
        %1071 = vdwg.mxu0
        %s1072 = scalar_lea.vmem %s3, 176
        %v1073 = vld [vmem:[%s1072] sm:$0xf]
        %v1074 = vld [vmem:[%s1072 + $0x4] sm:$0xf]
        %v1075 = vld [vmem:[%s1072 + $0x8] sm:$0xf]
        %v1076 = vld [vmem:[%s1072 + $0xc] sm:$0xf]
        %v1081 = vunpack.c.l.b16 %v1073
        %v1082 = vunpack.c.l.b16 %v1074
        %v1083 = vunpack.c.l.b16 %v1075
        %v1084 = vunpack.c.l.b16 %v1076
        %v1085 = vpack.c.b16 %v1082, %v1081
        %v1086 = vpack.c.b16 %v1084, %v1083
        %1089 = vmatprep.subr.bf16.mxu0 0
        %1090 = vmatpush1.bf16.msra.mxu0 %v1085
        %1091 = vmatprep.subr.bf16.mxu0 0
        %1092 = vmatpush1.bf16.msra.mxu0 %v1086
        %1093 = vmatprep.subr.bf16.mxu0 0
        %1094 = vmatpush1.bf16.msra.mxu0 0
        %1095 = vmatprep.subr.bf16.mxu0 0
        %1096 = vmatpush1.bf16.msra.mxu0 0
        %1097 = vmatprep.subr.bf16.mxu0 0
        %1098 = vmatpush1.bf16.msra.mxu0 0
        %1099 = vmatprep.subr.bf16.mxu0 0
        %1100 = vmatpush1.bf16.msra.mxu0 0
        %1101 = vmatprep.subr.bf16.mxu0 0
        %1102 = vmatpush1.bf16.msra.mxu0 0
        %1103 = vmatprep.subr.bf16.mxu0 0
        %1104 = vmatpush1.bf16.msra.mxu0 0
        %1105 = vmatprep.subr.bf16.mxu0 0
        %1106 = vmatpush1.bf16.msra.mxu0 0
        %1107 = vmatprep.subr.bf16.mxu0 0
        %1108 = vmatpush1.bf16.msra.mxu0 0
        %1109 = vmatprep.subr.bf16.mxu0 0
        %1110 = vmatpush1.bf16.msra.mxu0 0
        %1111 = vmatprep.subr.bf16.mxu0 0
        %1112 = vmatpush1.bf16.msra.mxu0 0
        %1113 = vmatprep.subr.bf16.mxu0 0
        %1114 = vmatpush1.bf16.msra.mxu0 0
        %1115 = vmatprep.subr.bf16.mxu0 0
        %1116 = vmatpush1.bf16.msra.mxu0 0
        %1117 = vmatprep.subr.bf16.mxu0 0
        %1118 = vmatpush1.bf16.msra.mxu0 0
        %1119 = vmatprep.subr.bf16.mxu0 0
        %1120 = vmatpush1.bf16.msra.mxu0 0
        %1121 = vmatprep.mubr.bf16.mxu0 0
        %1122 = vmatmul.mubr.bf16.gmra.mrb[0].mxu0 %v452
        %v1123 = vpop.f32.mrb[0].mxu0
        %v1124 = vadd.f32 0.0, %v1123
        %v1125 = vpop.f32.mrb[0].mxu0
        %v1126 = vpop.f32.mrb[0].mxu0
        %v1127 = vpop.f32.mrb[0].mxu0
        %1128 = vdwg.mxu0
        %v1129 = vpack.c.bf16 %v953, %v953
        %v1130 = vpack.c.bf16 %v1010, %v1010
        %v1131 = vpack.c.bf16 %v1067, %v1067
        %v1132 = vpack.c.bf16 %v1124, %v1124
        %vm1133 = vcmask 64512
        %v1135 = vsel %vm1133, %v665, 0
        %v1138 = vsel %vm1133, %v897, 0
        %1140 = vmatprep.subr.bf16.mxu0 0
        %1141 = vmatpush1.bf16.xpose.msra.mxu0 %v1138
        %1142 = vmatprep.subr.bf16.mxu0 0
        %1143 = vmatpush1.bf16.xpose.msra.mxu0 0
        %1144 = vmatprep.subr.bf16.mxu0 0
        %1145 = vmatpush1.bf16.xpose.msra.mxu0 0
        %1146 = vmatprep.subr.bf16.mxu0 0
        %1147 = vmatpush1.bf16.xpose.msra.mxu0 0
        %1148 = vmatprep.subr.bf16.mxu0 0
        %1149 = vmatpush1.bf16.xpose.msra.mxu0 0
        %1150 = vmatprep.subr.bf16.mxu0 0
        %1151 = vmatpush1.bf16.xpose.msra.mxu0 0
        %1152 = vmatprep.subr.bf16.mxu0 0
        %1153 = vmatpush1.bf16.xpose.msra.mxu0 0
        %1154 = vmatprep.subr.bf16.mxu0 0
        %1155 = vmatpush1.bf16.xpose.msra.mxu0 0
        %1156 = vmatprep.subr.bf16.mxu0 0
        %1157 = vmatpush1.bf16.xpose.msra.mxu0 0
        %1158 = vmatprep.subr.bf16.mxu0 0
        %1159 = vmatpush1.bf16.xpose.msra.mxu0 0
        %1160 = vmatprep.subr.bf16.mxu0 0
        %1161 = vmatpush1.bf16.xpose.msra.mxu0 0
        %1162 = vmatprep.subr.bf16.mxu0 0
        %1163 = vmatpush1.bf16.xpose.msra.mxu0 0
        %1164 = vmatprep.subr.bf16.mxu0 0
        %1165 = vmatpush1.bf16.xpose.msra.mxu0 0
        %1166 = vmatprep.subr.bf16.mxu0 0
        %1167 = vmatpush1.bf16.xpose.msra.mxu0 0
        %1168 = vmatprep.subr.bf16.mxu0 0
        %1169 = vmatpush1.bf16.xpose.msra.mxu0 0
        %1170 = vmatprep.subr.bf16.mxu0 0
        %1171 = vmatpush1.bf16.xpose.msra.mxu0 0
        %1172 = vmatprep.mubr.bf16.mxu0 0
        %1173 = vmatmul.mubr.bf16.gmra.mrb[0].mxu0 %v1135
        %v1174 = vpop.f32.mrb[0].mxu0
        %v1175 = vadd.f32 %v407, %v1174
        %v1176 = vpop.f32.mrb[0].mxu0
        %v1177 = vpop.f32.mrb[0].mxu0
        %v1178 = vpop.f32.mrb[0].mxu0
        %1179 = vdwg.mxu0
        %v1181 = vsel %vm1133, %v666, 0
        %v1184 = vsel %vm1133, %v898, 0
        %1186 = vmatprep.subr.bf16.mxu0 0
        %1187 = vmatpush1.bf16.xpose.msra.mxu0 %v1184
        %1188 = vmatprep.subr.bf16.mxu0 0
        %1189 = vmatpush1.bf16.xpose.msra.mxu0 0
        %1190 = vmatprep.subr.bf16.mxu0 0
        %1191 = vmatpush1.bf16.xpose.msra.mxu0 0
        %1192 = vmatprep.subr.bf16.mxu0 0
        %1193 = vmatpush1.bf16.xpose.msra.mxu0 0
        %1194 = vmatprep.subr.bf16.mxu0 0
        %1195 = vmatpush1.bf16.xpose.msra.mxu0 0
        %1196 = vmatprep.subr.bf16.mxu0 0
        %1197 = vmatpush1.bf16.xpose.msra.mxu0 0
        %1198 = vmatprep.subr.bf16.mxu0 0
        %1199 = vmatpush1.bf16.xpose.msra.mxu0 0
        %1200 = vmatprep.subr.bf16.mxu0 0
        %1201 = vmatpush1.bf16.xpose.msra.mxu0 0
        %1202 = vmatprep.subr.bf16.mxu0 0
        %1203 = vmatpush1.bf16.xpose.msra.mxu0 0
        %1204 = vmatprep.subr.bf16.mxu0 0
        %1205 = vmatpush1.bf16.xpose.msra.mxu0 0
        %1206 = vmatprep.subr.bf16.mxu0 0
        %1207 = vmatpush1.bf16.xpose.msra.mxu0 0
        %1208 = vmatprep.subr.bf16.mxu0 0
        %1209 = vmatpush1.bf16.xpose.msra.mxu0 0
        %1210 = vmatprep.subr.bf16.mxu0 0
        %1211 = vmatpush1.bf16.xpose.msra.mxu0 0
        %1212 = vmatprep.subr.bf16.mxu0 0
        %1213 = vmatpush1.bf16.xpose.msra.mxu0 0
        %1214 = vmatprep.subr.bf16.mxu0 0
        %1215 = vmatpush1.bf16.xpose.msra.mxu0 0
        %1216 = vmatprep.subr.bf16.mxu0 0
        %1217 = vmatpush1.bf16.xpose.msra.mxu0 0
        %1218 = vmatprep.mubr.bf16.mxu0 0
        %1219 = vmatmul.mubr.bf16.gmra.mrb[0].mxu0 %v1181
        %v1220 = vpop.f32.mrb[0].mxu0
        %v1221 = vadd.f32 %v407, %v1220
        %v1222 = vpop.f32.mrb[0].mxu0
        %v1223 = vpop.f32.mrb[0].mxu0
        %v1224 = vpop.f32.mrb[0].mxu0
        %1225 = vdwg.mxu0
        %v1227 = vsel %vm1133, %v667, 0
        %v1230 = vsel %vm1133, %v899, 0
        %1232 = vmatprep.subr.bf16.mxu0 0
        %1233 = vmatpush1.bf16.xpose.msra.mxu0 %v1230
        %1234 = vmatprep.subr.bf16.mxu0 0
        %1235 = vmatpush1.bf16.xpose.msra.mxu0 0
        %1236 = vmatprep.subr.bf16.mxu0 0
        %1237 = vmatpush1.bf16.xpose.msra.mxu0 0
        %1238 = vmatprep.subr.bf16.mxu0 0
        %1239 = vmatpush1.bf16.xpose.msra.mxu0 0
        %1240 = vmatprep.subr.bf16.mxu0 0
        %1241 = vmatpush1.bf16.xpose.msra.mxu0 0
        %1242 = vmatprep.subr.bf16.mxu0 0
        %1243 = vmatpush1.bf16.xpose.msra.mxu0 0
        %1244 = vmatprep.subr.bf16.mxu0 0
        %1245 = vmatpush1.bf16.xpose.msra.mxu0 0
        %1246 = vmatprep.subr.bf16.mxu0 0
        %1247 = vmatpush1.bf16.xpose.msra.mxu0 0
        %1248 = vmatprep.subr.bf16.mxu0 0
        %1249 = vmatpush1.bf16.xpose.msra.mxu0 0
        %1250 = vmatprep.subr.bf16.mxu0 0
        %1251 = vmatpush1.bf16.xpose.msra.mxu0 0
        %1252 = vmatprep.subr.bf16.mxu0 0
        %1253 = vmatpush1.bf16.xpose.msra.mxu0 0
        %1254 = vmatprep.subr.bf16.mxu0 0
        %1255 = vmatpush1.bf16.xpose.msra.mxu0 0
        %1256 = vmatprep.subr.bf16.mxu0 0
        %1257 = vmatpush1.bf16.xpose.msra.mxu0 0
        %1258 = vmatprep.subr.bf16.mxu0 0
        %1259 = vmatpush1.bf16.xpose.msra.mxu0 0
        %1260 = vmatprep.subr.bf16.mxu0 0
        %1261 = vmatpush1.bf16.xpose.msra.mxu0 0
        %1262 = vmatprep.subr.bf16.mxu0 0
        %1263 = vmatpush1.bf16.xpose.msra.mxu0 0
        %1264 = vmatprep.mubr.bf16.mxu0 0
        %1265 = vmatmul.mubr.bf16.gmra.mrb[0].mxu0 %v1227
        %v1266 = vpop.f32.mrb[0].mxu0
        %v1267 = vadd.f32 %v407, %v1266
        %v1268 = vpop.f32.mrb[0].mxu0
        %v1269 = vpop.f32.mrb[0].mxu0
        %v1270 = vpop.f32.mrb[0].mxu0
        %1271 = vdwg.mxu0
        %v1273 = vsel %vm1133, %v668, 0
        %v1276 = vsel %vm1133, %v900, 0
        %1278 = vmatprep.subr.bf16.mxu0 0
        %1279 = vmatpush1.bf16.xpose.msra.mxu0 %v1276
        %1280 = vmatprep.subr.bf16.mxu0 0
        %1281 = vmatpush1.bf16.xpose.msra.mxu0 0
        %1282 = vmatprep.subr.bf16.mxu0 0
        %1283 = vmatpush1.bf16.xpose.msra.mxu0 0
        %1284 = vmatprep.subr.bf16.mxu0 0
        %1285 = vmatpush1.bf16.xpose.msra.mxu0 0
        %1286 = vmatprep.subr.bf16.mxu0 0
        %1287 = vmatpush1.bf16.xpose.msra.mxu0 0
        %1288 = vmatprep.subr.bf16.mxu0 0
        %1289 = vmatpush1.bf16.xpose.msra.mxu0 0
        %1290 = vmatprep.subr.bf16.mxu0 0
        %1291 = vmatpush1.bf16.xpose.msra.mxu0 0
        %1292 = vmatprep.subr.bf16.mxu0 0
        %1293 = vmatpush1.bf16.xpose.msra.mxu0 0
        %1294 = vmatprep.subr.bf16.mxu0 0
        %1295 = vmatpush1.bf16.xpose.msra.mxu0 0
        %1296 = vmatprep.subr.bf16.mxu0 0
        %1297 = vmatpush1.bf16.xpose.msra.mxu0 0
        %1298 = vmatprep.subr.bf16.mxu0 0
        %1299 = vmatpush1.bf16.xpose.msra.mxu0 0
        %1300 = vmatprep.subr.bf16.mxu0 0
        %1301 = vmatpush1.bf16.xpose.msra.mxu0 0
        %1302 = vmatprep.subr.bf16.mxu0 0
        %1303 = vmatpush1.bf16.xpose.msra.mxu0 0
        %1304 = vmatprep.subr.bf16.mxu0 0
        %1305 = vmatpush1.bf16.xpose.msra.mxu0 0
        %1306 = vmatprep.subr.bf16.mxu0 0
        %1307 = vmatpush1.bf16.xpose.msra.mxu0 0
        %1308 = vmatprep.subr.bf16.mxu0 0
        %1309 = vmatpush1.bf16.xpose.msra.mxu0 0
        %1310 = vmatprep.mubr.bf16.mxu0 0
        %1311 = vmatmul.mubr.bf16.gmra.mrb[0].mxu0 %v1273
        %v1312 = vpop.f32.mrb[0].mxu0
        %v1313 = vadd.f32 %v407, %v1312
        %v1314 = vpop.f32.mrb[0].mxu0
        %v1315 = vpop.f32.mrb[0].mxu0
        %v1316 = vpop.f32.mrb[0].mxu0
        %1317 = vdwg.mxu0
        %v1318 = vsel %vm1133, %v1175, -inf
        %1319 = vmax.xlane.f32.xlu0 %v1318
        %v1320 = vpop.xlane.xlu0 %1319
        %v1321 = vsel %vm1133, %v1221, -inf
        %1322 = vmax.xlane.f32.xlu0 %v1321
        %v1323 = vpop.xlane.xlu0 %1322
        %v1324 = vsel %vm1133, %v1267, -inf
        %1325 = vmax.xlane.f32.xlu0 %v1324
        %v1326 = vpop.xlane.xlu0 %1325
        %v1327 = vsel %vm1133, %v1313, -inf
        %1328 = vmax.xlane.f32.xlu0 %v1327
        %v1329 = vpop.xlane.xlu0 %1328
        %v1330 = vsub.f32 %v1175, %v1320
        %v1331 = vsub.f32 %v1221, %v1323
        %v1332 = vsub.f32 %v1267, %v1326
        %v1333 = vsub.f32 %v1313, %v1329
        %v1334 = vmul.f32 %v1330, 1.442695
        %v1335 = vpow.pop %v1334
        %v1336 = vmul.f32 %v1331, 1.442695
        %v1337 = vpow.pop %v1336
        %v1338 = vmul.f32 %v1332, 1.442695
        %v1339 = vpow.pop %v1338
        %v1340 = vmul.f32 %v1333, 1.442695
        %v1341 = vpow.pop %v1340
        %v1342 = vsel %vm1133, %v1335, 0.0
        %1343 = vadd.xlane.f32.xlu0 %v1342
        %v1344 = vpop.xlane.xlu0 %1343
        %v1345 = vsel %vm1133, %v1337, 0.0
        %1346 = vadd.xlane.f32.xlu0 %v1345
        %v1347 = vpop.xlane.xlu0 %1346
        %v1348 = vsel %vm1133, %v1339, 0.0
        %1349 = vadd.xlane.f32.xlu0 %v1348
        %v1350 = vpop.xlane.xlu0 %1349
        %v1351 = vsel %vm1133, %v1341, 0.0
        %1352 = vadd.xlane.f32.xlu0 %v1351
        %v1353 = vpop.xlane.xlu0 %1352
        %v1354 = vrcp.pop %v1344
        %v1355 = vrcp.pop %v1347
        %v1356 = vrcp.pop %v1350
        %v1357 = vrcp.pop %v1353
        %v1358 = vmul.f32 %v1335, %v1354
        %v1359 = vmul.f32 %v1337, %v1355
        %v1360 = vmul.f32 %v1339, %v1356
        %v1361 = vmul.f32 %v1341, %v1357
        %v1362 = vpack.c.bf16 %v1358, %v1358
        %v1363 = vpack.c.bf16 %v1359, %v1359
        %v1364 = vpack.c.bf16 %v1360, %v1360
        %v1365 = vpack.c.bf16 %v1361, %v1361
        %v1367 = vsel %vm1133, %v1362, 0
        %v1370 = vsel %vm394, %v1129, 0
        %1372 = vmatprep.subr.bf16.mxu0 0
        %1373 = vmatpush1.bf16.msra.mxu0 %v1370
        %1374 = vmatprep.subr.bf16.mxu0 0
        %1375 = vmatpush1.bf16.msra.mxu0 0
        %1376 = vmatprep.subr.bf16.mxu0 0
        %1377 = vmatpush1.bf16.msra.mxu0 0
        %1378 = vmatprep.subr.bf16.mxu0 0
        %1379 = vmatpush1.bf16.msra.mxu0 0
        %1380 = vmatprep.subr.bf16.mxu0 0
        %1381 = vmatpush1.bf16.msra.mxu0 0
        %1382 = vmatprep.subr.bf16.mxu0 0
        %1383 = vmatpush1.bf16.msra.mxu0 0
        %1384 = vmatprep.subr.bf16.mxu0 0
        %1385 = vmatpush1.bf16.msra.mxu0 0
        %1386 = vmatprep.subr.bf16.mxu0 0
        %1387 = vmatpush1.bf16.msra.mxu0 0
        %1388 = vmatprep.subr.bf16.mxu0 0
        %1389 = vmatpush1.bf16.msra.mxu0 0
        %1390 = vmatprep.subr.bf16.mxu0 0
        %1391 = vmatpush1.bf16.msra.mxu0 0
        %1392 = vmatprep.subr.bf16.mxu0 0
        %1393 = vmatpush1.bf16.msra.mxu0 0
        %1394 = vmatprep.subr.bf16.mxu0 0
        %1395 = vmatpush1.bf16.msra.mxu0 0
        %1396 = vmatprep.subr.bf16.mxu0 0
        %1397 = vmatpush1.bf16.msra.mxu0 0
        %1398 = vmatprep.subr.bf16.mxu0 0
        %1399 = vmatpush1.bf16.msra.mxu0 0
        %1400 = vmatprep.subr.bf16.mxu0 0
        %1401 = vmatpush1.bf16.msra.mxu0 0
        %1402 = vmatprep.subr.bf16.mxu0 0
        %1403 = vmatpush1.bf16.msra.mxu0 0
        %1404 = vmatprep.mubr.bf16.mxu0 0
        %1405 = vmatmul.mubr.bf16.gmra.mrb[0].mxu0 %v1367
        %v1406 = vpop.f32.mrb[0].mxu0
        %v1407 = vadd.f32 0.0, %v1406
        %v1408 = vpop.f32.mrb[0].mxu0
        %v1409 = vpop.f32.mrb[0].mxu0
        %v1410 = vpop.f32.mrb[0].mxu0
        %1411 = vdwg.mxu0
        %v1413 = vsel %vm1133, %v1363, 0
        %v1416 = vsel %vm394, %v1130, 0
        %1418 = vmatprep.subr.bf16.mxu0 0
        %1419 = vmatpush1.bf16.msra.mxu0 %v1416
        %1420 = vmatprep.subr.bf16.mxu0 0
        %1421 = vmatpush1.bf16.msra.mxu0 0
        %1422 = vmatprep.subr.bf16.mxu0 0
        %1423 = vmatpush1.bf16.msra.mxu0 0
        %1424 = vmatprep.subr.bf16.mxu0 0
        %1425 = vmatpush1.bf16.msra.mxu0 0
        %1426 = vmatprep.subr.bf16.mxu0 0
        %1427 = vmatpush1.bf16.msra.mxu0 0
        %1428 = vmatprep.subr.bf16.mxu0 0
        %1429 = vmatpush1.bf16.msra.mxu0 0
        %1430 = vmatprep.subr.bf16.mxu0 0
        %1431 = vmatpush1.bf16.msra.mxu0 0
        %1432 = vmatprep.subr.bf16.mxu0 0
        %1433 = vmatpush1.bf16.msra.mxu0 0
        %1434 = vmatprep.subr.bf16.mxu0 0
        %1435 = vmatpush1.bf16.msra.mxu0 0
        %1436 = vmatprep.subr.bf16.mxu0 0
        %1437 = vmatpush1.bf16.msra.mxu0 0
        %1438 = vmatprep.subr.bf16.mxu0 0
        %1439 = vmatpush1.bf16.msra.mxu0 0
        %1440 = vmatprep.subr.bf16.mxu0 0
        %1441 = vmatpush1.bf16.msra.mxu0 0
        %1442 = vmatprep.subr.bf16.mxu0 0
        %1443 = vmatpush1.bf16.msra.mxu0 0
        %1444 = vmatprep.subr.bf16.mxu0 0
        %1445 = vmatpush1.bf16.msra.mxu0 0
        %1446 = vmatprep.subr.bf16.mxu0 0
        %1447 = vmatpush1.bf16.msra.mxu0 0
        %1448 = vmatprep.subr.bf16.mxu0 0
        %1449 = vmatpush1.bf16.msra.mxu0 0
        %1450 = vmatprep.mubr.bf16.mxu0 0
        %1451 = vmatmul.mubr.bf16.gmra.mrb[0].mxu0 %v1413
        %v1452 = vpop.f32.mrb[0].mxu0
        %v1453 = vadd.f32 0.0, %v1452
        %v1454 = vpop.f32.mrb[0].mxu0
        %v1455 = vpop.f32.mrb[0].mxu0
        %v1456 = vpop.f32.mrb[0].mxu0
        %1457 = vdwg.mxu0
        %v1459 = vsel %vm1133, %v1364, 0
        %v1462 = vsel %vm394, %v1131, 0
        %1464 = vmatprep.subr.bf16.mxu0 0
        %1465 = vmatpush1.bf16.msra.mxu0 %v1462
        %1466 = vmatprep.subr.bf16.mxu0 0
        %1467 = vmatpush1.bf16.msra.mxu0 0
        %1468 = vmatprep.subr.bf16.mxu0 0
        %1469 = vmatpush1.bf16.msra.mxu0 0
        %1470 = vmatprep.subr.bf16.mxu0 0
        %1471 = vmatpush1.bf16.msra.mxu0 0
        %1472 = vmatprep.subr.bf16.mxu0 0
        %1473 = vmatpush1.bf16.msra.mxu0 0
        %1474 = vmatprep.subr.bf16.mxu0 0
        %1475 = vmatpush1.bf16.msra.mxu0 0
        %1476 = vmatprep.subr.bf16.mxu0 0
        %1477 = vmatpush1.bf16.msra.mxu0 0
        %1478 = vmatprep.subr.bf16.mxu0 0
        %1479 = vmatpush1.bf16.msra.mxu0 0
        %1480 = vmatprep.subr.bf16.mxu0 0
        %1481 = vmatpush1.bf16.msra.mxu0 0
        %1482 = vmatprep.subr.bf16.mxu0 0
        %1483 = vmatpush1.bf16.msra.mxu0 0
        %1484 = vmatprep.subr.bf16.mxu0 0
        %1485 = vmatpush1.bf16.msra.mxu0 0
        %1486 = vmatprep.subr.bf16.mxu0 0
        %1487 = vmatpush1.bf16.msra.mxu0 0
        %1488 = vmatprep.subr.bf16.mxu0 0
        %1489 = vmatpush1.bf16.msra.mxu0 0
        %1490 = vmatprep.subr.bf16.mxu0 0
        %1491 = vmatpush1.bf16.msra.mxu0 0
        %1492 = vmatprep.subr.bf16.mxu0 0
        %1493 = vmatpush1.bf16.msra.mxu0 0
        %1494 = vmatprep.subr.bf16.mxu0 0
        %1495 = vmatpush1.bf16.msra.mxu0 0
        %1496 = vmatprep.mubr.bf16.mxu0 0
        %1497 = vmatmul.mubr.bf16.gmra.mrb[0].mxu0 %v1459
        %v1498 = vpop.f32.mrb[0].mxu0
        %v1499 = vadd.f32 0.0, %v1498
        %v1500 = vpop.f32.mrb[0].mxu0
        %v1501 = vpop.f32.mrb[0].mxu0
        %v1502 = vpop.f32.mrb[0].mxu0
        %1503 = vdwg.mxu0
        %v1505 = vsel %vm1133, %v1365, 0
        %v1508 = vsel %vm394, %v1132, 0
        %1510 = vmatprep.subr.bf16.mxu0 0
        %1511 = vmatpush1.bf16.msra.mxu0 %v1508
        %1512 = vmatprep.subr.bf16.mxu0 0
        %1513 = vmatpush1.bf16.msra.mxu0 0
        %1514 = vmatprep.subr.bf16.mxu0 0
        %1515 = vmatpush1.bf16.msra.mxu0 0
        %1516 = vmatprep.subr.bf16.mxu0 0
        %1517 = vmatpush1.bf16.msra.mxu0 0
        %1518 = vmatprep.subr.bf16.mxu0 0
        %1519 = vmatpush1.bf16.msra.mxu0 0
        %1520 = vmatprep.subr.bf16.mxu0 0
        %1521 = vmatpush1.bf16.msra.mxu0 0
        %1522 = vmatprep.subr.bf16.mxu0 0
        %1523 = vmatpush1.bf16.msra.mxu0 0
        %1524 = vmatprep.subr.bf16.mxu0 0
        %1525 = vmatpush1.bf16.msra.mxu0 0
        %1526 = vmatprep.subr.bf16.mxu0 0
        %1527 = vmatpush1.bf16.msra.mxu0 0
        %1528 = vmatprep.subr.bf16.mxu0 0
        %1529 = vmatpush1.bf16.msra.mxu0 0
        %1530 = vmatprep.subr.bf16.mxu0 0
        %1531 = vmatpush1.bf16.msra.mxu0 0
        %1532 = vmatprep.subr.bf16.mxu0 0
        %1533 = vmatpush1.bf16.msra.mxu0 0
        %1534 = vmatprep.subr.bf16.mxu0 0
        %1535 = vmatpush1.bf16.msra.mxu0 0
        %1536 = vmatprep.subr.bf16.mxu0 0
        %1537 = vmatpush1.bf16.msra.mxu0 0
        %1538 = vmatprep.subr.bf16.mxu0 0
        %1539 = vmatpush1.bf16.msra.mxu0 0
        %1540 = vmatprep.subr.bf16.mxu0 0
        %1541 = vmatpush1.bf16.msra.mxu0 0
        %1542 = vmatprep.mubr.bf16.mxu0 0
        %1543 = vmatmul.mubr.bf16.gmra.mrb[0].mxu0 %v1505
        %v1544 = vpop.f32.mrb[0].mxu0
        %v1545 = vadd.f32 0.0, %v1544
        %v1546 = vpop.f32.mrb[0].mxu0
        %v1547 = vpop.f32.mrb[0].mxu0
        %v1548 = vpop.f32.mrb[0].mxu0
        %1549 = vdwg.mxu0
        %v1550 = vpack.c.bf16 %v1407, %v1407
        %v1551 = vpack.c.bf16 %v1453, %v1453
        %v1552 = vpack.c.bf16 %v1499, %v1499
        %v1553 = vpack.c.bf16 %v1545, %v1545
        %v1554 = vld [vmem:[%s4] sm:$0xf]
        %v1555 = vld [vmem:[%s4 + $0x4] sm:$0xf]
        %v1556 = vld [vmem:[%s4 + $0x8] sm:$0xf]
        %v1557 = vld [vmem:[%s4 + $0xc] sm:$0xf]
        %v1559 = vsel %vm1133, %v1550, 0
        %v1562 = vsel %vm394, %v1554, 0
        %1564 = vmatprep.subr.bf16.mxu0 0
        %1565 = vmatpush1.bf16.msra.mxu0 %v1562
        %1566 = vmatprep.subr.bf16.mxu0 0
        %1567 = vmatpush1.bf16.msra.mxu0 0
        %1568 = vmatprep.subr.bf16.mxu0 0
        %1569 = vmatpush1.bf16.msra.mxu0 0
        %1570 = vmatprep.subr.bf16.mxu0 0
        %1571 = vmatpush1.bf16.msra.mxu0 0
        %1572 = vmatprep.subr.bf16.mxu0 0
        %1573 = vmatpush1.bf16.msra.mxu0 0
        %1574 = vmatprep.subr.bf16.mxu0 0
        %1575 = vmatpush1.bf16.msra.mxu0 0
        %1576 = vmatprep.subr.bf16.mxu0 0
        %1577 = vmatpush1.bf16.msra.mxu0 0
        %1578 = vmatprep.subr.bf16.mxu0 0
        %1579 = vmatpush1.bf16.msra.mxu0 0
        %1580 = vmatprep.subr.bf16.mxu0 0
        %1581 = vmatpush1.bf16.msra.mxu0 0
        %1582 = vmatprep.subr.bf16.mxu0 0
        %1583 = vmatpush1.bf16.msra.mxu0 0
        %1584 = vmatprep.subr.bf16.mxu0 0
        %1585 = vmatpush1.bf16.msra.mxu0 0
        %1586 = vmatprep.subr.bf16.mxu0 0
        %1587 = vmatpush1.bf16.msra.mxu0 0
        %1588 = vmatprep.subr.bf16.mxu0 0
        %1589 = vmatpush1.bf16.msra.mxu0 0
        %1590 = vmatprep.subr.bf16.mxu0 0
        %1591 = vmatpush1.bf16.msra.mxu0 0
        %1592 = vmatprep.subr.bf16.mxu0 0
        %1593 = vmatpush1.bf16.msra.mxu0 0
        %1594 = vmatprep.subr.bf16.mxu0 0
        %1595 = vmatpush1.bf16.msra.mxu0 0
        %1596 = vmatprep.mubr.bf16.mxu0 0
        %1597 = vmatmul.mubr.bf16.gmra.mrb[0].mxu0 %v1559
        %v1598 = vpop.f32.mrb[0].mxu0
        %v1599 = vadd.f32 0.0, %v1598
        %v1600 = vpop.f32.mrb[0].mxu0
        %v1601 = vpop.f32.mrb[0].mxu0
        %v1602 = vpop.f32.mrb[0].mxu0
        %1603 = vdwg.mxu0
        %v1605 = vsel %vm1133, %v1551, 0
        %v1608 = vsel %vm394, %v1555, 0
        %1610 = vmatprep.subr.bf16.mxu0 0
        %1611 = vmatpush1.bf16.msra.mxu0 %v1608
        %1612 = vmatprep.subr.bf16.mxu0 0
        %1613 = vmatpush1.bf16.msra.mxu0 0
        %1614 = vmatprep.subr.bf16.mxu0 0
        %1615 = vmatpush1.bf16.msra.mxu0 0
        %1616 = vmatprep.subr.bf16.mxu0 0
        %1617 = vmatpush1.bf16.msra.mxu0 0
        %1618 = vmatprep.subr.bf16.mxu0 0
        %1619 = vmatpush1.bf16.msra.mxu0 0
        %1620 = vmatprep.subr.bf16.mxu0 0
        %1621 = vmatpush1.bf16.msra.mxu0 0
        %1622 = vmatprep.subr.bf16.mxu0 0
        %1623 = vmatpush1.bf16.msra.mxu0 0
        %1624 = vmatprep.subr.bf16.mxu0 0
        %1625 = vmatpush1.bf16.msra.mxu0 0
        %1626 = vmatprep.subr.bf16.mxu0 0
        %1627 = vmatpush1.bf16.msra.mxu0 0
        %1628 = vmatprep.subr.bf16.mxu0 0
        %1629 = vmatpush1.bf16.msra.mxu0 0
        %1630 = vmatprep.subr.bf16.mxu0 0
        %1631 = vmatpush1.bf16.msra.mxu0 0
        %1632 = vmatprep.subr.bf16.mxu0 0
        %1633 = vmatpush1.bf16.msra.mxu0 0
        %1634 = vmatprep.subr.bf16.mxu0 0
        %1635 = vmatpush1.bf16.msra.mxu0 0
        %1636 = vmatprep.subr.bf16.mxu0 0
        %1637 = vmatpush1.bf16.msra.mxu0 0
        %1638 = vmatprep.subr.bf16.mxu0 0
        %1639 = vmatpush1.bf16.msra.mxu0 0
        %1640 = vmatprep.subr.bf16.mxu0 0
        %1641 = vmatpush1.bf16.msra.mxu0 0
        %1642 = vmatprep.mubr.bf16.mxu0 0
        %1643 = vmatmul.mubr.bf16.gmra.mrb[0].mxu0 %v1605
        %v1644 = vpop.f32.mrb[0].mxu0
        %v1645 = vadd.f32 0.0, %v1644
        %v1646 = vpop.f32.mrb[0].mxu0
        %v1647 = vpop.f32.mrb[0].mxu0
        %v1648 = vpop.f32.mrb[0].mxu0
        %1649 = vdwg.mxu0
        %v1651 = vsel %vm1133, %v1552, 0
        %v1654 = vsel %vm394, %v1556, 0
        %1656 = vmatprep.subr.bf16.mxu0 0
        %1657 = vmatpush1.bf16.msra.mxu0 %v1654
        %1658 = vmatprep.subr.bf16.mxu0 0
        %1659 = vmatpush1.bf16.msra.mxu0 0
        %1660 = vmatprep.subr.bf16.mxu0 0
        %1661 = vmatpush1.bf16.msra.mxu0 0
        %1662 = vmatprep.subr.bf16.mxu0 0
        %1663 = vmatpush1.bf16.msra.mxu0 0
        %1664 = vmatprep.subr.bf16.mxu0 0
        %1665 = vmatpush1.bf16.msra.mxu0 0
        %1666 = vmatprep.subr.bf16.mxu0 0
        %1667 = vmatpush1.bf16.msra.mxu0 0
        %1668 = vmatprep.subr.bf16.mxu0 0
        %1669 = vmatpush1.bf16.msra.mxu0 0
        %1670 = vmatprep.subr.bf16.mxu0 0
        %1671 = vmatpush1.bf16.msra.mxu0 0
        %1672 = vmatprep.subr.bf16.mxu0 0
        %1673 = vmatpush1.bf16.msra.mxu0 0
        %1674 = vmatprep.subr.bf16.mxu0 0
        %1675 = vmatpush1.bf16.msra.mxu0 0
        %1676 = vmatprep.subr.bf16.mxu0 0
        %1677 = vmatpush1.bf16.msra.mxu0 0
        %1678 = vmatprep.subr.bf16.mxu0 0
        %1679 = vmatpush1.bf16.msra.mxu0 0
        %1680 = vmatprep.subr.bf16.mxu0 0
        %1681 = vmatpush1.bf16.msra.mxu0 0
        %1682 = vmatprep.subr.bf16.mxu0 0
        %1683 = vmatpush1.bf16.msra.mxu0 0
        %1684 = vmatprep.subr.bf16.mxu0 0
        %1685 = vmatpush1.bf16.msra.mxu0 0
        %1686 = vmatprep.subr.bf16.mxu0 0
        %1687 = vmatpush1.bf16.msra.mxu0 0
        %1688 = vmatprep.mubr.bf16.mxu0 0
        %1689 = vmatmul.mubr.bf16.gmra.mrb[0].mxu0 %v1651
        %v1690 = vpop.f32.mrb[0].mxu0
        %v1691 = vadd.f32 0.0, %v1690
        %v1692 = vpop.f32.mrb[0].mxu0
        %v1693 = vpop.f32.mrb[0].mxu0
        %v1694 = vpop.f32.mrb[0].mxu0
        %1695 = vdwg.mxu0
        %v1697 = vsel %vm1133, %v1553, 0
        %v1700 = vsel %vm394, %v1557, 0
        %1702 = vmatprep.subr.bf16.mxu0 0
        %1703 = vmatpush1.bf16.msra.mxu0 %v1700
        %1704 = vmatprep.subr.bf16.mxu0 0
        %1705 = vmatpush1.bf16.msra.mxu0 0
        %1706 = vmatprep.subr.bf16.mxu0 0
        %1707 = vmatpush1.bf16.msra.mxu0 0
        %1708 = vmatprep.subr.bf16.mxu0 0
        %1709 = vmatpush1.bf16.msra.mxu0 0
        %1710 = vmatprep.subr.bf16.mxu0 0
        %1711 = vmatpush1.bf16.msra.mxu0 0
        %1712 = vmatprep.subr.bf16.mxu0 0
        %1713 = vmatpush1.bf16.msra.mxu0 0
        %1714 = vmatprep.subr.bf16.mxu0 0
        %1715 = vmatpush1.bf16.msra.mxu0 0
        %1716 = vmatprep.subr.bf16.mxu0 0
        %1717 = vmatpush1.bf16.msra.mxu0 0
        %1718 = vmatprep.subr.bf16.mxu0 0
        %1719 = vmatpush1.bf16.msra.mxu0 0
        %1720 = vmatprep.subr.bf16.mxu0 0
        %1721 = vmatpush1.bf16.msra.mxu0 0
        %1722 = vmatprep.subr.bf16.mxu0 0
        %1723 = vmatpush1.bf16.msra.mxu0 0
        %1724 = vmatprep.subr.bf16.mxu0 0
        %1725 = vmatpush1.bf16.msra.mxu0 0
        %1726 = vmatprep.subr.bf16.mxu0 0
        %1727 = vmatpush1.bf16.msra.mxu0 0
        %1728 = vmatprep.subr.bf16.mxu0 0
        %1729 = vmatpush1.bf16.msra.mxu0 0
        %1730 = vmatprep.subr.bf16.mxu0 0
        %1731 = vmatpush1.bf16.msra.mxu0 0
        %1732 = vmatprep.subr.bf16.mxu0 0
        %1733 = vmatpush1.bf16.msra.mxu0 0
        %1734 = vmatprep.mubr.bf16.mxu0 0
        %1735 = vmatmul.mubr.bf16.gmra.mrb[0].mxu0 %v1697
        %v1736 = vpop.f32.mrb[0].mxu0
        %v1737 = vadd.f32 0.0, %v1736
        %v1738 = vpop.f32.mrb[0].mxu0
        %v1739 = vpop.f32.mrb[0].mxu0
        %v1740 = vpop.f32.mrb[0].mxu0
        %1741 = vdwg.mxu0
        %v1742 = vsel %vm409, %v1599, 0.0
        %v1743 = vsel %vm409, %v1645, 0.0
        %v1744 = vadd.f32 %v1742, %v1743
        %v1745 = vsel %vm409, %v1691, 0.0
        %v1746 = vadd.f32 %v1744, %v1745
        %v1747 = vsel %vm409, %v1737, 0.0
        %v1748 = vadd.f32 %v1746, %v1747
        %v1749 = vadd.f32 %v401, %v1748
        %v1750 = vlaneseq
        %v1751 = vshrl.u32 %v1750, 7
        %v1752 = vsub.s32 2, %v1751
        %v1753 = vrot.slane %v408, %v1752
        %v1754 = vadd.f32 %v1749, %v1753
        %v1755 = vsel %vm409, %v1754, 0.0
        %1756 = vadd.xlane.f32.xlu0 %v1755
        %v1757 = vpop.xlane.xlu0 %1756
        %v1758 = vmul.f32 %v1757, %v413
        %v1759 = vsub.f32 %v1754, %v1758
        %v1760 = vmul.f32 %v1759, %v1759
        %v1761 = vsel %vm409, %v1760, 0.0
        %1762 = vadd.xlane.f32.xlu0 %v1761
        %v1763 = vpop.xlane.xlu0 %1762
        %v1764 = vmul.f32 %v1763, %v413
        %v1765 = vadd.f32 %v1764, 1e-05
        %v1766 = vrsqrt.pop %v1765
        %v1767 = vmul.f32 %v1759, %v1766
        %v1768 = vlaneseq
        %v1769 = vshrl.u32 %v1768, 7
        %v1770 = vsub.s32 3, %v1769
        %v1771 = vrot.slane %v408, %v1770
        %v1772 = vmul.f32 %v1767, %v1771
        %v1773 = vlaneseq
        %v1774 = vshrl.u32 %v1773, 7
        %v1775 = vsub.s32 4, %v1774
        %v1776 = vrot.slane %v408, %v1775
        %v1777 = vadd.f32 %v1772, %v1776
        %v1778 = vpack.c.bf16 %v1777, %v1777
        %v1779 = vld [vmem:[%s5] sm:$0xf]
        %v1780 = vld [vmem:[%s5 + $0x4] sm:$0xf]
        %v1781 = vld [vmem:[%s5 + $0x8] sm:$0xf]
        %v1782 = vld [vmem:[%s5 + $0xc] sm:$0xf]
        %v1783 = vld [vmem:[%s8] sm:$0x1]
        %v1785 = vlaneseq
        %v1786 = vshrl.u32 %v1785, 7
        %v1787 = vsub.s32 0, %v1786
        %v1788 = vrot.slane %v1783, %v1787
        %v1794 = vunpack.c.l.b16 %v1779
        %v1795 = vunpack.c.l.b16 %v1780
        %v1796 = vunpack.c.l.b16 %v1781
        %v1797 = vunpack.c.l.b16 %v1782
        %v1798 = vpack.c.b16 %v1795, %v1794
        %v1799 = vpack.c.b16 %v1797, %v1796
        %v1803 = vsel %vm409, %v1778, 0
        %1805 = vmatprep.subr.bf16.mxu0 0
        %1806 = vmatpush1.bf16.msra.mxu0 %v1798
        %1807 = vmatprep.subr.bf16.mxu0 0
        %1808 = vmatpush1.bf16.msra.mxu0 %v1799
        %1809 = vmatprep.subr.bf16.mxu0 0
        %1810 = vmatpush1.bf16.msra.mxu0 0
        %1811 = vmatprep.subr.bf16.mxu0 0
        %1812 = vmatpush1.bf16.msra.mxu0 0
        %1813 = vmatprep.subr.bf16.mxu0 0
        %1814 = vmatpush1.bf16.msra.mxu0 0
        %1815 = vmatprep.subr.bf16.mxu0 0
        %1816 = vmatpush1.bf16.msra.mxu0 0
        %1817 = vmatprep.subr.bf16.mxu0 0
        %1818 = vmatpush1.bf16.msra.mxu0 0
        %1819 = vmatprep.subr.bf16.mxu0 0
        %1820 = vmatpush1.bf16.msra.mxu0 0
        %1821 = vmatprep.subr.bf16.mxu0 0
        %1822 = vmatpush1.bf16.msra.mxu0 0
        %1823 = vmatprep.subr.bf16.mxu0 0
        %1824 = vmatpush1.bf16.msra.mxu0 0
        %1825 = vmatprep.subr.bf16.mxu0 0
        %1826 = vmatpush1.bf16.msra.mxu0 0
        %1827 = vmatprep.subr.bf16.mxu0 0
        %1828 = vmatpush1.bf16.msra.mxu0 0
        %1829 = vmatprep.subr.bf16.mxu0 0
        %1830 = vmatpush1.bf16.msra.mxu0 0
        %1831 = vmatprep.subr.bf16.mxu0 0
        %1832 = vmatpush1.bf16.msra.mxu0 0
        %1833 = vmatprep.subr.bf16.mxu0 0
        %1834 = vmatpush1.bf16.msra.mxu0 0
        %1835 = vmatprep.subr.bf16.mxu0 0
        %1836 = vmatpush1.bf16.msra.mxu0 0
        %1837 = vmatprep.mubr.bf16.mxu0 0
        %1838 = vmatmul.mubr.bf16.gmra.mrb[0].mxu0 %v1803
        %v1839 = vpop.f32.mrb[0].mxu0
        %v1840 = vadd.f32 %v1788, %v1839
        %v1841 = vpop.f32.mrb[0].mxu0
        %v1842 = vpop.f32.mrb[0].mxu0
        %v1843 = vpop.f32.mrb[0].mxu0
        %1844 = vdwg.mxu0
        %v1845 = vmul.f32 %v1840, 0.5
        %v1846 = vmul.f32 %v1840, 0.044715
        %v1847 = vmul.f32 %v1846, %v1840
        %v1848 = vmul.f32 %v1847, %v1840
        %v1849 = vadd.f32 %v1840, %v1848
        %v1850 = vmul.f32 %v1849, 0.7978846
        %v1851 = vtanh.pop %v1850
        %v1852 = vadd.f32 %v1851, 1.0
        %v1853 = vmul.f32 %v1845, %v1852
        %v1854 = vpack.c.bf16 %v1853, %v1853
        %v1855 = vld [vmem:[%s6] sm:$0xf]
        %v1856 = vld [vmem:[%s6 + $0x4] sm:$0xf]
        %v1857 = vld [vmem:[%s6 + $0x8] sm:$0xf]
        %v1858 = vld [vmem:[%s6 + $0xc] sm:$0xf]
        %v1859 = vld [vmem:[%s6 + $0x10] sm:$0xf]
        %v1860 = vld [vmem:[%s6 + $0x14] sm:$0xf]
        %v1861 = vld [vmem:[%s6 + $0x18] sm:$0xf]
        %v1862 = vld [vmem:[%s6 + $0x1c] sm:$0xf]
        %v1863 = vld [vmem:[%s6 + $0x20] sm:$0xf]
        %v1864 = vld [vmem:[%s6 + $0x24] sm:$0xf]
        %v1865 = vld [vmem:[%s6 + $0x28] sm:$0xf]
        %v1866 = vld [vmem:[%s6 + $0x2c] sm:$0xf]
        %v1867 = vld [vmem:[%s6 + $0x30] sm:$0xf]
        %v1868 = vld [vmem:[%s6 + $0x34] sm:$0xf]
        %v1869 = vld [vmem:[%s6 + $0x38] sm:$0xf]
        %v1870 = vld [vmem:[%s6 + $0x3c] sm:$0xf]
        %v1887 = vunpack.c.l.b16 %v1855
        %v1888 = vunpack.c.l.b16 %v1856
        %v1889 = vunpack.c.l.b16 %v1857
        %v1890 = vunpack.c.l.b16 %v1858
        %v1891 = vunpack.c.l.b16 %v1859
        %v1892 = vunpack.c.l.b16 %v1860
        %v1893 = vunpack.c.l.b16 %v1861
        %v1894 = vunpack.c.l.b16 %v1862
        %v1895 = vunpack.c.l.b16 %v1863
        %v1896 = vunpack.c.l.b16 %v1864
        %v1897 = vunpack.c.l.b16 %v1865
        %v1898 = vunpack.c.l.b16 %v1866
        %v1899 = vunpack.c.l.b16 %v1867
        %v1900 = vunpack.c.l.b16 %v1868
        %v1901 = vunpack.c.l.b16 %v1869
        %v1902 = vunpack.c.l.b16 %v1870
        %v1903 = vpack.c.b16 %v1888, %v1887
        %v1904 = vpack.c.b16 %v1890, %v1889
        %v1905 = vpack.c.b16 %v1892, %v1891
        %v1906 = vpack.c.b16 %v1894, %v1893
        %v1907 = vpack.c.b16 %v1896, %v1895
        %v1908 = vpack.c.b16 %v1898, %v1897
        %v1909 = vpack.c.b16 %v1900, %v1899
        %v1910 = vpack.c.b16 %v1902, %v1901
        %1919 = vmatprep.subr.bf16.mxu0 0
        %1920 = vmatpush1.bf16.msra.mxu0 %v1903
        %1921 = vmatprep.subr.bf16.mxu0 0
        %1922 = vmatpush1.bf16.msra.mxu0 %v1904
        %1923 = vmatprep.subr.bf16.mxu0 0
        %1924 = vmatpush1.bf16.msra.mxu0 %v1905
        %1925 = vmatprep.subr.bf16.mxu0 0
        %1926 = vmatpush1.bf16.msra.mxu0 %v1906
        %1927 = vmatprep.subr.bf16.mxu0 0
        %1928 = vmatpush1.bf16.msra.mxu0 %v1907
        %1929 = vmatprep.subr.bf16.mxu0 0
        %1930 = vmatpush1.bf16.msra.mxu0 %v1908
        %1931 = vmatprep.subr.bf16.mxu0 0
        %1932 = vmatpush1.bf16.msra.mxu0 %v1909
        %1933 = vmatprep.subr.bf16.mxu0 0
        %1934 = vmatpush1.bf16.msra.mxu0 %v1910
        %1935 = vmatprep.subr.bf16.mxu0 0
        %1936 = vmatpush1.bf16.msra.mxu0 0
        %1937 = vmatprep.subr.bf16.mxu0 0
        %1938 = vmatpush1.bf16.msra.mxu0 0
        %1939 = vmatprep.subr.bf16.mxu0 0
        %1940 = vmatpush1.bf16.msra.mxu0 0
        %1941 = vmatprep.subr.bf16.mxu0 0
        %1942 = vmatpush1.bf16.msra.mxu0 0
        %1943 = vmatprep.subr.bf16.mxu0 0
        %1944 = vmatpush1.bf16.msra.mxu0 0
        %1945 = vmatprep.subr.bf16.mxu0 0
        %1946 = vmatpush1.bf16.msra.mxu0 0
        %1947 = vmatprep.subr.bf16.mxu0 0
        %1948 = vmatpush1.bf16.msra.mxu0 0
        %1949 = vmatprep.subr.bf16.mxu0 0
        %1950 = vmatpush1.bf16.msra.mxu0 0
        %1951 = vmatprep.mubr.bf16.mxu0 0
        %1952 = vmatmul.mubr.bf16.gmra.mrb[0].mxu0 %v1854
        %v1953 = vpop.f32.mrb[0].mxu0
        %v1954 = vadd.f32 0.0, %v1953
        %v1955 = vpop.f32.mrb[0].mxu0
        %v1956 = vpop.f32.mrb[0].mxu0
        %v1957 = vpop.f32.mrb[0].mxu0
        %1958 = vdwg.mxu0
        %v1959 = vadd.f32 %v1754, %v1954
        %v1960 = vlaneseq
        %v1961 = vshrl.u32 %v1960, 7
        %v1962 = vsub.s32 5, %v1961
        %v1963 = vrot.slane %v408, %v1962
        %v1964 = vadd.f32 %v1959, %v1963
        %s1965 = scalar_lea.vmem %s7, 8
        %v1966 = vld [vmem:[%s1965] sm:$0xff]
        %v1967 = vsel %vm409, %v1964, 0.0
        %1968 = vadd.xlane.f32.xlu0 %v1967
        %v1969 = vpop.xlane.xlu0 %1968
        %v1970 = vmul.f32 %v1969, %v413
        %v1971 = vsub.f32 %v1964, %v1970
        %v1972 = vmul.f32 %v1971, %v1971
        %v1973 = vsel %vm409, %v1972, 0.0
        %1974 = vadd.xlane.f32.xlu0 %v1973
        %v1975 = vpop.xlane.xlu0 %1974
        %v1976 = vmul.f32 %v1975, %v413
        %v1977 = vadd.f32 %v1976, 1e-05
        %v1978 = vrsqrt.pop %v1977
        %v1979 = vmul.f32 %v1971, %v1978
        %v1980 = vlaneseq
        %v1981 = vshrl.u32 %v1980, 7
        %v1982 = vsub.s32 0, %v1981
        %v1983 = vrot.slane %v1966, %v1982
        %v1984 = vmul.f32 %v1979, %v1983
        %v1985 = vlaneseq
        %v1986 = vshrl.u32 %v1985, 7
        %v1987 = vsub.s32 1, %v1986
        %v1988 = vrot.slane %v1966, %v1987
        %v1989 = vadd.f32 %v1984, %v1988
        %v1990 = vpack.c.bf16 %v1989, %v1989
        %s1991 = scalar_lea.vmem %s3, 192
        %v1992 = vld [vmem:[%s1991] sm:$0xf]
        %v1993 = vld [vmem:[%s1991 + $0x4] sm:$0xf]
        %v1994 = vld [vmem:[%s1991 + $0x8] sm:$0xf]
        %v1995 = vld [vmem:[%s1991 + $0xc] sm:$0xf]
        %v2000 = vunpack.c.l.b16 %v1992
        %v2001 = vunpack.c.l.b16 %v1993
        %v2002 = vunpack.c.l.b16 %v1994
        %v2003 = vunpack.c.l.b16 %v1995
        %v2004 = vpack.c.b16 %v2001, %v2000
        %v2005 = vpack.c.b16 %v2003, %v2002
        %v2009 = vsel %vm409, %v1990, 0
        %2011 = vmatprep.subr.bf16.mxu0 0
        %2012 = vmatpush1.bf16.msra.mxu0 %v2004
        %2013 = vmatprep.subr.bf16.mxu0 0
        %2014 = vmatpush1.bf16.msra.mxu0 %v2005
        %2015 = vmatprep.subr.bf16.mxu0 0
        %2016 = vmatpush1.bf16.msra.mxu0 0
        %2017 = vmatprep.subr.bf16.mxu0 0
        %2018 = vmatpush1.bf16.msra.mxu0 0
        %2019 = vmatprep.subr.bf16.mxu0 0
        %2020 = vmatpush1.bf16.msra.mxu0 0
        %2021 = vmatprep.subr.bf16.mxu0 0
        %2022 = vmatpush1.bf16.msra.mxu0 0
        %2023 = vmatprep.subr.bf16.mxu0 0
        %2024 = vmatpush1.bf16.msra.mxu0 0
        %2025 = vmatprep.subr.bf16.mxu0 0
        %2026 = vmatpush1.bf16.msra.mxu0 0
        %2027 = vmatprep.subr.bf16.mxu0 0
        %2028 = vmatpush1.bf16.msra.mxu0 0
        %2029 = vmatprep.subr.bf16.mxu0 0
        %2030 = vmatpush1.bf16.msra.mxu0 0
        %2031 = vmatprep.subr.bf16.mxu0 0
        %2032 = vmatpush1.bf16.msra.mxu0 0
        %2033 = vmatprep.subr.bf16.mxu0 0
        %2034 = vmatpush1.bf16.msra.mxu0 0
        %2035 = vmatprep.subr.bf16.mxu0 0
        %2036 = vmatpush1.bf16.msra.mxu0 0
        %2037 = vmatprep.subr.bf16.mxu0 0
        %2038 = vmatpush1.bf16.msra.mxu0 0
        %2039 = vmatprep.subr.bf16.mxu0 0
        %2040 = vmatpush1.bf16.msra.mxu0 0
        %2041 = vmatprep.subr.bf16.mxu0 0
        %2042 = vmatpush1.bf16.msra.mxu0 0
        %2043 = vmatprep.mubr.bf16.mxu0 0
        %2044 = vmatmul.mubr.bf16.gmra.mrb[0].mxu0 %v2009
        %v2045 = vpop.f32.mrb[0].mxu0
        %v2046 = vadd.f32 0.0, %v2045
        %v2047 = vpop.f32.mrb[0].mxu0
        %v2048 = vpop.f32.mrb[0].mxu0
        %v2049 = vpop.f32.mrb[0].mxu0
        %2050 = vdwg.mxu0
        %s2051 = scalar_lea.vmem %s3, 208
        %v2052 = vld [vmem:[%s2051] sm:$0xf]
        %v2053 = vld [vmem:[%s2051 + $0x4] sm:$0xf]
        %v2054 = vld [vmem:[%s2051 + $0x8] sm:$0xf]
        %v2055 = vld [vmem:[%s2051 + $0xc] sm:$0xf]
        %v2060 = vunpack.c.l.b16 %v2052
        %v2061 = vunpack.c.l.b16 %v2053
        %v2062 = vunpack.c.l.b16 %v2054
        %v2063 = vunpack.c.l.b16 %v2055
        %v2064 = vpack.c.b16 %v2061, %v2060
        %v2065 = vpack.c.b16 %v2063, %v2062
        %2068 = vmatprep.subr.bf16.mxu0 0
        %2069 = vmatpush1.bf16.msra.mxu0 %v2064
        %2070 = vmatprep.subr.bf16.mxu0 0
        %2071 = vmatpush1.bf16.msra.mxu0 %v2065
        %2072 = vmatprep.subr.bf16.mxu0 0
        %2073 = vmatpush1.bf16.msra.mxu0 0
        %2074 = vmatprep.subr.bf16.mxu0 0
        %2075 = vmatpush1.bf16.msra.mxu0 0
        %2076 = vmatprep.subr.bf16.mxu0 0
        %2077 = vmatpush1.bf16.msra.mxu0 0
        %2078 = vmatprep.subr.bf16.mxu0 0
        %2079 = vmatpush1.bf16.msra.mxu0 0
        %2080 = vmatprep.subr.bf16.mxu0 0
        %2081 = vmatpush1.bf16.msra.mxu0 0
        %2082 = vmatprep.subr.bf16.mxu0 0
        %2083 = vmatpush1.bf16.msra.mxu0 0
        %2084 = vmatprep.subr.bf16.mxu0 0
        %2085 = vmatpush1.bf16.msra.mxu0 0
        %2086 = vmatprep.subr.bf16.mxu0 0
        %2087 = vmatpush1.bf16.msra.mxu0 0
        %2088 = vmatprep.subr.bf16.mxu0 0
        %2089 = vmatpush1.bf16.msra.mxu0 0
        %2090 = vmatprep.subr.bf16.mxu0 0
        %2091 = vmatpush1.bf16.msra.mxu0 0
        %2092 = vmatprep.subr.bf16.mxu0 0
        %2093 = vmatpush1.bf16.msra.mxu0 0
        %2094 = vmatprep.subr.bf16.mxu0 0
        %2095 = vmatpush1.bf16.msra.mxu0 0
        %2096 = vmatprep.subr.bf16.mxu0 0
        %2097 = vmatpush1.bf16.msra.mxu0 0
        %2098 = vmatprep.subr.bf16.mxu0 0
        %2099 = vmatpush1.bf16.msra.mxu0 0
        %2100 = vmatprep.mubr.bf16.mxu0 0
        %2101 = vmatmul.mubr.bf16.gmra.mrb[0].mxu0 %v2009
        %v2102 = vpop.f32.mrb[0].mxu0
        %v2103 = vadd.f32 0.0, %v2102
        %v2104 = vpop.f32.mrb[0].mxu0
        %v2105 = vpop.f32.mrb[0].mxu0
        %v2106 = vpop.f32.mrb[0].mxu0
        %2107 = vdwg.mxu0
        %s2108 = scalar_lea.vmem %s3, 224
        %v2109 = vld [vmem:[%s2108] sm:$0xf]
        %v2110 = vld [vmem:[%s2108 + $0x4] sm:$0xf]
        %v2111 = vld [vmem:[%s2108 + $0x8] sm:$0xf]
        %v2112 = vld [vmem:[%s2108 + $0xc] sm:$0xf]
        %v2117 = vunpack.c.l.b16 %v2109
        %v2118 = vunpack.c.l.b16 %v2110
        %v2119 = vunpack.c.l.b16 %v2111
        %v2120 = vunpack.c.l.b16 %v2112
        %v2121 = vpack.c.b16 %v2118, %v2117
        %v2122 = vpack.c.b16 %v2120, %v2119
        %2125 = vmatprep.subr.bf16.mxu0 0
        %2126 = vmatpush1.bf16.msra.mxu0 %v2121
        %2127 = vmatprep.subr.bf16.mxu0 0
        %2128 = vmatpush1.bf16.msra.mxu0 %v2122
        %2129 = vmatprep.subr.bf16.mxu0 0
        %2130 = vmatpush1.bf16.msra.mxu0 0
        %2131 = vmatprep.subr.bf16.mxu0 0
        %2132 = vmatpush1.bf16.msra.mxu0 0
        %2133 = vmatprep.subr.bf16.mxu0 0
        %2134 = vmatpush1.bf16.msra.mxu0 0
        %2135 = vmatprep.subr.bf16.mxu0 0
        %2136 = vmatpush1.bf16.msra.mxu0 0
        %2137 = vmatprep.subr.bf16.mxu0 0
        %2138 = vmatpush1.bf16.msra.mxu0 0
        %2139 = vmatprep.subr.bf16.mxu0 0
        %2140 = vmatpush1.bf16.msra.mxu0 0
        %2141 = vmatprep.subr.bf16.mxu0 0
        %2142 = vmatpush1.bf16.msra.mxu0 0
        %2143 = vmatprep.subr.bf16.mxu0 0
        %2144 = vmatpush1.bf16.msra.mxu0 0
        %2145 = vmatprep.subr.bf16.mxu0 0
        %2146 = vmatpush1.bf16.msra.mxu0 0
        %2147 = vmatprep.subr.bf16.mxu0 0
        %2148 = vmatpush1.bf16.msra.mxu0 0
        %2149 = vmatprep.subr.bf16.mxu0 0
        %2150 = vmatpush1.bf16.msra.mxu0 0
        %2151 = vmatprep.subr.bf16.mxu0 0
        %2152 = vmatpush1.bf16.msra.mxu0 0
        %2153 = vmatprep.subr.bf16.mxu0 0
        %2154 = vmatpush1.bf16.msra.mxu0 0
        %2155 = vmatprep.subr.bf16.mxu0 0
        %2156 = vmatpush1.bf16.msra.mxu0 0
        %2157 = vmatprep.mubr.bf16.mxu0 0
        %2158 = vmatmul.mubr.bf16.gmra.mrb[0].mxu0 %v2009
        %v2159 = vpop.f32.mrb[0].mxu0
        %v2160 = vadd.f32 0.0, %v2159
        %v2161 = vpop.f32.mrb[0].mxu0
        %v2162 = vpop.f32.mrb[0].mxu0
        %v2163 = vpop.f32.mrb[0].mxu0
        %2164 = vdwg.mxu0
        %s2165 = scalar_lea.vmem %s3, 240
        %v2166 = vld [vmem:[%s2165] sm:$0xf]
        %v2167 = vld [vmem:[%s2165 + $0x4] sm:$0xf]
        %v2168 = vld [vmem:[%s2165 + $0x8] sm:$0xf]
        %v2169 = vld [vmem:[%s2165 + $0xc] sm:$0xf]
        %v2174 = vunpack.c.l.b16 %v2166
        %v2175 = vunpack.c.l.b16 %v2167
        %v2176 = vunpack.c.l.b16 %v2168
        %v2177 = vunpack.c.l.b16 %v2169
        %v2178 = vpack.c.b16 %v2175, %v2174
        %v2179 = vpack.c.b16 %v2177, %v2176
        %2182 = vmatprep.subr.bf16.mxu0 0
        %2183 = vmatpush1.bf16.msra.mxu0 %v2178
        %2184 = vmatprep.subr.bf16.mxu0 0
        %2185 = vmatpush1.bf16.msra.mxu0 %v2179
        %2186 = vmatprep.subr.bf16.mxu0 0
        %2187 = vmatpush1.bf16.msra.mxu0 0
        %2188 = vmatprep.subr.bf16.mxu0 0
        %2189 = vmatpush1.bf16.msra.mxu0 0
        %2190 = vmatprep.subr.bf16.mxu0 0
        %2191 = vmatpush1.bf16.msra.mxu0 0
        %2192 = vmatprep.subr.bf16.mxu0 0
        %2193 = vmatpush1.bf16.msra.mxu0 0
        %2194 = vmatprep.subr.bf16.mxu0 0
        %2195 = vmatpush1.bf16.msra.mxu0 0
        %2196 = vmatprep.subr.bf16.mxu0 0
        %2197 = vmatpush1.bf16.msra.mxu0 0
        %2198 = vmatprep.subr.bf16.mxu0 0
        %2199 = vmatpush1.bf16.msra.mxu0 0
        %2200 = vmatprep.subr.bf16.mxu0 0
        %2201 = vmatpush1.bf16.msra.mxu0 0
        %2202 = vmatprep.subr.bf16.mxu0 0
        %2203 = vmatpush1.bf16.msra.mxu0 0
        %2204 = vmatprep.subr.bf16.mxu0 0
        %2205 = vmatpush1.bf16.msra.mxu0 0
        %2206 = vmatprep.subr.bf16.mxu0 0
        %2207 = vmatpush1.bf16.msra.mxu0 0
        %2208 = vmatprep.subr.bf16.mxu0 0
        %2209 = vmatpush1.bf16.msra.mxu0 0
        %2210 = vmatprep.subr.bf16.mxu0 0
        %2211 = vmatpush1.bf16.msra.mxu0 0
        %2212 = vmatprep.subr.bf16.mxu0 0
        %2213 = vmatpush1.bf16.msra.mxu0 0
        %2214 = vmatprep.mubr.bf16.mxu0 0
        %2215 = vmatmul.mubr.bf16.gmra.mrb[0].mxu0 %v2009
        %v2216 = vpop.f32.mrb[0].mxu0
        %v2217 = vadd.f32 0.0, %v2216
        %v2218 = vpop.f32.mrb[0].mxu0
        %v2219 = vpop.f32.mrb[0].mxu0
        %v2220 = vpop.f32.mrb[0].mxu0
        %2221 = vdwg.mxu0
        %v2222 = vpack.c.bf16 %v2046, %v2046
        %v2223 = vpack.c.bf16 %v2103, %v2103
        %v2224 = vpack.c.bf16 %v2160, %v2160
        %v2225 = vpack.c.bf16 %v2217, %v2217
        %s2226 = scalar_lea.vmem %s3, 256
        %v2227 = vld [vmem:[%s2226] sm:$0xf]
        %v2228 = vld [vmem:[%s2226 + $0x4] sm:$0xf]
        %v2229 = vld [vmem:[%s2226 + $0x8] sm:$0xf]
        %v2230 = vld [vmem:[%s2226 + $0xc] sm:$0xf]
        %v2235 = vunpack.c.l.b16 %v2227
        %v2236 = vunpack.c.l.b16 %v2228
        %v2237 = vunpack.c.l.b16 %v2229
        %v2238 = vunpack.c.l.b16 %v2230
        %v2239 = vpack.c.b16 %v2236, %v2235
        %v2240 = vpack.c.b16 %v2238, %v2237
        %2243 = vmatprep.subr.bf16.mxu0 0
        %2244 = vmatpush1.bf16.msra.mxu0 %v2239
        %2245 = vmatprep.subr.bf16.mxu0 0
        %2246 = vmatpush1.bf16.msra.mxu0 %v2240
        %2247 = vmatprep.subr.bf16.mxu0 0
        %2248 = vmatpush1.bf16.msra.mxu0 0
        %2249 = vmatprep.subr.bf16.mxu0 0
        %2250 = vmatpush1.bf16.msra.mxu0 0
        %2251 = vmatprep.subr.bf16.mxu0 0
        %2252 = vmatpush1.bf16.msra.mxu0 0
        %2253 = vmatprep.subr.bf16.mxu0 0
        %2254 = vmatpush1.bf16.msra.mxu0 0
        %2255 = vmatprep.subr.bf16.mxu0 0
        %2256 = vmatpush1.bf16.msra.mxu0 0
        %2257 = vmatprep.subr.bf16.mxu0 0
        %2258 = vmatpush1.bf16.msra.mxu0 0
        %2259 = vmatprep.subr.bf16.mxu0 0
        %2260 = vmatpush1.bf16.msra.mxu0 0
        %2261 = vmatprep.subr.bf16.mxu0 0
        %2262 = vmatpush1.bf16.msra.mxu0 0
        %2263 = vmatprep.subr.bf16.mxu0 0
        %2264 = vmatpush1.bf16.msra.mxu0 0
        %2265 = vmatprep.subr.bf16.mxu0 0
        %2266 = vmatpush1.bf16.msra.mxu0 0
        %2267 = vmatprep.subr.bf16.mxu0 0
        %2268 = vmatpush1.bf16.msra.mxu0 0
        %2269 = vmatprep.subr.bf16.mxu0 0
        %2270 = vmatpush1.bf16.msra.mxu0 0
        %2271 = vmatprep.subr.bf16.mxu0 0
        %2272 = vmatpush1.bf16.msra.mxu0 0
        %2273 = vmatprep.subr.bf16.mxu0 0
        %2274 = vmatpush1.bf16.msra.mxu0 0
        %2275 = vmatprep.mubr.bf16.mxu0 0
        %2276 = vmatmul.mubr.bf16.gmra.mrb[0].mxu0 %v2009
        %v2277 = vpop.f32.mrb[0].mxu0
        %v2278 = vadd.f32 0.0, %v2277
        %v2279 = vpop.f32.mrb[0].mxu0
        %v2280 = vpop.f32.mrb[0].mxu0
        %v2281 = vpop.f32.mrb[0].mxu0
        %2282 = vdwg.mxu0
        %s2283 = scalar_lea.vmem %s3, 272
        %v2284 = vld [vmem:[%s2283] sm:$0xf]
        %v2285 = vld [vmem:[%s2283 + $0x4] sm:$0xf]
        %v2286 = vld [vmem:[%s2283 + $0x8] sm:$0xf]
        %v2287 = vld [vmem:[%s2283 + $0xc] sm:$0xf]
        %v2292 = vunpack.c.l.b16 %v2284
        %v2293 = vunpack.c.l.b16 %v2285
        %v2294 = vunpack.c.l.b16 %v2286
        %v2295 = vunpack.c.l.b16 %v2287
        %v2296 = vpack.c.b16 %v2293, %v2292
        %v2297 = vpack.c.b16 %v2295, %v2294
        %2300 = vmatprep.subr.bf16.mxu0 0
        %2301 = vmatpush1.bf16.msra.mxu0 %v2296
        %2302 = vmatprep.subr.bf16.mxu0 0
        %2303 = vmatpush1.bf16.msra.mxu0 %v2297
        %2304 = vmatprep.subr.bf16.mxu0 0
        %2305 = vmatpush1.bf16.msra.mxu0 0
        %2306 = vmatprep.subr.bf16.mxu0 0
        %2307 = vmatpush1.bf16.msra.mxu0 0
        %2308 = vmatprep.subr.bf16.mxu0 0
        %2309 = vmatpush1.bf16.msra.mxu0 0
        %2310 = vmatprep.subr.bf16.mxu0 0
        %2311 = vmatpush1.bf16.msra.mxu0 0
        %2312 = vmatprep.subr.bf16.mxu0 0
        %2313 = vmatpush1.bf16.msra.mxu0 0
        %2314 = vmatprep.subr.bf16.mxu0 0
        %2315 = vmatpush1.bf16.msra.mxu0 0
        %2316 = vmatprep.subr.bf16.mxu0 0
        %2317 = vmatpush1.bf16.msra.mxu0 0
        %2318 = vmatprep.subr.bf16.mxu0 0
        %2319 = vmatpush1.bf16.msra.mxu0 0
        %2320 = vmatprep.subr.bf16.mxu0 0
        %2321 = vmatpush1.bf16.msra.mxu0 0
        %2322 = vmatprep.subr.bf16.mxu0 0
        %2323 = vmatpush1.bf16.msra.mxu0 0
        %2324 = vmatprep.subr.bf16.mxu0 0
        %2325 = vmatpush1.bf16.msra.mxu0 0
        %2326 = vmatprep.subr.bf16.mxu0 0
        %2327 = vmatpush1.bf16.msra.mxu0 0
        %2328 = vmatprep.subr.bf16.mxu0 0
        %2329 = vmatpush1.bf16.msra.mxu0 0
        %2330 = vmatprep.subr.bf16.mxu0 0
        %2331 = vmatpush1.bf16.msra.mxu0 0
        %2332 = vmatprep.mubr.bf16.mxu0 0
        %2333 = vmatmul.mubr.bf16.gmra.mrb[0].mxu0 %v2009
        %v2334 = vpop.f32.mrb[0].mxu0
        %v2335 = vadd.f32 0.0, %v2334
        %v2336 = vpop.f32.mrb[0].mxu0
        %v2337 = vpop.f32.mrb[0].mxu0
        %v2338 = vpop.f32.mrb[0].mxu0
        %2339 = vdwg.mxu0
        %s2340 = scalar_lea.vmem %s3, 288
        %v2341 = vld [vmem:[%s2340] sm:$0xf]
        %v2342 = vld [vmem:[%s2340 + $0x4] sm:$0xf]
        %v2343 = vld [vmem:[%s2340 + $0x8] sm:$0xf]
        %v2344 = vld [vmem:[%s2340 + $0xc] sm:$0xf]
        %v2349 = vunpack.c.l.b16 %v2341
        %v2350 = vunpack.c.l.b16 %v2342
        %v2351 = vunpack.c.l.b16 %v2343
        %v2352 = vunpack.c.l.b16 %v2344
        %v2353 = vpack.c.b16 %v2350, %v2349
        %v2354 = vpack.c.b16 %v2352, %v2351
        %2357 = vmatprep.subr.bf16.mxu0 0
        %2358 = vmatpush1.bf16.msra.mxu0 %v2353
        %2359 = vmatprep.subr.bf16.mxu0 0
        %2360 = vmatpush1.bf16.msra.mxu0 %v2354
        %2361 = vmatprep.subr.bf16.mxu0 0
        %2362 = vmatpush1.bf16.msra.mxu0 0
        %2363 = vmatprep.subr.bf16.mxu0 0
        %2364 = vmatpush1.bf16.msra.mxu0 0
        %2365 = vmatprep.subr.bf16.mxu0 0
        %2366 = vmatpush1.bf16.msra.mxu0 0
        %2367 = vmatprep.subr.bf16.mxu0 0
        %2368 = vmatpush1.bf16.msra.mxu0 0
        %2369 = vmatprep.subr.bf16.mxu0 0
        %2370 = vmatpush1.bf16.msra.mxu0 0
        %2371 = vmatprep.subr.bf16.mxu0 0
        %2372 = vmatpush1.bf16.msra.mxu0 0
        %2373 = vmatprep.subr.bf16.mxu0 0
        %2374 = vmatpush1.bf16.msra.mxu0 0
        %2375 = vmatprep.subr.bf16.mxu0 0
        %2376 = vmatpush1.bf16.msra.mxu0 0
        %2377 = vmatprep.subr.bf16.mxu0 0
        %2378 = vmatpush1.bf16.msra.mxu0 0
        %2379 = vmatprep.subr.bf16.mxu0 0
        %2380 = vmatpush1.bf16.msra.mxu0 0
        %2381 = vmatprep.subr.bf16.mxu0 0
        %2382 = vmatpush1.bf16.msra.mxu0 0
        %2383 = vmatprep.subr.bf16.mxu0 0
        %2384 = vmatpush1.bf16.msra.mxu0 0
        %2385 = vmatprep.subr.bf16.mxu0 0
        %2386 = vmatpush1.bf16.msra.mxu0 0
        %2387 = vmatprep.subr.bf16.mxu0 0
        %2388 = vmatpush1.bf16.msra.mxu0 0
        %2389 = vmatprep.mubr.bf16.mxu0 0
        %2390 = vmatmul.mubr.bf16.gmra.mrb[0].mxu0 %v2009
        %v2391 = vpop.f32.mrb[0].mxu0
        %v2392 = vadd.f32 0.0, %v2391
        %v2393 = vpop.f32.mrb[0].mxu0
        %v2394 = vpop.f32.mrb[0].mxu0
        %v2395 = vpop.f32.mrb[0].mxu0
        %2396 = vdwg.mxu0
        %s2397 = scalar_lea.vmem %s3, 304
        %v2398 = vld [vmem:[%s2397] sm:$0xf]
        %v2399 = vld [vmem:[%s2397 + $0x4] sm:$0xf]
        %v2400 = vld [vmem:[%s2397 + $0x8] sm:$0xf]
        %v2401 = vld [vmem:[%s2397 + $0xc] sm:$0xf]
        %v2406 = vunpack.c.l.b16 %v2398
        %v2407 = vunpack.c.l.b16 %v2399
        %v2408 = vunpack.c.l.b16 %v2400
        %v2409 = vunpack.c.l.b16 %v2401
        %v2410 = vpack.c.b16 %v2407, %v2406
        %v2411 = vpack.c.b16 %v2409, %v2408
        %2414 = vmatprep.subr.bf16.mxu0 0
        %2415 = vmatpush1.bf16.msra.mxu0 %v2410
        %2416 = vmatprep.subr.bf16.mxu0 0
        %2417 = vmatpush1.bf16.msra.mxu0 %v2411
        %2418 = vmatprep.subr.bf16.mxu0 0
        %2419 = vmatpush1.bf16.msra.mxu0 0
        %2420 = vmatprep.subr.bf16.mxu0 0
        %2421 = vmatpush1.bf16.msra.mxu0 0
        %2422 = vmatprep.subr.bf16.mxu0 0
        %2423 = vmatpush1.bf16.msra.mxu0 0
        %2424 = vmatprep.subr.bf16.mxu0 0
        %2425 = vmatpush1.bf16.msra.mxu0 0
        %2426 = vmatprep.subr.bf16.mxu0 0
        %2427 = vmatpush1.bf16.msra.mxu0 0
        %2428 = vmatprep.subr.bf16.mxu0 0
        %2429 = vmatpush1.bf16.msra.mxu0 0
        %2430 = vmatprep.subr.bf16.mxu0 0
        %2431 = vmatpush1.bf16.msra.mxu0 0
        %2432 = vmatprep.subr.bf16.mxu0 0
        %2433 = vmatpush1.bf16.msra.mxu0 0
        %2434 = vmatprep.subr.bf16.mxu0 0
        %2435 = vmatpush1.bf16.msra.mxu0 0
        %2436 = vmatprep.subr.bf16.mxu0 0
        %2437 = vmatpush1.bf16.msra.mxu0 0
        %2438 = vmatprep.subr.bf16.mxu0 0
        %2439 = vmatpush1.bf16.msra.mxu0 0
        %2440 = vmatprep.subr.bf16.mxu0 0
        %2441 = vmatpush1.bf16.msra.mxu0 0
        %2442 = vmatprep.subr.bf16.mxu0 0
        %2443 = vmatpush1.bf16.msra.mxu0 0
        %2444 = vmatprep.subr.bf16.mxu0 0
        %2445 = vmatpush1.bf16.msra.mxu0 0
        %2446 = vmatprep.mubr.bf16.mxu0 0
        %2447 = vmatmul.mubr.bf16.gmra.mrb[0].mxu0 %v2009
        %v2448 = vpop.f32.mrb[0].mxu0
        %v2449 = vadd.f32 0.0, %v2448
        %v2450 = vpop.f32.mrb[0].mxu0
        %v2451 = vpop.f32.mrb[0].mxu0
        %v2452 = vpop.f32.mrb[0].mxu0
        %2453 = vdwg.mxu0
        %v2454 = vpack.c.bf16 %v2278, %v2278
        %v2455 = vpack.c.bf16 %v2335, %v2335
        %v2456 = vpack.c.bf16 %v2392, %v2392
        %v2457 = vpack.c.bf16 %v2449, %v2449
        %s2458 = scalar_lea.vmem %s3, 320
        %v2459 = vld [vmem:[%s2458] sm:$0xf]
        %v2460 = vld [vmem:[%s2458 + $0x4] sm:$0xf]
        %v2461 = vld [vmem:[%s2458 + $0x8] sm:$0xf]
        %v2462 = vld [vmem:[%s2458 + $0xc] sm:$0xf]
        %v2467 = vunpack.c.l.b16 %v2459
        %v2468 = vunpack.c.l.b16 %v2460
        %v2469 = vunpack.c.l.b16 %v2461
        %v2470 = vunpack.c.l.b16 %v2462
        %v2471 = vpack.c.b16 %v2468, %v2467
        %v2472 = vpack.c.b16 %v2470, %v2469
        %2475 = vmatprep.subr.bf16.mxu0 0
        %2476 = vmatpush1.bf16.msra.mxu0 %v2471
        %2477 = vmatprep.subr.bf16.mxu0 0
        %2478 = vmatpush1.bf16.msra.mxu0 %v2472
        %2479 = vmatprep.subr.bf16.mxu0 0
        %2480 = vmatpush1.bf16.msra.mxu0 0
        %2481 = vmatprep.subr.bf16.mxu0 0
        %2482 = vmatpush1.bf16.msra.mxu0 0
        %2483 = vmatprep.subr.bf16.mxu0 0
        %2484 = vmatpush1.bf16.msra.mxu0 0
        %2485 = vmatprep.subr.bf16.mxu0 0
        %2486 = vmatpush1.bf16.msra.mxu0 0
        %2487 = vmatprep.subr.bf16.mxu0 0
        %2488 = vmatpush1.bf16.msra.mxu0 0
        %2489 = vmatprep.subr.bf16.mxu0 0
        %2490 = vmatpush1.bf16.msra.mxu0 0
        %2491 = vmatprep.subr.bf16.mxu0 0
        %2492 = vmatpush1.bf16.msra.mxu0 0
        %2493 = vmatprep.subr.bf16.mxu0 0
        %2494 = vmatpush1.bf16.msra.mxu0 0
        %2495 = vmatprep.subr.bf16.mxu0 0
        %2496 = vmatpush1.bf16.msra.mxu0 0
        %2497 = vmatprep.subr.bf16.mxu0 0
        %2498 = vmatpush1.bf16.msra.mxu0 0
        %2499 = vmatprep.subr.bf16.mxu0 0
        %2500 = vmatpush1.bf16.msra.mxu0 0
        %2501 = vmatprep.subr.bf16.mxu0 0
        %2502 = vmatpush1.bf16.msra.mxu0 0
        %2503 = vmatprep.subr.bf16.mxu0 0
        %2504 = vmatpush1.bf16.msra.mxu0 0
        %2505 = vmatprep.subr.bf16.mxu0 0
        %2506 = vmatpush1.bf16.msra.mxu0 0
        %2507 = vmatprep.mubr.bf16.mxu0 0
        %2508 = vmatmul.mubr.bf16.gmra.mrb[0].mxu0 %v2009
        %v2509 = vpop.f32.mrb[0].mxu0
        %v2510 = vadd.f32 0.0, %v2509
        %v2511 = vpop.f32.mrb[0].mxu0
        %v2512 = vpop.f32.mrb[0].mxu0
        %v2513 = vpop.f32.mrb[0].mxu0
        %2514 = vdwg.mxu0
        %s2515 = scalar_lea.vmem %s3, 336
        %v2516 = vld [vmem:[%s2515] sm:$0xf]
        %v2517 = vld [vmem:[%s2515 + $0x4] sm:$0xf]
        %v2518 = vld [vmem:[%s2515 + $0x8] sm:$0xf]
        %v2519 = vld [vmem:[%s2515 + $0xc] sm:$0xf]
        %v2524 = vunpack.c.l.b16 %v2516
        %v2525 = vunpack.c.l.b16 %v2517
        %v2526 = vunpack.c.l.b16 %v2518
        %v2527 = vunpack.c.l.b16 %v2519
        %v2528 = vpack.c.b16 %v2525, %v2524
        %v2529 = vpack.c.b16 %v2527, %v2526
        %2532 = vmatprep.subr.bf16.mxu0 0
        %2533 = vmatpush1.bf16.msra.mxu0 %v2528
        %2534 = vmatprep.subr.bf16.mxu0 0
        %2535 = vmatpush1.bf16.msra.mxu0 %v2529
        %2536 = vmatprep.subr.bf16.mxu0 0
        %2537 = vmatpush1.bf16.msra.mxu0 0
        %2538 = vmatprep.subr.bf16.mxu0 0
        %2539 = vmatpush1.bf16.msra.mxu0 0
        %2540 = vmatprep.subr.bf16.mxu0 0
        %2541 = vmatpush1.bf16.msra.mxu0 0
        %2542 = vmatprep.subr.bf16.mxu0 0
        %2543 = vmatpush1.bf16.msra.mxu0 0
        %2544 = vmatprep.subr.bf16.mxu0 0
        %2545 = vmatpush1.bf16.msra.mxu0 0
        %2546 = vmatprep.subr.bf16.mxu0 0
        %2547 = vmatpush1.bf16.msra.mxu0 0
        %2548 = vmatprep.subr.bf16.mxu0 0
        %2549 = vmatpush1.bf16.msra.mxu0 0
        %2550 = vmatprep.subr.bf16.mxu0 0
        %2551 = vmatpush1.bf16.msra.mxu0 0
        %2552 = vmatprep.subr.bf16.mxu0 0
        %2553 = vmatpush1.bf16.msra.mxu0 0
        %2554 = vmatprep.subr.bf16.mxu0 0
        %2555 = vmatpush1.bf16.msra.mxu0 0
        %2556 = vmatprep.subr.bf16.mxu0 0
        %2557 = vmatpush1.bf16.msra.mxu0 0
        %2558 = vmatprep.subr.bf16.mxu0 0
        %2559 = vmatpush1.bf16.msra.mxu0 0
        %2560 = vmatprep.subr.bf16.mxu0 0
        %2561 = vmatpush1.bf16.msra.mxu0 0
        %2562 = vmatprep.subr.bf16.mxu0 0
        %2563 = vmatpush1.bf16.msra.mxu0 0
        %2564 = vmatprep.mubr.bf16.mxu0 0
        %2565 = vmatmul.mubr.bf16.gmra.mrb[0].mxu0 %v2009
        %v2566 = vpop.f32.mrb[0].mxu0
        %v2567 = vadd.f32 0.0, %v2566
        %v2568 = vpop.f32.mrb[0].mxu0
        %v2569 = vpop.f32.mrb[0].mxu0
        %v2570 = vpop.f32.mrb[0].mxu0
        %2571 = vdwg.mxu0
        %s2572 = scalar_lea.vmem %s3, 352
        %v2573 = vld [vmem:[%s2572] sm:$0xf]
        %v2574 = vld [vmem:[%s2572 + $0x4] sm:$0xf]
        %v2575 = vld [vmem:[%s2572 + $0x8] sm:$0xf]
        %v2576 = vld [vmem:[%s2572 + $0xc] sm:$0xf]
        %v2581 = vunpack.c.l.b16 %v2573
        %v2582 = vunpack.c.l.b16 %v2574
        %v2583 = vunpack.c.l.b16 %v2575
        %v2584 = vunpack.c.l.b16 %v2576
        %v2585 = vpack.c.b16 %v2582, %v2581
        %v2586 = vpack.c.b16 %v2584, %v2583
        %2589 = vmatprep.subr.bf16.mxu0 0
        %2590 = vmatpush1.bf16.msra.mxu0 %v2585
        %2591 = vmatprep.subr.bf16.mxu0 0
        %2592 = vmatpush1.bf16.msra.mxu0 %v2586
        %2593 = vmatprep.subr.bf16.mxu0 0
        %2594 = vmatpush1.bf16.msra.mxu0 0
        %2595 = vmatprep.subr.bf16.mxu0 0
        %2596 = vmatpush1.bf16.msra.mxu0 0
        %2597 = vmatprep.subr.bf16.mxu0 0
        %2598 = vmatpush1.bf16.msra.mxu0 0
        %2599 = vmatprep.subr.bf16.mxu0 0
        %2600 = vmatpush1.bf16.msra.mxu0 0
        %2601 = vmatprep.subr.bf16.mxu0 0
        %2602 = vmatpush1.bf16.msra.mxu0 0
        %2603 = vmatprep.subr.bf16.mxu0 0
        %2604 = vmatpush1.bf16.msra.mxu0 0
        %2605 = vmatprep.subr.bf16.mxu0 0
        %2606 = vmatpush1.bf16.msra.mxu0 0
        %2607 = vmatprep.subr.bf16.mxu0 0
        %2608 = vmatpush1.bf16.msra.mxu0 0
        %2609 = vmatprep.subr.bf16.mxu0 0
        %2610 = vmatpush1.bf16.msra.mxu0 0
        %2611 = vmatprep.subr.bf16.mxu0 0
        %2612 = vmatpush1.bf16.msra.mxu0 0
        %2613 = vmatprep.subr.bf16.mxu0 0
        %2614 = vmatpush1.bf16.msra.mxu0 0
        %2615 = vmatprep.subr.bf16.mxu0 0
        %2616 = vmatpush1.bf16.msra.mxu0 0
        %2617 = vmatprep.subr.bf16.mxu0 0
        %2618 = vmatpush1.bf16.msra.mxu0 0
        %2619 = vmatprep.subr.bf16.mxu0 0
        %2620 = vmatpush1.bf16.msra.mxu0 0
        %2621 = vmatprep.mubr.bf16.mxu0 0
        %2622 = vmatmul.mubr.bf16.gmra.mrb[0].mxu0 %v2009
        %v2623 = vpop.f32.mrb[0].mxu0
        %v2624 = vadd.f32 0.0, %v2623
        %v2625 = vpop.f32.mrb[0].mxu0
        %v2626 = vpop.f32.mrb[0].mxu0
        %v2627 = vpop.f32.mrb[0].mxu0
        %2628 = vdwg.mxu0
        %s2629 = scalar_lea.vmem %s3, 368
        %v2630 = vld [vmem:[%s2629] sm:$0xf]
        %v2631 = vld [vmem:[%s2629 + $0x4] sm:$0xf]
        %v2632 = vld [vmem:[%s2629 + $0x8] sm:$0xf]
        %v2633 = vld [vmem:[%s2629 + $0xc] sm:$0xf]
        %v2638 = vunpack.c.l.b16 %v2630
        %v2639 = vunpack.c.l.b16 %v2631
        %v2640 = vunpack.c.l.b16 %v2632
        %v2641 = vunpack.c.l.b16 %v2633
        %v2642 = vpack.c.b16 %v2639, %v2638
        %v2643 = vpack.c.b16 %v2641, %v2640
        %2646 = vmatprep.subr.bf16.mxu0 0
        %2647 = vmatpush1.bf16.msra.mxu0 %v2642
        %2648 = vmatprep.subr.bf16.mxu0 0
        %2649 = vmatpush1.bf16.msra.mxu0 %v2643
        %2650 = vmatprep.subr.bf16.mxu0 0
        %2651 = vmatpush1.bf16.msra.mxu0 0
        %2652 = vmatprep.subr.bf16.mxu0 0
        %2653 = vmatpush1.bf16.msra.mxu0 0
        %2654 = vmatprep.subr.bf16.mxu0 0
        %2655 = vmatpush1.bf16.msra.mxu0 0
        %2656 = vmatprep.subr.bf16.mxu0 0
        %2657 = vmatpush1.bf16.msra.mxu0 0
        %2658 = vmatprep.subr.bf16.mxu0 0
        %2659 = vmatpush1.bf16.msra.mxu0 0
        %2660 = vmatprep.subr.bf16.mxu0 0
        %2661 = vmatpush1.bf16.msra.mxu0 0
        %2662 = vmatprep.subr.bf16.mxu0 0
        %2663 = vmatpush1.bf16.msra.mxu0 0
        %2664 = vmatprep.subr.bf16.mxu0 0
        %2665 = vmatpush1.bf16.msra.mxu0 0
        %2666 = vmatprep.subr.bf16.mxu0 0
        %2667 = vmatpush1.bf16.msra.mxu0 0
        %2668 = vmatprep.subr.bf16.mxu0 0
        %2669 = vmatpush1.bf16.msra.mxu0 0
        %2670 = vmatprep.subr.bf16.mxu0 0
        %2671 = vmatpush1.bf16.msra.mxu0 0
        %2672 = vmatprep.subr.bf16.mxu0 0
        %2673 = vmatpush1.bf16.msra.mxu0 0
        %2674 = vmatprep.subr.bf16.mxu0 0
        %2675 = vmatpush1.bf16.msra.mxu0 0
        %2676 = vmatprep.subr.bf16.mxu0 0
        %2677 = vmatpush1.bf16.msra.mxu0 0
        %2678 = vmatprep.mubr.bf16.mxu0 0
        %2679 = vmatmul.mubr.bf16.gmra.mrb[0].mxu0 %v2009
        %v2680 = vpop.f32.mrb[0].mxu0
        %v2681 = vadd.f32 0.0, %v2680
        %v2682 = vpop.f32.mrb[0].mxu0
        %v2683 = vpop.f32.mrb[0].mxu0
        %v2684 = vpop.f32.mrb[0].mxu0
        %2685 = vdwg.mxu0
        %v2686 = vpack.c.bf16 %v2510, %v2510
        %v2687 = vpack.c.bf16 %v2567, %v2567
        %v2688 = vpack.c.bf16 %v2624, %v2624
        %v2689 = vpack.c.bf16 %v2681, %v2681
        %v2691 = vsel %vm1133, %v2222, 0
        %v2694 = vsel %vm1133, %v2454, 0
        %2696 = vmatprep.subr.bf16.mxu0 0
        %2697 = vmatpush1.bf16.xpose.msra.mxu0 %v2694
        %2698 = vmatprep.subr.bf16.mxu0 0
        %2699 = vmatpush1.bf16.xpose.msra.mxu0 0
        %2700 = vmatprep.subr.bf16.mxu0 0
        %2701 = vmatpush1.bf16.xpose.msra.mxu0 0
        %2702 = vmatprep.subr.bf16.mxu0 0
        %2703 = vmatpush1.bf16.xpose.msra.mxu0 0
        %2704 = vmatprep.subr.bf16.mxu0 0
        %2705 = vmatpush1.bf16.xpose.msra.mxu0 0
        %2706 = vmatprep.subr.bf16.mxu0 0
        %2707 = vmatpush1.bf16.xpose.msra.mxu0 0
        %2708 = vmatprep.subr.bf16.mxu0 0
        %2709 = vmatpush1.bf16.xpose.msra.mxu0 0
        %2710 = vmatprep.subr.bf16.mxu0 0
        %2711 = vmatpush1.bf16.xpose.msra.mxu0 0
        %2712 = vmatprep.subr.bf16.mxu0 0
        %2713 = vmatpush1.bf16.xpose.msra.mxu0 0
        %2714 = vmatprep.subr.bf16.mxu0 0
        %2715 = vmatpush1.bf16.xpose.msra.mxu0 0
        %2716 = vmatprep.subr.bf16.mxu0 0
        %2717 = vmatpush1.bf16.xpose.msra.mxu0 0
        %2718 = vmatprep.subr.bf16.mxu0 0
        %2719 = vmatpush1.bf16.xpose.msra.mxu0 0
        %2720 = vmatprep.subr.bf16.mxu0 0
        %2721 = vmatpush1.bf16.xpose.msra.mxu0 0
        %2722 = vmatprep.subr.bf16.mxu0 0
        %2723 = vmatpush1.bf16.xpose.msra.mxu0 0
        %2724 = vmatprep.subr.bf16.mxu0 0
        %2725 = vmatpush1.bf16.xpose.msra.mxu0 0
        %2726 = vmatprep.subr.bf16.mxu0 0
        %2727 = vmatpush1.bf16.xpose.msra.mxu0 0
        %2728 = vmatprep.mubr.bf16.mxu0 0
        %2729 = vmatmul.mubr.bf16.gmra.mrb[0].mxu0 %v2691
        %v2730 = vpop.f32.mrb[0].mxu0
        %v2731 = vadd.f32 %v407, %v2730
        %v2732 = vpop.f32.mrb[0].mxu0
        %v2733 = vpop.f32.mrb[0].mxu0
        %v2734 = vpop.f32.mrb[0].mxu0
        %2735 = vdwg.mxu0
        %v2737 = vsel %vm1133, %v2223, 0
        %v2740 = vsel %vm1133, %v2455, 0
        %2742 = vmatprep.subr.bf16.mxu0 0
        %2743 = vmatpush1.bf16.xpose.msra.mxu0 %v2740
        %2744 = vmatprep.subr.bf16.mxu0 0
        %2745 = vmatpush1.bf16.xpose.msra.mxu0 0
        %2746 = vmatprep.subr.bf16.mxu0 0
        %2747 = vmatpush1.bf16.xpose.msra.mxu0 0
        %2748 = vmatprep.subr.bf16.mxu0 0
        %2749 = vmatpush1.bf16.xpose.msra.mxu0 0
        %2750 = vmatprep.subr.bf16.mxu0 0
        %2751 = vmatpush1.bf16.xpose.msra.mxu0 0
        %2752 = vmatprep.subr.bf16.mxu0 0
        %2753 = vmatpush1.bf16.xpose.msra.mxu0 0
        %2754 = vmatprep.subr.bf16.mxu0 0
        %2755 = vmatpush1.bf16.xpose.msra.mxu0 0
        %2756 = vmatprep.subr.bf16.mxu0 0
        %2757 = vmatpush1.bf16.xpose.msra.mxu0 0
        %2758 = vmatprep.subr.bf16.mxu0 0
        %2759 = vmatpush1.bf16.xpose.msra.mxu0 0
        %2760 = vmatprep.subr.bf16.mxu0 0
        %2761 = vmatpush1.bf16.xpose.msra.mxu0 0
        %2762 = vmatprep.subr.bf16.mxu0 0
        %2763 = vmatpush1.bf16.xpose.msra.mxu0 0
        %2764 = vmatprep.subr.bf16.mxu0 0
        %2765 = vmatpush1.bf16.xpose.msra.mxu0 0
        %2766 = vmatprep.subr.bf16.mxu0 0
        %2767 = vmatpush1.bf16.xpose.msra.mxu0 0
        %2768 = vmatprep.subr.bf16.mxu0 0
        %2769 = vmatpush1.bf16.xpose.msra.mxu0 0
        %2770 = vmatprep.subr.bf16.mxu0 0
        %2771 = vmatpush1.bf16.xpose.msra.mxu0 0
        %2772 = vmatprep.subr.bf16.mxu0 0
        %2773 = vmatpush1.bf16.xpose.msra.mxu0 0
        %2774 = vmatprep.mubr.bf16.mxu0 0
        %2775 = vmatmul.mubr.bf16.gmra.mrb[0].mxu0 %v2737
        %v2776 = vpop.f32.mrb[0].mxu0
        %v2777 = vadd.f32 %v407, %v2776
        %v2778 = vpop.f32.mrb[0].mxu0
        %v2779 = vpop.f32.mrb[0].mxu0
        %v2780 = vpop.f32.mrb[0].mxu0
        %2781 = vdwg.mxu0
        %v2783 = vsel %vm1133, %v2224, 0
        %v2786 = vsel %vm1133, %v2456, 0
        %2788 = vmatprep.subr.bf16.mxu0 0
        %2789 = vmatpush1.bf16.xpose.msra.mxu0 %v2786
        %2790 = vmatprep.subr.bf16.mxu0 0
        %2791 = vmatpush1.bf16.xpose.msra.mxu0 0
        %2792 = vmatprep.subr.bf16.mxu0 0
        %2793 = vmatpush1.bf16.xpose.msra.mxu0 0
        %2794 = vmatprep.subr.bf16.mxu0 0
        %2795 = vmatpush1.bf16.xpose.msra.mxu0 0
        %2796 = vmatprep.subr.bf16.mxu0 0
        %2797 = vmatpush1.bf16.xpose.msra.mxu0 0
        %2798 = vmatprep.subr.bf16.mxu0 0
        %2799 = vmatpush1.bf16.xpose.msra.mxu0 0
        %2800 = vmatprep.subr.bf16.mxu0 0
        %2801 = vmatpush1.bf16.xpose.msra.mxu0 0
        %2802 = vmatprep.subr.bf16.mxu0 0
        %2803 = vmatpush1.bf16.xpose.msra.mxu0 0
        %2804 = vmatprep.subr.bf16.mxu0 0
        %2805 = vmatpush1.bf16.xpose.msra.mxu0 0
        %2806 = vmatprep.subr.bf16.mxu0 0
        %2807 = vmatpush1.bf16.xpose.msra.mxu0 0
        %2808 = vmatprep.subr.bf16.mxu0 0
        %2809 = vmatpush1.bf16.xpose.msra.mxu0 0
        %2810 = vmatprep.subr.bf16.mxu0 0
        %2811 = vmatpush1.bf16.xpose.msra.mxu0 0
        %2812 = vmatprep.subr.bf16.mxu0 0
        %2813 = vmatpush1.bf16.xpose.msra.mxu0 0
        %2814 = vmatprep.subr.bf16.mxu0 0
        %2815 = vmatpush1.bf16.xpose.msra.mxu0 0
        %2816 = vmatprep.subr.bf16.mxu0 0
        %2817 = vmatpush1.bf16.xpose.msra.mxu0 0
        %2818 = vmatprep.subr.bf16.mxu0 0
        %2819 = vmatpush1.bf16.xpose.msra.mxu0 0
        %2820 = vmatprep.mubr.bf16.mxu0 0
        %2821 = vmatmul.mubr.bf16.gmra.mrb[0].mxu0 %v2783
        %v2822 = vpop.f32.mrb[0].mxu0
        %v2823 = vadd.f32 %v407, %v2822
        %v2824 = vpop.f32.mrb[0].mxu0
        %v2825 = vpop.f32.mrb[0].mxu0
        %v2826 = vpop.f32.mrb[0].mxu0
        %2827 = vdwg.mxu0
        %v2829 = vsel %vm1133, %v2225, 0
        %v2832 = vsel %vm1133, %v2457, 0
        %2834 = vmatprep.subr.bf16.mxu0 0
        %2835 = vmatpush1.bf16.xpose.msra.mxu0 %v2832
        %2836 = vmatprep.subr.bf16.mxu0 0
        %2837 = vmatpush1.bf16.xpose.msra.mxu0 0
        %2838 = vmatprep.subr.bf16.mxu0 0
        %2839 = vmatpush1.bf16.xpose.msra.mxu0 0
        %2840 = vmatprep.subr.bf16.mxu0 0
        %2841 = vmatpush1.bf16.xpose.msra.mxu0 0
        %2842 = vmatprep.subr.bf16.mxu0 0
        %2843 = vmatpush1.bf16.xpose.msra.mxu0 0
        %2844 = vmatprep.subr.bf16.mxu0 0
        %2845 = vmatpush1.bf16.xpose.msra.mxu0 0
        %2846 = vmatprep.subr.bf16.mxu0 0
        %2847 = vmatpush1.bf16.xpose.msra.mxu0 0
        %2848 = vmatprep.subr.bf16.mxu0 0
        %2849 = vmatpush1.bf16.xpose.msra.mxu0 0
        %2850 = vmatprep.subr.bf16.mxu0 0
        %2851 = vmatpush1.bf16.xpose.msra.mxu0 0
        %2852 = vmatprep.subr.bf16.mxu0 0
        %2853 = vmatpush1.bf16.xpose.msra.mxu0 0
        %2854 = vmatprep.subr.bf16.mxu0 0
        %2855 = vmatpush1.bf16.xpose.msra.mxu0 0
        %2856 = vmatprep.subr.bf16.mxu0 0
        %2857 = vmatpush1.bf16.xpose.msra.mxu0 0
        %2858 = vmatprep.subr.bf16.mxu0 0
        %2859 = vmatpush1.bf16.xpose.msra.mxu0 0
        %2860 = vmatprep.subr.bf16.mxu0 0
        %2861 = vmatpush1.bf16.xpose.msra.mxu0 0
        %2862 = vmatprep.subr.bf16.mxu0 0
        %2863 = vmatpush1.bf16.xpose.msra.mxu0 0
        %2864 = vmatprep.subr.bf16.mxu0 0
        %2865 = vmatpush1.bf16.xpose.msra.mxu0 0
        %2866 = vmatprep.mubr.bf16.mxu0 0
        %2867 = vmatmul.mubr.bf16.gmra.mrb[0].mxu0 %v2829
        %v2868 = vpop.f32.mrb[0].mxu0
        %v2869 = vadd.f32 %v407, %v2868
        %v2870 = vpop.f32.mrb[0].mxu0
        %v2871 = vpop.f32.mrb[0].mxu0
        %v2872 = vpop.f32.mrb[0].mxu0
        %2873 = vdwg.mxu0
        %v2874 = vsel %vm1133, %v2731, -inf
        %2875 = vmax.xlane.f32.xlu0 %v2874
        %v2876 = vpop.xlane.xlu0 %2875
        %v2877 = vsel %vm1133, %v2777, -inf
        %2878 = vmax.xlane.f32.xlu0 %v2877
        %v2879 = vpop.xlane.xlu0 %2878
        %v2880 = vsel %vm1133, %v2823, -inf
        %2881 = vmax.xlane.f32.xlu0 %v2880
        %v2882 = vpop.xlane.xlu0 %2881
        %v2883 = vsel %vm1133, %v2869, -inf
        %2884 = vmax.xlane.f32.xlu0 %v2883
        %v2885 = vpop.xlane.xlu0 %2884
        %v2886 = vsub.f32 %v2731, %v2876
        %v2887 = vsub.f32 %v2777, %v2879
        %v2888 = vsub.f32 %v2823, %v2882
        %v2889 = vsub.f32 %v2869, %v2885
        %v2890 = vmul.f32 %v2886, 1.442695
        %v2891 = vpow.pop %v2890
        %v2892 = vmul.f32 %v2887, 1.442695
        %v2893 = vpow.pop %v2892
        %v2894 = vmul.f32 %v2888, 1.442695
        %v2895 = vpow.pop %v2894
        %v2896 = vmul.f32 %v2889, 1.442695
        %v2897 = vpow.pop %v2896
        %v2898 = vsel %vm1133, %v2891, 0.0
        %2899 = vadd.xlane.f32.xlu0 %v2898
        %v2900 = vpop.xlane.xlu0 %2899
        %v2901 = vsel %vm1133, %v2893, 0.0
        %2902 = vadd.xlane.f32.xlu0 %v2901
        %v2903 = vpop.xlane.xlu0 %2902
        %v2904 = vsel %vm1133, %v2895, 0.0
        %2905 = vadd.xlane.f32.xlu0 %v2904
        %v2906 = vpop.xlane.xlu0 %2905
        %v2907 = vsel %vm1133, %v2897, 0.0
        %2908 = vadd.xlane.f32.xlu0 %v2907
        %v2909 = vpop.xlane.xlu0 %2908
        %v2910 = vrcp.pop %v2900
        %v2911 = vrcp.pop %v2903
        %v2912 = vrcp.pop %v2906
        %v2913 = vrcp.pop %v2909
        %v2914 = vmul.f32 %v2891, %v2910
        %v2915 = vmul.f32 %v2893, %v2911
        %v2916 = vmul.f32 %v2895, %v2912
        %v2917 = vmul.f32 %v2897, %v2913
        %v2918 = vpack.c.bf16 %v2914, %v2914
        %v2919 = vpack.c.bf16 %v2915, %v2915
        %v2920 = vpack.c.bf16 %v2916, %v2916
        %v2921 = vpack.c.bf16 %v2917, %v2917
        %v2923 = vsel %vm1133, %v2918, 0
        %v2926 = vsel %vm394, %v2686, 0
        %2928 = vmatprep.subr.bf16.mxu0 0
        %2929 = vmatpush1.bf16.msra.mxu0 %v2926
        %2930 = vmatprep.subr.bf16.mxu0 0
        %2931 = vmatpush1.bf16.msra.mxu0 0
        %2932 = vmatprep.subr.bf16.mxu0 0
        %2933 = vmatpush1.bf16.msra.mxu0 0
        %2934 = vmatprep.subr.bf16.mxu0 0
        %2935 = vmatpush1.bf16.msra.mxu0 0
        %2936 = vmatprep.subr.bf16.mxu0 0
        %2937 = vmatpush1.bf16.msra.mxu0 0
        %2938 = vmatprep.subr.bf16.mxu0 0
        %2939 = vmatpush1.bf16.msra.mxu0 0
        %2940 = vmatprep.subr.bf16.mxu0 0
        %2941 = vmatpush1.bf16.msra.mxu0 0
        %2942 = vmatprep.subr.bf16.mxu0 0
        %2943 = vmatpush1.bf16.msra.mxu0 0
        %2944 = vmatprep.subr.bf16.mxu0 0
        %2945 = vmatpush1.bf16.msra.mxu0 0
        %2946 = vmatprep.subr.bf16.mxu0 0
        %2947 = vmatpush1.bf16.msra.mxu0 0
        %2948 = vmatprep.subr.bf16.mxu0 0
        %2949 = vmatpush1.bf16.msra.mxu0 0
        %2950 = vmatprep.subr.bf16.mxu0 0
        %2951 = vmatpush1.bf16.msra.mxu0 0
        %2952 = vmatprep.subr.bf16.mxu0 0
        %2953 = vmatpush1.bf16.msra.mxu0 0
        %2954 = vmatprep.subr.bf16.mxu0 0
        %2955 = vmatpush1.bf16.msra.mxu0 0
        %2956 = vmatprep.subr.bf16.mxu0 0
        %2957 = vmatpush1.bf16.msra.mxu0 0
        %2958 = vmatprep.subr.bf16.mxu0 0
        %2959 = vmatpush1.bf16.msra.mxu0 0
        %2960 = vmatprep.mubr.bf16.mxu0 0
        %2961 = vmatmul.mubr.bf16.gmra.mrb[0].mxu0 %v2923
        %v2962 = vpop.f32.mrb[0].mxu0
        %v2963 = vadd.f32 0.0, %v2962
        %v2964 = vpop.f32.mrb[0].mxu0
        %v2965 = vpop.f32.mrb[0].mxu0
        %v2966 = vpop.f32.mrb[0].mxu0
        %2967 = vdwg.mxu0
        %v2969 = vsel %vm1133, %v2919, 0
        %v2972 = vsel %vm394, %v2687, 0
        %2974 = vmatprep.subr.bf16.mxu0 0
        %2975 = vmatpush1.bf16.msra.mxu0 %v2972
        %2976 = vmatprep.subr.bf16.mxu0 0
        %2977 = vmatpush1.bf16.msra.mxu0 0
        %2978 = vmatprep.subr.bf16.mxu0 0
        %2979 = vmatpush1.bf16.msra.mxu0 0
        %2980 = vmatprep.subr.bf16.mxu0 0
        %2981 = vmatpush1.bf16.msra.mxu0 0
        %2982 = vmatprep.subr.bf16.mxu0 0
        %2983 = vmatpush1.bf16.msra.mxu0 0
        %2984 = vmatprep.subr.bf16.mxu0 0
        %2985 = vmatpush1.bf16.msra.mxu0 0
        %2986 = vmatprep.subr.bf16.mxu0 0
        %2987 = vmatpush1.bf16.msra.mxu0 0
        %2988 = vmatprep.subr.bf16.mxu0 0
        %2989 = vmatpush1.bf16.msra.mxu0 0
        %2990 = vmatprep.subr.bf16.mxu0 0
        %2991 = vmatpush1.bf16.msra.mxu0 0
        %2992 = vmatprep.subr.bf16.mxu0 0
        %2993 = vmatpush1.bf16.msra.mxu0 0
        %2994 = vmatprep.subr.bf16.mxu0 0
        %2995 = vmatpush1.bf16.msra.mxu0 0
        %2996 = vmatprep.subr.bf16.mxu0 0
        %2997 = vmatpush1.bf16.msra.mxu0 0
        %2998 = vmatprep.subr.bf16.mxu0 0
        %2999 = vmatpush1.bf16.msra.mxu0 0
        %3000 = vmatprep.subr.bf16.mxu0 0
        %3001 = vmatpush1.bf16.msra.mxu0 0
        %3002 = vmatprep.subr.bf16.mxu0 0
        %3003 = vmatpush1.bf16.msra.mxu0 0
        %3004 = vmatprep.subr.bf16.mxu0 0
        %3005 = vmatpush1.bf16.msra.mxu0 0
        %3006 = vmatprep.mubr.bf16.mxu0 0
        %3007 = vmatmul.mubr.bf16.gmra.mrb[0].mxu0 %v2969
        %v3008 = vpop.f32.mrb[0].mxu0
        %v3009 = vadd.f32 0.0, %v3008
        %v3010 = vpop.f32.mrb[0].mxu0
        %v3011 = vpop.f32.mrb[0].mxu0
        %v3012 = vpop.f32.mrb[0].mxu0
        %3013 = vdwg.mxu0
        %v3015 = vsel %vm1133, %v2920, 0
        %v3018 = vsel %vm394, %v2688, 0
        %3020 = vmatprep.subr.bf16.mxu0 0
        %3021 = vmatpush1.bf16.msra.mxu0 %v3018
        %3022 = vmatprep.subr.bf16.mxu0 0
        %3023 = vmatpush1.bf16.msra.mxu0 0
        %3024 = vmatprep.subr.bf16.mxu0 0
        %3025 = vmatpush1.bf16.msra.mxu0 0
        %3026 = vmatprep.subr.bf16.mxu0 0
        %3027 = vmatpush1.bf16.msra.mxu0 0
        %3028 = vmatprep.subr.bf16.mxu0 0
        %3029 = vmatpush1.bf16.msra.mxu0 0
        %3030 = vmatprep.subr.bf16.mxu0 0
        %3031 = vmatpush1.bf16.msra.mxu0 0
        %3032 = vmatprep.subr.bf16.mxu0 0
        %3033 = vmatpush1.bf16.msra.mxu0 0
        %3034 = vmatprep.subr.bf16.mxu0 0
        %3035 = vmatpush1.bf16.msra.mxu0 0
        %3036 = vmatprep.subr.bf16.mxu0 0
        %3037 = vmatpush1.bf16.msra.mxu0 0
        %3038 = vmatprep.subr.bf16.mxu0 0
        %3039 = vmatpush1.bf16.msra.mxu0 0
        %3040 = vmatprep.subr.bf16.mxu0 0
        %3041 = vmatpush1.bf16.msra.mxu0 0
        %3042 = vmatprep.subr.bf16.mxu0 0
        %3043 = vmatpush1.bf16.msra.mxu0 0
        %3044 = vmatprep.subr.bf16.mxu0 0
        %3045 = vmatpush1.bf16.msra.mxu0 0
        %3046 = vmatprep.subr.bf16.mxu0 0
        %3047 = vmatpush1.bf16.msra.mxu0 0
        %3048 = vmatprep.subr.bf16.mxu0 0
        %3049 = vmatpush1.bf16.msra.mxu0 0
        %3050 = vmatprep.subr.bf16.mxu0 0
        %3051 = vmatpush1.bf16.msra.mxu0 0
        %3052 = vmatprep.mubr.bf16.mxu0 0
        %3053 = vmatmul.mubr.bf16.gmra.mrb[0].mxu0 %v3015
        %v3054 = vpop.f32.mrb[0].mxu0
        %v3055 = vadd.f32 0.0, %v3054
        %v3056 = vpop.f32.mrb[0].mxu0
        %v3057 = vpop.f32.mrb[0].mxu0
        %v3058 = vpop.f32.mrb[0].mxu0
        %3059 = vdwg.mxu0
        %v3061 = vsel %vm1133, %v2921, 0
        %v3064 = vsel %vm394, %v2689, 0
        %3066 = vmatprep.subr.bf16.mxu0 0
        %3067 = vmatpush1.bf16.msra.mxu0 %v3064
        %3068 = vmatprep.subr.bf16.mxu0 0
        %3069 = vmatpush1.bf16.msra.mxu0 0
        %3070 = vmatprep.subr.bf16.mxu0 0
        %3071 = vmatpush1.bf16.msra.mxu0 0
        %3072 = vmatprep.subr.bf16.mxu0 0
        %3073 = vmatpush1.bf16.msra.mxu0 0
        %3074 = vmatprep.subr.bf16.mxu0 0
        %3075 = vmatpush1.bf16.msra.mxu0 0
        %3076 = vmatprep.subr.bf16.mxu0 0
        %3077 = vmatpush1.bf16.msra.mxu0 0
        %3078 = vmatprep.subr.bf16.mxu0 0
        %3079 = vmatpush1.bf16.msra.mxu0 0
        %3080 = vmatprep.subr.bf16.mxu0 0
        %3081 = vmatpush1.bf16.msra.mxu0 0
        %3082 = vmatprep.subr.bf16.mxu0 0
        %3083 = vmatpush1.bf16.msra.mxu0 0
        %3084 = vmatprep.subr.bf16.mxu0 0
        %3085 = vmatpush1.bf16.msra.mxu0 0
        %3086 = vmatprep.subr.bf16.mxu0 0
        %3087 = vmatpush1.bf16.msra.mxu0 0
        %3088 = vmatprep.subr.bf16.mxu0 0
        %3089 = vmatpush1.bf16.msra.mxu0 0
        %3090 = vmatprep.subr.bf16.mxu0 0
        %3091 = vmatpush1.bf16.msra.mxu0 0
        %3092 = vmatprep.subr.bf16.mxu0 0
        %3093 = vmatpush1.bf16.msra.mxu0 0
        %3094 = vmatprep.subr.bf16.mxu0 0
        %3095 = vmatpush1.bf16.msra.mxu0 0
        %3096 = vmatprep.subr.bf16.mxu0 0
        %3097 = vmatpush1.bf16.msra.mxu0 0
        %3098 = vmatprep.mubr.bf16.mxu0 0
        %3099 = vmatmul.mubr.bf16.gmra.mrb[0].mxu0 %v3061
        %v3100 = vpop.f32.mrb[0].mxu0
        %v3101 = vadd.f32 0.0, %v3100
        %v3102 = vpop.f32.mrb[0].mxu0
        %v3103 = vpop.f32.mrb[0].mxu0
        %v3104 = vpop.f32.mrb[0].mxu0
        %3105 = vdwg.mxu0
        %v3106 = vpack.c.bf16 %v2963, %v2963
        %v3107 = vpack.c.bf16 %v3009, %v3009
        %v3108 = vpack.c.bf16 %v3055, %v3055
        %v3109 = vpack.c.bf16 %v3101, %v3101
        %s3110 = scalar_lea.vmem %s4, 16
        %v3111 = vld [vmem:[%s3110] sm:$0xf]
        %v3112 = vld [vmem:[%s3110 + $0x4] sm:$0xf]
        %v3113 = vld [vmem:[%s3110 + $0x8] sm:$0xf]
        %v3114 = vld [vmem:[%s3110 + $0xc] sm:$0xf]
        %v3116 = vsel %vm1133, %v3106, 0
        %v3119 = vsel %vm394, %v3111, 0
        %3121 = vmatprep.subr.bf16.mxu0 0
        %3122 = vmatpush1.bf16.msra.mxu0 %v3119
        %3123 = vmatprep.subr.bf16.mxu0 0
        %3124 = vmatpush1.bf16.msra.mxu0 0
        %3125 = vmatprep.subr.bf16.mxu0 0
        %3126 = vmatpush1.bf16.msra.mxu0 0
        %3127 = vmatprep.subr.bf16.mxu0 0
        %3128 = vmatpush1.bf16.msra.mxu0 0
        %3129 = vmatprep.subr.bf16.mxu0 0
        %3130 = vmatpush1.bf16.msra.mxu0 0
        %3131 = vmatprep.subr.bf16.mxu0 0
        %3132 = vmatpush1.bf16.msra.mxu0 0
        %3133 = vmatprep.subr.bf16.mxu0 0
        %3134 = vmatpush1.bf16.msra.mxu0 0
        %3135 = vmatprep.subr.bf16.mxu0 0
        %3136 = vmatpush1.bf16.msra.mxu0 0
        %3137 = vmatprep.subr.bf16.mxu0 0
        %3138 = vmatpush1.bf16.msra.mxu0 0
        %3139 = vmatprep.subr.bf16.mxu0 0
        %3140 = vmatpush1.bf16.msra.mxu0 0
        %3141 = vmatprep.subr.bf16.mxu0 0
        %3142 = vmatpush1.bf16.msra.mxu0 0
        %3143 = vmatprep.subr.bf16.mxu0 0
        %3144 = vmatpush1.bf16.msra.mxu0 0
        %3145 = vmatprep.subr.bf16.mxu0 0
        %3146 = vmatpush1.bf16.msra.mxu0 0
        %3147 = vmatprep.subr.bf16.mxu0 0
        %3148 = vmatpush1.bf16.msra.mxu0 0
        %3149 = vmatprep.subr.bf16.mxu0 0
        %3150 = vmatpush1.bf16.msra.mxu0 0
        %3151 = vmatprep.subr.bf16.mxu0 0
        %3152 = vmatpush1.bf16.msra.mxu0 0
        %3153 = vmatprep.mubr.bf16.mxu0 0
        %3154 = vmatmul.mubr.bf16.gmra.mrb[0].mxu0 %v3116
        %v3155 = vpop.f32.mrb[0].mxu0
        %v3156 = vadd.f32 0.0, %v3155
        %v3157 = vpop.f32.mrb[0].mxu0
        %v3158 = vpop.f32.mrb[0].mxu0
        %v3159 = vpop.f32.mrb[0].mxu0
        %3160 = vdwg.mxu0
        %v3162 = vsel %vm1133, %v3107, 0
        %v3165 = vsel %vm394, %v3112, 0
        %3167 = vmatprep.subr.bf16.mxu0 0
        %3168 = vmatpush1.bf16.msra.mxu0 %v3165
        %3169 = vmatprep.subr.bf16.mxu0 0
        %3170 = vmatpush1.bf16.msra.mxu0 0
        %3171 = vmatprep.subr.bf16.mxu0 0
        %3172 = vmatpush1.bf16.msra.mxu0 0
        %3173 = vmatprep.subr.bf16.mxu0 0
        %3174 = vmatpush1.bf16.msra.mxu0 0
        %3175 = vmatprep.subr.bf16.mxu0 0
        %3176 = vmatpush1.bf16.msra.mxu0 0
        %3177 = vmatprep.subr.bf16.mxu0 0
        %3178 = vmatpush1.bf16.msra.mxu0 0
        %3179 = vmatprep.subr.bf16.mxu0 0
        %3180 = vmatpush1.bf16.msra.mxu0 0
        %3181 = vmatprep.subr.bf16.mxu0 0
        %3182 = vmatpush1.bf16.msra.mxu0 0
        %3183 = vmatprep.subr.bf16.mxu0 0
        %3184 = vmatpush1.bf16.msra.mxu0 0
        %3185 = vmatprep.subr.bf16.mxu0 0
        %3186 = vmatpush1.bf16.msra.mxu0 0
        %3187 = vmatprep.subr.bf16.mxu0 0
        %3188 = vmatpush1.bf16.msra.mxu0 0
        %3189 = vmatprep.subr.bf16.mxu0 0
        %3190 = vmatpush1.bf16.msra.mxu0 0
        %3191 = vmatprep.subr.bf16.mxu0 0
        %3192 = vmatpush1.bf16.msra.mxu0 0
        %3193 = vmatprep.subr.bf16.mxu0 0
        %3194 = vmatpush1.bf16.msra.mxu0 0
        %3195 = vmatprep.subr.bf16.mxu0 0
        %3196 = vmatpush1.bf16.msra.mxu0 0
        %3197 = vmatprep.subr.bf16.mxu0 0
        %3198 = vmatpush1.bf16.msra.mxu0 0
        %3199 = vmatprep.mubr.bf16.mxu0 0
        %3200 = vmatmul.mubr.bf16.gmra.mrb[0].mxu0 %v3162
        %v3201 = vpop.f32.mrb[0].mxu0
        %v3202 = vadd.f32 0.0, %v3201
        %v3203 = vpop.f32.mrb[0].mxu0
        %v3204 = vpop.f32.mrb[0].mxu0
        %v3205 = vpop.f32.mrb[0].mxu0
        %3206 = vdwg.mxu0
        %v3208 = vsel %vm1133, %v3108, 0
        %v3211 = vsel %vm394, %v3113, 0
        %3213 = vmatprep.subr.bf16.mxu0 0
        %3214 = vmatpush1.bf16.msra.mxu0 %v3211
        %3215 = vmatprep.subr.bf16.mxu0 0
        %3216 = vmatpush1.bf16.msra.mxu0 0
        %3217 = vmatprep.subr.bf16.mxu0 0
        %3218 = vmatpush1.bf16.msra.mxu0 0
        %3219 = vmatprep.subr.bf16.mxu0 0
        %3220 = vmatpush1.bf16.msra.mxu0 0
        %3221 = vmatprep.subr.bf16.mxu0 0
        %3222 = vmatpush1.bf16.msra.mxu0 0
        %3223 = vmatprep.subr.bf16.mxu0 0
        %3224 = vmatpush1.bf16.msra.mxu0 0
        %3225 = vmatprep.subr.bf16.mxu0 0
        %3226 = vmatpush1.bf16.msra.mxu0 0
        %3227 = vmatprep.subr.bf16.mxu0 0
        %3228 = vmatpush1.bf16.msra.mxu0 0
        %3229 = vmatprep.subr.bf16.mxu0 0
        %3230 = vmatpush1.bf16.msra.mxu0 0
        %3231 = vmatprep.subr.bf16.mxu0 0
        %3232 = vmatpush1.bf16.msra.mxu0 0
        %3233 = vmatprep.subr.bf16.mxu0 0
        %3234 = vmatpush1.bf16.msra.mxu0 0
        %3235 = vmatprep.subr.bf16.mxu0 0
        %3236 = vmatpush1.bf16.msra.mxu0 0
        %3237 = vmatprep.subr.bf16.mxu0 0
        %3238 = vmatpush1.bf16.msra.mxu0 0
        %3239 = vmatprep.subr.bf16.mxu0 0
        %3240 = vmatpush1.bf16.msra.mxu0 0
        %3241 = vmatprep.subr.bf16.mxu0 0
        %3242 = vmatpush1.bf16.msra.mxu0 0
        %3243 = vmatprep.subr.bf16.mxu0 0
        %3244 = vmatpush1.bf16.msra.mxu0 0
        %3245 = vmatprep.mubr.bf16.mxu0 0
        %3246 = vmatmul.mubr.bf16.gmra.mrb[0].mxu0 %v3208
        %v3247 = vpop.f32.mrb[0].mxu0
        %v3248 = vadd.f32 0.0, %v3247
        %v3249 = vpop.f32.mrb[0].mxu0
        %v3250 = vpop.f32.mrb[0].mxu0
        %v3251 = vpop.f32.mrb[0].mxu0
        %3252 = vdwg.mxu0
        %v3254 = vsel %vm1133, %v3109, 0
        %v3257 = vsel %vm394, %v3114, 0
        %3259 = vmatprep.subr.bf16.mxu0 0
        %3260 = vmatpush1.bf16.msra.mxu0 %v3257
        %3261 = vmatprep.subr.bf16.mxu0 0
        %3262 = vmatpush1.bf16.msra.mxu0 0
        %3263 = vmatprep.subr.bf16.mxu0 0
        %3264 = vmatpush1.bf16.msra.mxu0 0
        %3265 = vmatprep.subr.bf16.mxu0 0
        %3266 = vmatpush1.bf16.msra.mxu0 0
        %3267 = vmatprep.subr.bf16.mxu0 0
        %3268 = vmatpush1.bf16.msra.mxu0 0
        %3269 = vmatprep.subr.bf16.mxu0 0
        %3270 = vmatpush1.bf16.msra.mxu0 0
        %3271 = vmatprep.subr.bf16.mxu0 0
        %3272 = vmatpush1.bf16.msra.mxu0 0
        %3273 = vmatprep.subr.bf16.mxu0 0
        %3274 = vmatpush1.bf16.msra.mxu0 0
        %3275 = vmatprep.subr.bf16.mxu0 0
        %3276 = vmatpush1.bf16.msra.mxu0 0
        %3277 = vmatprep.subr.bf16.mxu0 0
        %3278 = vmatpush1.bf16.msra.mxu0 0
        %3279 = vmatprep.subr.bf16.mxu0 0
        %3280 = vmatpush1.bf16.msra.mxu0 0
        %3281 = vmatprep.subr.bf16.mxu0 0
        %3282 = vmatpush1.bf16.msra.mxu0 0
        %3283 = vmatprep.subr.bf16.mxu0 0
        %3284 = vmatpush1.bf16.msra.mxu0 0
        %3285 = vmatprep.subr.bf16.mxu0 0
        %3286 = vmatpush1.bf16.msra.mxu0 0
        %3287 = vmatprep.subr.bf16.mxu0 0
        %3288 = vmatpush1.bf16.msra.mxu0 0
        %3289 = vmatprep.subr.bf16.mxu0 0
        %3290 = vmatpush1.bf16.msra.mxu0 0
        %3291 = vmatprep.mubr.bf16.mxu0 0
        %3292 = vmatmul.mubr.bf16.gmra.mrb[0].mxu0 %v3254
        %v3293 = vpop.f32.mrb[0].mxu0
        %v3294 = vadd.f32 0.0, %v3293
        %v3295 = vpop.f32.mrb[0].mxu0
        %v3296 = vpop.f32.mrb[0].mxu0
        %v3297 = vpop.f32.mrb[0].mxu0
        %3298 = vdwg.mxu0
        %v3299 = vsel %vm409, %v3156, 0.0
        %v3300 = vsel %vm409, %v3202, 0.0
        %v3301 = vadd.f32 %v3299, %v3300
        %v3302 = vsel %vm409, %v3248, 0.0
        %v3303 = vadd.f32 %v3301, %v3302
        %v3304 = vsel %vm409, %v3294, 0.0
        %v3305 = vadd.f32 %v3303, %v3304
        %v3306 = vadd.f32 %v1964, %v3305
        %v3307 = vlaneseq
        %v3308 = vshrl.u32 %v3307, 7
        %v3309 = vsub.s32 2, %v3308
        %v3310 = vrot.slane %v1966, %v3309
        %v3311 = vadd.f32 %v3306, %v3310
        %v3312 = vsel %vm409, %v3311, 0.0
        %3313 = vadd.xlane.f32.xlu0 %v3312
        %v3314 = vpop.xlane.xlu0 %3313
        %v3315 = vmul.f32 %v3314, %v413
        %v3316 = vsub.f32 %v3311, %v3315
        %v3317 = vmul.f32 %v3316, %v3316
        %v3318 = vsel %vm409, %v3317, 0.0
        %3319 = vadd.xlane.f32.xlu0 %v3318
        %v3320 = vpop.xlane.xlu0 %3319
        %v3321 = vmul.f32 %v3320, %v413
        %v3322 = vadd.f32 %v3321, 1e-05
        %v3323 = vrsqrt.pop %v3322
        %v3324 = vmul.f32 %v3316, %v3323
        %v3325 = vlaneseq
        %v3326 = vshrl.u32 %v3325, 7
        %v3327 = vsub.s32 3, %v3326
        %v3328 = vrot.slane %v1966, %v3327
        %v3329 = vmul.f32 %v3324, %v3328
        %v3330 = vlaneseq
        %v3331 = vshrl.u32 %v3330, 7
        %v3332 = vsub.s32 4, %v3331
        %v3333 = vrot.slane %v1966, %v3332
        %v3334 = vadd.f32 %v3329, %v3333
        %v3335 = vpack.c.bf16 %v3334, %v3334
        %s3336 = scalar_lea.vmem %s5, 16
        %v3337 = vld [vmem:[%s3336] sm:$0xf]
        %v3338 = vld [vmem:[%s3336 + $0x4] sm:$0xf]
        %v3339 = vld [vmem:[%s3336 + $0x8] sm:$0xf]
        %v3340 = vld [vmem:[%s3336 + $0xc] sm:$0xf]
        %s3341 = scalar_lea.vmem %s8, 1
        %v3342 = vld [vmem:[%s3341] sm:$0x1]
        %v3344 = vlaneseq
        %v3345 = vshrl.u32 %v3344, 7
        %v3346 = vsub.s32 0, %v3345
        %v3347 = vrot.slane %v3342, %v3346
        %v3353 = vunpack.c.l.b16 %v3337
        %v3354 = vunpack.c.l.b16 %v3338
        %v3355 = vunpack.c.l.b16 %v3339
        %v3356 = vunpack.c.l.b16 %v3340
        %v3357 = vpack.c.b16 %v3354, %v3353
        %v3358 = vpack.c.b16 %v3356, %v3355
        %v3362 = vsel %vm409, %v3335, 0
        %3364 = vmatprep.subr.bf16.mxu0 0
        %3365 = vmatpush1.bf16.msra.mxu0 %v3357
        %3366 = vmatprep.subr.bf16.mxu0 0
        %3367 = vmatpush1.bf16.msra.mxu0 %v3358
        %3368 = vmatprep.subr.bf16.mxu0 0
        %3369 = vmatpush1.bf16.msra.mxu0 0
        %3370 = vmatprep.subr.bf16.mxu0 0
        %3371 = vmatpush1.bf16.msra.mxu0 0
        %3372 = vmatprep.subr.bf16.mxu0 0
        %3373 = vmatpush1.bf16.msra.mxu0 0
        %3374 = vmatprep.subr.bf16.mxu0 0
        %3375 = vmatpush1.bf16.msra.mxu0 0
        %3376 = vmatprep.subr.bf16.mxu0 0
        %3377 = vmatpush1.bf16.msra.mxu0 0
        %3378 = vmatprep.subr.bf16.mxu0 0
        %3379 = vmatpush1.bf16.msra.mxu0 0
        %3380 = vmatprep.subr.bf16.mxu0 0
        %3381 = vmatpush1.bf16.msra.mxu0 0
        %3382 = vmatprep.subr.bf16.mxu0 0
        %3383 = vmatpush1.bf16.msra.mxu0 0
        %3384 = vmatprep.subr.bf16.mxu0 0
        %3385 = vmatpush1.bf16.msra.mxu0 0
        %3386 = vmatprep.subr.bf16.mxu0 0
        %3387 = vmatpush1.bf16.msra.mxu0 0
        %3388 = vmatprep.subr.bf16.mxu0 0
        %3389 = vmatpush1.bf16.msra.mxu0 0
        %3390 = vmatprep.subr.bf16.mxu0 0
        %3391 = vmatpush1.bf16.msra.mxu0 0
        %3392 = vmatprep.subr.bf16.mxu0 0
        %3393 = vmatpush1.bf16.msra.mxu0 0
        %3394 = vmatprep.subr.bf16.mxu0 0
        %3395 = vmatpush1.bf16.msra.mxu0 0
        %3396 = vmatprep.mubr.bf16.mxu0 0
        %3397 = vmatmul.mubr.bf16.gmra.mrb[0].mxu0 %v3362
        %v3398 = vpop.f32.mrb[0].mxu0
        %v3399 = vadd.f32 %v3347, %v3398
        %v3400 = vpop.f32.mrb[0].mxu0
        %v3401 = vpop.f32.mrb[0].mxu0
        %v3402 = vpop.f32.mrb[0].mxu0
        %3403 = vdwg.mxu0
        %v3404 = vmul.f32 %v3399, 0.5
        %v3405 = vmul.f32 %v3399, 0.044715
        %v3406 = vmul.f32 %v3405, %v3399
        %v3407 = vmul.f32 %v3406, %v3399
        %v3408 = vadd.f32 %v3399, %v3407
        %v3409 = vmul.f32 %v3408, 0.7978846
        %v3410 = vtanh.pop %v3409
        %v3411 = vadd.f32 %v3410, 1.0
        %v3412 = vmul.f32 %v3404, %v3411
        %v3413 = vpack.c.bf16 %v3412, %v3412
        %s3414 = scalar_lea.vmem %s6, 64
        %v3415 = vld [vmem:[%s3414] sm:$0xf]
        %v3416 = vld [vmem:[%s3414 + $0x4] sm:$0xf]
        %v3417 = vld [vmem:[%s3414 + $0x8] sm:$0xf]
        %v3418 = vld [vmem:[%s3414 + $0xc] sm:$0xf]
        %v3419 = vld [vmem:[%s3414 + $0x10] sm:$0xf]
        %v3420 = vld [vmem:[%s3414 + $0x14] sm:$0xf]
        %v3421 = vld [vmem:[%s3414 + $0x18] sm:$0xf]
        %v3422 = vld [vmem:[%s3414 + $0x1c] sm:$0xf]
        %v3423 = vld [vmem:[%s3414 + $0x20] sm:$0xf]
        %v3424 = vld [vmem:[%s3414 + $0x24] sm:$0xf]
        %v3425 = vld [vmem:[%s3414 + $0x28] sm:$0xf]
        %v3426 = vld [vmem:[%s3414 + $0x2c] sm:$0xf]
        %v3427 = vld [vmem:[%s3414 + $0x30] sm:$0xf]
        %v3428 = vld [vmem:[%s3414 + $0x34] sm:$0xf]
        %v3429 = vld [vmem:[%s3414 + $0x38] sm:$0xf]
        %v3430 = vld [vmem:[%s3414 + $0x3c] sm:$0xf]
        %v3447 = vunpack.c.l.b16 %v3415
        %v3448 = vunpack.c.l.b16 %v3416
        %v3449 = vunpack.c.l.b16 %v3417
        %v3450 = vunpack.c.l.b16 %v3418
        %v3451 = vunpack.c.l.b16 %v3419
        %v3452 = vunpack.c.l.b16 %v3420
        %v3453 = vunpack.c.l.b16 %v3421
        %v3454 = vunpack.c.l.b16 %v3422
        %v3455 = vunpack.c.l.b16 %v3423
        %v3456 = vunpack.c.l.b16 %v3424
        %v3457 = vunpack.c.l.b16 %v3425
        %v3458 = vunpack.c.l.b16 %v3426
        %v3459 = vunpack.c.l.b16 %v3427
        %v3460 = vunpack.c.l.b16 %v3428
        %v3461 = vunpack.c.l.b16 %v3429
        %v3462 = vunpack.c.l.b16 %v3430
        %v3463 = vpack.c.b16 %v3448, %v3447
        %v3464 = vpack.c.b16 %v3450, %v3449
        %v3465 = vpack.c.b16 %v3452, %v3451
        %v3466 = vpack.c.b16 %v3454, %v3453
        %v3467 = vpack.c.b16 %v3456, %v3455
        %v3468 = vpack.c.b16 %v3458, %v3457
        %v3469 = vpack.c.b16 %v3460, %v3459
        %v3470 = vpack.c.b16 %v3462, %v3461
        %3479 = vmatprep.subr.bf16.mxu0 0
        %3480 = vmatpush1.bf16.msra.mxu0 %v3463
        %3481 = vmatprep.subr.bf16.mxu0 0
        %3482 = vmatpush1.bf16.msra.mxu0 %v3464
        %3483 = vmatprep.subr.bf16.mxu0 0
        %3484 = vmatpush1.bf16.msra.mxu0 %v3465
        %3485 = vmatprep.subr.bf16.mxu0 0
        %3486 = vmatpush1.bf16.msra.mxu0 %v3466
        %3487 = vmatprep.subr.bf16.mxu0 0
        %3488 = vmatpush1.bf16.msra.mxu0 %v3467
        %3489 = vmatprep.subr.bf16.mxu0 0
        %3490 = vmatpush1.bf16.msra.mxu0 %v3468
        %3491 = vmatprep.subr.bf16.mxu0 0
        %3492 = vmatpush1.bf16.msra.mxu0 %v3469
        %3493 = vmatprep.subr.bf16.mxu0 0
        %3494 = vmatpush1.bf16.msra.mxu0 %v3470
        %3495 = vmatprep.subr.bf16.mxu0 0
        %3496 = vmatpush1.bf16.msra.mxu0 0
        %3497 = vmatprep.subr.bf16.mxu0 0
        %3498 = vmatpush1.bf16.msra.mxu0 0
        %3499 = vmatprep.subr.bf16.mxu0 0
        %3500 = vmatpush1.bf16.msra.mxu0 0
        %3501 = vmatprep.subr.bf16.mxu0 0
        %3502 = vmatpush1.bf16.msra.mxu0 0
        %3503 = vmatprep.subr.bf16.mxu0 0
        %3504 = vmatpush1.bf16.msra.mxu0 0
        %3505 = vmatprep.subr.bf16.mxu0 0
        %3506 = vmatpush1.bf16.msra.mxu0 0
        %3507 = vmatprep.subr.bf16.mxu0 0
        %3508 = vmatpush1.bf16.msra.mxu0 0
        %3509 = vmatprep.subr.bf16.mxu0 0
        %3510 = vmatpush1.bf16.msra.mxu0 0
        %3511 = vmatprep.mubr.bf16.mxu0 0
        %3512 = vmatmul.mubr.bf16.gmra.mrb[0].mxu0 %v3413
        %v3513 = vpop.f32.mrb[0].mxu0
        %v3514 = vadd.f32 0.0, %v3513
        %v3515 = vpop.f32.mrb[0].mxu0
        %v3516 = vpop.f32.mrb[0].mxu0
        %v3517 = vpop.f32.mrb[0].mxu0
        %3518 = vdwg.mxu0
        %v3519 = vadd.f32 %v3311, %v3514
        %v3520 = vlaneseq
        %v3521 = vshrl.u32 %v3520, 7
        %v3522 = vsub.s32 5, %v3521
        %v3523 = vrot.slane %v1966, %v3522
        %v3524 = vadd.f32 %v3519, %v3523
        %s3525 = scalar_lea.vmem %s7, 16
        %v3526 = vld [vmem:[%s3525] sm:$0xff]
        %v3527 = vsel %vm409, %v3524, 0.0
        %3528 = vadd.xlane.f32.xlu0 %v3527
        %v3529 = vpop.xlane.xlu0 %3528
        %v3530 = vmul.f32 %v3529, %v413
        %v3531 = vsub.f32 %v3524, %v3530
        %v3532 = vmul.f32 %v3531, %v3531
        %v3533 = vsel %vm409, %v3532, 0.0
        %3534 = vadd.xlane.f32.xlu0 %v3533
        %v3535 = vpop.xlane.xlu0 %3534
        %v3536 = vmul.f32 %v3535, %v413
        %v3537 = vadd.f32 %v3536, 1e-05
        %v3538 = vrsqrt.pop %v3537
        %v3539 = vmul.f32 %v3531, %v3538
        %v3540 = vlaneseq
        %v3541 = vshrl.u32 %v3540, 7
        %v3542 = vsub.s32 0, %v3541
        %v3543 = vrot.slane %v3526, %v3542
        %v3544 = vmul.f32 %v3539, %v3543
        %v3545 = vlaneseq
        %v3546 = vshrl.u32 %v3545, 7
        %v3547 = vsub.s32 1, %v3546
        %v3548 = vrot.slane %v3526, %v3547
        %v3549 = vadd.f32 %v3544, %v3548
        %v3550 = vpack.c.bf16 %v3549, %v3549
        %v3551 = vld [vmem:[%s9] sm:$0xf]
        %v3552 = vld [vmem:[%s9 + $0x4] sm:$0xf]
        %v3553 = vld [vmem:[%s9 + $0x8] sm:$0xf]
        %v3554 = vld [vmem:[%s9 + $0xc] sm:$0xf]
        %v3559 = vunpack.c.l.b16 %v3551
        %v3560 = vunpack.c.l.b16 %v3552
        %v3561 = vunpack.c.l.b16 %v3553
        %v3562 = vunpack.c.l.b16 %v3554
        %v3563 = vpack.c.b16 %v3560, %v3559
        %v3564 = vpack.c.b16 %v3562, %v3561
        %v3568 = vsel %vm409, %v3550, 0
        %3570 = vmatprep.subr.bf16.mxu0 0
        %3571 = vmatpush1.bf16.msra.mxu0 %v3563
        %3572 = vmatprep.subr.bf16.mxu0 0
        %3573 = vmatpush1.bf16.msra.mxu0 %v3564
        %3574 = vmatprep.subr.bf16.mxu0 0
        %3575 = vmatpush1.bf16.msra.mxu0 0
        %3576 = vmatprep.subr.bf16.mxu0 0
        %3577 = vmatpush1.bf16.msra.mxu0 0
        %3578 = vmatprep.subr.bf16.mxu0 0
        %3579 = vmatpush1.bf16.msra.mxu0 0
        %3580 = vmatprep.subr.bf16.mxu0 0
        %3581 = vmatpush1.bf16.msra.mxu0 0
        %3582 = vmatprep.subr.bf16.mxu0 0
        %3583 = vmatpush1.bf16.msra.mxu0 0
        %3584 = vmatprep.subr.bf16.mxu0 0
        %3585 = vmatpush1.bf16.msra.mxu0 0
        %3586 = vmatprep.subr.bf16.mxu0 0
        %3587 = vmatpush1.bf16.msra.mxu0 0
        %3588 = vmatprep.subr.bf16.mxu0 0
        %3589 = vmatpush1.bf16.msra.mxu0 0
        %3590 = vmatprep.subr.bf16.mxu0 0
        %3591 = vmatpush1.bf16.msra.mxu0 0
        %3592 = vmatprep.subr.bf16.mxu0 0
        %3593 = vmatpush1.bf16.msra.mxu0 0
        %3594 = vmatprep.subr.bf16.mxu0 0
        %3595 = vmatpush1.bf16.msra.mxu0 0
        %3596 = vmatprep.subr.bf16.mxu0 0
        %3597 = vmatpush1.bf16.msra.mxu0 0
        %3598 = vmatprep.subr.bf16.mxu0 0
        %3599 = vmatpush1.bf16.msra.mxu0 0
        %3600 = vmatprep.subr.bf16.mxu0 0
        %3601 = vmatpush1.bf16.msra.mxu0 0
        %3602 = vmatprep.mubr.bf16.mxu0 0
        %3603 = vmatmul.mubr.bf16.gmra.mrb[0].mxu0 %v3568
        %v3604 = vpop.f32.mrb[0].mxu0
        %v3605 = vadd.f32 0.0, %v3604
        %v3606 = vpop.f32.mrb[0].mxu0
        %v3607 = vpop.f32.mrb[0].mxu0
        %v3608 = vpop.f32.mrb[0].mxu0
        %3609 = vdwg.mxu0
        %3610 = vst [vmem:[%s317] sm:$0xff] %v3605
        %s3611 = sand.u32 %s227, 1
        %s3612 = scalar_lea.sflag [#allocation5], %s3611
        %s3613 = sand.u32 %s227, 1
        %s3614 = smul.addr %s3613, 8
        %s3615 = scalar_lea.vmem [#allocation4], %s3614
        // Predicated region
        $region57: #{gpt_forward.1} parent=55 // pred_check
          %p3616 = pneg %p237
        $region58: #{gpt_forward.1} parent=55 // pred_check_branch
          %3618 = sbr.rel (%p3616) target = $region60
        $region59: #{gpt_forward.1} parent=55 // pred_region
          %s3620 = ssub.s32 128, 128
          %3621 = vsyncadd %s3612, %s3620
          %s3622 = smul.addr %s30, 128
          %s3623 = scalar_lea.hbm %s10, %s3622
          %s3625 = sshll.u32 %s3615, 4
          %s3626 = int_to_ptr.vmem [resolvable:$true] %s3625
          %3628 = dma.vmem_to_hbm [thread:$0]  %s3626, 128, %s3623, %s3612
        $region60: #{gpt_forward.1} parent=55 // pred_fallthru
          _
      $region56: #{gpt_forward.1} parent=5 // pred_fallthru
        _
      %p3629 = scmp.le.s32.totalorder 2, %s25
      // Predicated region
      $region61: #{gpt_forward.1} parent=5 // pred_check
        %p3630 = pneg %p3629
      $region62: #{gpt_forward.1} parent=5 // pred_check_branch
        %3632 = sbr.rel (%p3630) target = $region64
      $region63: #{gpt_forward.1} parent=5 // pred_region
        %s3633 = ssub.s32 %s25, 2
        // Predicated region
        $region65: #{gpt_forward.1} parent=63 // pred_check
          %p3634 = pneg %p243
        $region66: #{gpt_forward.1} parent=63 // pred_check_branch
          %3636 = sbr.rel (%p3634) target = $region68
        $region67: #{gpt_forward.1} parent=63 // pred_region
          %s3637 = sand.u32 %s228, 1
          %s3638 = scalar_lea.sflag [#allocation5], %s3637
          %s3639 = sand.u32 %s228, 1
          %s3640 = smul.addr %s3639, 8
          %s3641 = scalar_lea.vmem [#allocation4], %s3640
          %3642 = dma.done %s3638, 128
        $region68: #{gpt_forward.1} parent=63 // pred_fallthru
          _
      $region64: #{gpt_forward.1} parent=5 // pred_fallthru
        _
    $region6: #{gpt_forward.1} parent=1 // loop_footer
      %s29 = sadd.s32 1, %s25
    $region7: #{gpt_forward.1} parent=1 // loop_footer_branch
      %24 = sbr.rel target = $region3
    $region8: #{gpt_forward.1} parent=1 // loop_exit
      _
    %3643 = vsyncpa [#allocation5], 1
    %s3644 = scalar_lea.sflag [#allocation5], 1
    %3645 = vsyncpa %s3644, 1

</llo_original>
